<compile_context>
chip_gen: v7x
topology: tpu7x:2x2x1
jax: 0.10.0
libtpu: 0.0.40
codegen_flags: <defaults>
</compile_context>

<pallas_src>
import functools

import jax
import jax.numpy as jnp
from jax import lax
from jax.experimental import pallas as pl
from jax.experimental.pallas import tpu as pltpu


def _bottleneck_kernel(x_ref, x_hbm,
                       s1_ref, b1_ref, w1_ref,
                       s2_ref, b2_ref, w2_ref,
                       s3_ref, b3_ref, w3_ref,
                       sd_ref, bd_ref, wd_ref,
                       out_ref,
                       halo_buf, halo_sem, h3_scr, hd_scr,
                       *, stride, first, has_downsample):
    f32, bf16 = jnp.float32, jnp.bfloat16
    n = pl.program_id(0)
    h = pl.program_id(1)
    n_h = pl.num_programs(1)

    _, TH, W, Cin = x_ref.shape
    Cmid = w1_ref.shape[1]
    Cout = w3_ref.shape[1]
    H_full = x_hbm.shape[1]
    TH_s = TH // stride
    W_s = W // stride

    # ---- kick off the 2-row halo DMAs (row above / below this tile) --------
    row_top = jnp.maximum(h * TH - 1, 0)
    row_bot = jnp.minimum(h * TH + TH, H_full - 1)
    cp_top = pltpu.make_async_copy(x_hbm.at[n, pl.ds(row_top, 1)],
                                   halo_buf.at[pl.ds(0, 1)], halo_sem.at[0])
    cp_bot = pltpu.make_async_copy(x_hbm.at[n, pl.ds(row_bot, 1)],
                                   halo_buf.at[pl.ds(1, 1)], halo_sem.at[1])
    cp_top.start()
    cp_bot.start()

    def bn_relu(v, s_ref, b_ref):
        return jnp.maximum(v * s_ref[...] + b_ref[...], 0.0)

    # ---- main rows: (bn1+relu) -> conv1 (1x1) -> bn2+relu -------------------
    x_main = x_ref[0].astype(f32)                        # (TH, W, Cin)
    xm2 = x_main.reshape(TH * W, Cin)
    h1 = xm2 if first else bn_relu(xm2, s1_ref, b1_ref)
    y1 = jnp.dot(h1.astype(bf16), w1_ref[...], preferred_element_type=f32)
    h2_main = bn_relu(y1, s2_ref, b2_ref).reshape(TH, W, Cmid)

    # ---- halo rows (overlapped with the work above) --------------------------
    cp_top.wait()
    cp_bot.wait()
    xh2 = halo_buf[...].astype(f32).reshape(2 * W, Cin)
    h1h = xh2 if first else bn_relu(xh2, s1_ref, b1_ref)
    y1h = jnp.dot(h1h.astype(bf16), w1_ref[...], preferred_element_type=f32)
    h2h = bn_relu(y1h, s2_ref, b2_ref).reshape(2, W, Cmid)
    top_ok = (h > 0).astype(f32)            # image-border rows are zero padding
    bot_ok = (h < n_h - 1).astype(f32)
    h2_top = h2h[0:1] * top_ok
    h2_bot = h2h[1:2] * bot_ok

    # h2 with a 1-row halo on each side: (TH + 2, W, Cmid), f32
    h2 = jnp.concatenate([h2_top, h2_main, h2_bot], axis=0)

    # ---- conv2 (3x3, padding=1, stride folded in) ----------------------------
    # dx = -1/+1 column taps via XLU roll + border mask (no padded scratch,
    # no zero-fill, no unaligned partial stores).
    col = lax.broadcasted_iota(jnp.int32, (1, W, 1), 1)
    h2_l = jnp.where(col >= 1, pltpu.roll(h2, shift=1, axis=1), 0.0)        # col c-1
    h2_r = jnp.where(col <= W - 2, pltpu.roll(h2, shift=W - 1, axis=1), 0.0)  # col c+1
    variants = (h2_l.astype(bf16), h2.astype(bf16), h2_r.astype(bf16))

    def rows(v, dy):
        # rows dy, dy+stride, ..., dy+(TH_s-1)*stride of the (TH+2)-row array
        if stride == 1:
            return v[dy:dy + TH]
        # stride == 2: even/odd de-interleave via a leading-dim-only reshape
        v4 = v.reshape((TH + 2) // 2, 2, W, v.shape[-1])
        half = v4[:, dy % 2]
        start = dy // 2
        return half[start:start + TH_s]

    acc = jnp.zeros((TH_s * W, Cmid), f32)
    for dy in range(3):
        for dx in range(3):
            tap = rows(variants[dx], dy).reshape(TH_s * W, Cmid)
            acc = acc + jnp.dot(tap, w2_ref[dy * 3 + dx],
                                preferred_element_type=f32)
    # TODO(synk): for Cmid <= 64 an im2col (NHW, 9*Cmid) x (9*Cmid, Cmid) dot
    #             would raise MXU utilization further.

    # ---- bn3 + relu, column subsample, conv3 (1x1) ---------------------------
    h3 = bn_relu(acc, s3_ref, b3_ref)                     # (TH_s*W, Cmid) f32
    if stride == 1:
        h3_s = h3
    else:
        h3_scr[...] = h3.reshape(TH_s, W, Cmid)
        h3_s = h3_scr[:, pl.ds(0, W_s, stride=stride), :].reshape(TH_s * W_s, Cmid)
    y3 = jnp.dot(h3_s.astype(bf16), w3_ref[...], preferred_element_type=f32)

    # ---- residual path (identity or bn+relu+1x1 downsample, strided) --------
    if stride == 1:
        x_res = x_main                                     # (TH, W, Cin)
    else:
        x_res = x_main.reshape(TH // 2, 2, W, Cin)[:, 0]   # rows 0,2,... (TH_s, W, Cin)

    if has_downsample:
        hd = bn_relu(x_res, sd_ref, bd_ref)                # (TH_s, W, Cin) f32
        if stride == 1:
            hd_s = hd.reshape(TH_s * W_s, Cin)
        else:
            hd_scr[...] = hd
            hd_s = hd_scr[:, pl.ds(0, W_s, stride=stride), :].reshape(TH_s * W_s, Cin)
        res = jnp.dot(hd_s.astype(bf16), wd_ref[...], preferred_element_type=f32)
    else:
        # no downsample => stride == 1 and Cin == Cout
        res = x_res.reshape(TH_s * W_s, Cout)

    out = (y3 + res).reshape(TH_s, W_s, Cout)
    out_ref[0] = out.astype(out_ref.dtype)


def _pick_tile_h(H, stride, target=32):
    for th in range(min(H, target), 0, -1):
        if H % th == 0 and th % stride == 0:
            return th
    return H


def preact_bottleneck_forward(x_nchw, params, *, stride=1, first=False,
                              tile_h=None, out_dtype=jnp.bfloat16):
    """Fused PreActBottleneck forward. x_nchw: (N, Cin, H, W) float."""
    assert stride in (1, 2), "stride 1 or 2 supported"  # TODO(synk): general stride
    bf16 = jnp.bfloat16

    # NHWC, bf16 activations in HBM (lane = channels).
    x = jnp.transpose(x_nchw, (0, 2, 3, 1)).astype(bf16)
    N, H, W, Cin = x.shape
    Cmid = params["w1"].shape[1]
    Cout = params["w3"].shape[1]
    has_downsample = (stride != 1) or (Cin != Cout)
    assert H % stride == 0 and W % (8 * stride) == 0, "need lane/sublane friendly W"

    if tile_h is None:
        tile_h = _pick_tile_h(H, stride)
    assert H % tile_h == 0 and tile_h % stride == 0
    n_h = H // tile_h
    TH_s = tile_h // stride
    H_s, W_s = H // stride, W // stride

    # bf16 weights (MXU inputs); f32 BN scale/shift (VPU elementwise).
    w1 = params["w1"].astype(bf16)
    w2 = params["w2"].reshape(9, Cmid, Cmid).astype(bf16)   # (dy*3+dx, cin, cout)
    w3 = params["w3"].astype(bf16)
    if has_downsample:
        sd, bd, wd = params["sd"], params["bd"], params["wd"].astype(bf16)
    else:
        sd = jnp.ones((1, Cin), jnp.float32)
        bd = jnp.zeros((1, Cin), jnp.float32)
        wd = jnp.zeros((Cin, Cout), bf16)

    kernel = functools.partial(_bottleneck_kernel, stride=stride, first=first,
                               has_downsample=has_downsample)

    vmem = pl.BlockSpec(memory_space=pltpu.MemorySpace.VMEM)   # weights: VMEM-resident
    in_specs = [
        pl.BlockSpec((1, tile_h, W, Cin), lambda n, h: (n, h, 0, 0)),  # pipelined tiles
        pl.BlockSpec(memory_space=pl.ANY),                              # halo source (HBM)
    ] + [vmem] * 12
    out_specs = pl.BlockSpec((1, TH_s, W_s, Cout), lambda n, h: (n, h, 0, 0))

    scratch_shapes = [
        pltpu.VMEM((2, W, Cin), bf16),            # halo rows
        pltpu.SemaphoreType.DMA((2,)),            # halo DMA sems
        pltpu.VMEM((TH_s, W, Cmid), jnp.float32),  # column-subsample scratch (main)
        pltpu.VMEM((TH_s, W, Cin), jnp.float32),   # column-subsample scratch (residual)
    ]

    out = pl.pallas_call(
        kernel,
        grid=(N, n_h),
        in_specs=in_specs,
        out_specs=out_specs,
        out_shape=jax.ShapeDtypeStruct((N, H_s, W_s, Cout), out_dtype),
        scratch_shapes=scratch_shapes,
        compiler_params=pltpu.CompilerParams(
            dimension_semantics=("parallel", "parallel"),
            vmem_limit_bytes=64 * 1024 * 1024),
    )(x, x,
      params["s1"], params["b1"], w1,
      params["s2"], params["b2"], w2,
      params["s3"], params["b3"], w3,
      sd, bd, wd)

    # NCHW for the standalone test; in a network keep NHWC bf16 between blocks.
    return jnp.transpose(out, (0, 3, 1, 2))


# ----------------------------- parameter setup ------------------------------

def _kaiming_fan_out(key, cout, cin, kh, kw):
    """PyTorch kaiming_normal(a=0, mode='fan_out') on a (cout,cin,kh,kw) conv."""
    fan_out = cout * kh * kw
    std = (2.0 / fan_out) ** 0.5
    return jax.random.normal(key, (cout, cin, kh, kw), jnp.float32) * std


def _bn_affine(c, eps=1e-5):
    gamma = jnp.ones((c,), jnp.float32)   # init(bn, 1)
    beta = jnp.zeros((c,), jnp.float32)
    mean = jnp.zeros((c,), jnp.float32)   # running stats (eval mode)
    var = jnp.ones((c,), jnp.float32)
    scale = gamma / jnp.sqrt(var + eps)
    shift = beta - mean * scale
    return scale.reshape(1, c), shift.reshape(1, c)


def make_params(key, cin, cout, cmid, stride):
    k1, k2, k3, kd = jax.random.split(key, 4)
    w1_pt = _kaiming_fan_out(k1, cmid, cin, 1, 1)
    w2_pt = _kaiming_fan_out(k2, cmid, cmid, 3, 3)
    w3_pt = _kaiming_fan_out(k3, cout, cmid, 1, 1)

    s1, b1 = _bn_affine(cin)
    s2, b2 = _bn_affine(cmid)
    s3, b3 = _bn_affine(cmid)

    params = dict(
        s1=s1, b1=b1, w1=jnp.transpose(w1_pt[:, :, 0, 0], (1, 0)),   # (cin, cmid)
        s2=s2, b2=b2, w2=jnp.transpose(w2_pt, (2, 3, 1, 0)),         # (3,3,cin,cout) HWIO
        s3=s3, b3=b3, w3=jnp.transpose(w3_pt[:, :, 0, 0], (1, 0)),   # (cmid, cout)
    )
    if stride != 1 or cin != cout:
        wd_pt = _kaiming_fan_out(kd, cout, cin, 1, 1)
        sd, bd = _bn_affine(cin)
        params.update(sd=sd, bd=bd, wd=jnp.transpose(wd_pt[:, :, 0, 0], (1, 0)))
    return params


# --------------------------- pure-JAX reference ------------------------------

def reference_forward(x_nchw, params, *, stride=1, first=False):
    """Mirrors the kernel's precision policy: bf16 matmul inputs, f32 accum."""
    bf16, f32 = jnp.bfloat16, jnp.float32
    x = jnp.transpose(x_nchw, (0, 2, 3, 1)).astype(bf16).astype(f32)
    Cin = x.shape[-1]
    Cout = params["w3"].shape[1]

    def bn_relu(h, s, b):
        return jnp.maximum(h * s.reshape(1, 1, 1, -1) + b.reshape(1, 1, 1, -1), 0.0)

    def dot1x1(h, w):
        return jnp.einsum("nhwc,cd->nhwd", h.astype(bf16), w.astype(bf16),
                          preferred_element_type=f32)

    out = x if first else bn_relu(x, params["s1"], params["b1"])
    out = dot1x1(out, params["w1"])
    out = bn_relu(out, params["s2"], params["b2"])
    out = lax.conv_general_dilated(
        out.astype(bf16), params["w2"].astype(bf16), (stride, stride),
        ((1, 1), (1, 1)), dimension_numbers=("NHWC", "HWIO", "NHWC"),
        preferred_element_type=f32)
    out = bn_relu(out, params["s3"], params["b3"])
    out = dot1x1(out, params["w3"])

    residual = x
    if stride != 1 or Cin != Cout:
        r = bn_relu(x, params["sd"], params["bd"])[:, ::stride, ::stride, :]
        residual = dot1x1(r, params["wd"])
    return jnp.transpose(out + residual, (0, 3, 1, 2))           # NCHW, f32


# --------------------------------- main --------------------------------------

if __name__ == "__main__":
    key = jax.random.PRNGKey(0)
    kx, kp = jax.random.split(key)

    # Small shapes: N=2, Cin=16, H=W=16; cout=32, cmid=8, stride=2 (exercises
    # the downsample branch, halo rows across two H-tiles, and stride folding).
    N, Cin, H, W = 2, 16, 16, 16
    Cout, Cmid, stride, first = 32, 8, 2, False

    x = jax.random.normal(kx, (N, Cin, H, W), jnp.float32)
    params = make_params(kp, Cin, Cout, Cmid, stride)

    out = preact_bottleneck_forward(x, params, stride=stride, first=first, tile_h=8)
    out = jax.block_until_ready(out)

    ref = jax.block_until_ready(
        reference_forward(x, params, stride=stride, first=first))

    assert out.shape == (N, Cout, H // stride, W // stride), out.shape
    out_f32 = out.astype(jnp.float32)
    max_err = float(jnp.max(jnp.abs(out_f32 - ref)))
    assert jnp.allclose(out_f32, ref, atol=5e-2, rtol=5e-2), max_err

    print("KERNEL_OK")
</pallas_src>

<mosaic_0001>
module attributes {stable_mosaic.version = 11 : i64} {
  func.func @_bottleneck_kernel(%arg0: i32, %arg1: i32, %arg2: memref<1x8x16x16xbf16, #tpu.memory_space<vmem>>, %arg3: memref<2x16x16x16xbf16, #tpu.memory_space<any>>, %arg4: memref<1x16xf32, #tpu.memory_space<vmem>>, %arg5: memref<1x16xf32, #tpu.memory_space<vmem>>, %arg6: memref<16x8xbf16, #tpu.memory_space<vmem>>, %arg7: memref<1x8xf32, #tpu.memory_space<vmem>>, %arg8: memref<1x8xf32, #tpu.memory_space<vmem>>, %arg9: memref<9x8x8xbf16, #tpu.memory_space<vmem>>, %arg10: memref<1x8xf32, #tpu.memory_space<vmem>>, %arg11: memref<1x8xf32, #tpu.memory_space<vmem>>, %arg12: memref<8x32xbf16, #tpu.memory_space<vmem>>, %arg13: memref<1x16xf32, #tpu.memory_space<vmem>>, %arg14: memref<1x16xf32, #tpu.memory_space<vmem>>, %arg15: memref<16x32xbf16, #tpu.memory_space<vmem>>, %arg16: memref<1x4x8x32xbf16, #tpu.memory_space<vmem>>, %arg17: memref<2x16x16xbf16, #tpu.memory_space<vmem>>, %arg18: memref<2x!tpu.dma_semaphore, #tpu.memory_space<semaphore_mem>>, %arg19: memref<4x16x8xf32, #tpu.memory_space<vmem>>, %arg20: memref<4x16x16xf32, #tpu.memory_space<vmem>>) attributes {dimension_semantics = [#tpu.dimension_semantics<parallel>, #tpu.dimension_semantics<parallel>], iteration_bounds = array<i64: 2, 2>, scalar_prefetch = 0 : i64, scratch_operands = 4 : i64, tpu.core_type = #tpu.core_type<tc>, window_params = [{transform_indices = @transform_0, window_bounds = array<i64: 1, 8, 16, 16>}, {}, {pipeline_mode = #tpu.pipeline_mode<synchronous>, transform_indices = @transform_2, window_bounds = array<i64: 1, 16>}, {pipeline_mode = #tpu.pipeline_mode<synchronous>, transform_indices = @transform_3, window_bounds = array<i64: 1, 16>}, {pipeline_mode = #tpu.pipeline_mode<synchronous>, transform_indices = @transform_4, window_bounds = array<i64: 16, 8>}, {pipeline_mode = #tpu.pipeline_mode<synchronous>, transform_indices = @transform_5, window_bounds = array<i64: 1, 8>}, {pipeline_mode = #tpu.pipeline_mode<synchronous>, transform_indices = @transform_6, window_bounds = array<i64: 1, 8>}, {pipeline_mode = #tpu.pipeline_mode<synchronous>, transform_indices = @transform_7, window_bounds = array<i64: 9, 8, 8>}, {pipeline_mode = #tpu.pipeline_mode<synchronous>, transform_indices = @transform_8, window_bounds = array<i64: 1, 8>}, {pipeline_mode = #tpu.pipeline_mode<synchronous>, transform_indices = @transform_9, window_bounds = array<i64: 1, 8>}, {pipeline_mode = #tpu.pipeline_mode<synchronous>, transform_indices = @transform_10, window_bounds = array<i64: 8, 32>}, {pipeline_mode = #tpu.pipeline_mode<synchronous>, transform_indices = @transform_11, window_bounds = array<i64: 1, 16>}, {pipeline_mode = #tpu.pipeline_mode<synchronous>, transform_indices = @transform_12, window_bounds = array<i64: 1, 16>}, {pipeline_mode = #tpu.pipeline_mode<synchronous>, transform_indices = @transform_13, window_bounds = array<i64: 16, 32>}, {transform_indices = @transform_14, window_bounds = array<i64: 1, 4, 8, 32>}]} {
    %c8_i32 = arith.constant 8 : i32
    %0 = arith.muli %arg1, %c8_i32 : i32
    %c1_i32 = arith.constant 1 : i32
    %1 = arith.subi %0, %c1_i32 : i32
    %c0_i32 = arith.constant 0 : i32
    %2 = arith.maxsi %1, %c0_i32 : i32
    %c8_i32_0 = arith.constant 8 : i32
    %3 = arith.muli %arg1, %c8_i32_0 : i32
    %c8_i32_1 = arith.constant 8 : i32
    %4 = arith.addi %3, %c8_i32_1 : i32
    %c15_i32 = arith.constant 15 : i32
    %5 = arith.minsi %4, %c15_i32 : i32
    %c0_i32_2 = arith.constant 0 : i32
    %c0_i32_3 = arith.constant 0 : i32
    %c0_i32_4 = arith.constant 0 : i32
    %6 = tpu.memref_slice %arg3[%arg0, %2, %c0_i32_3, %c0_i32_4] : memref<2x16x16x16xbf16, #tpu.memory_space<any>> -> memref<1x1x16x16xbf16, #tpu.memory_space<any>>
    %7 = tpu.memref_squeeze %6 : memref<1x1x16x16xbf16, #tpu.memory_space<any>> -> memref<1x16x16xbf16, #tpu.memory_space<any>>
    %c0_i32_5 = arith.constant 0 : i32
    %c0_i32_6 = arith.constant 0 : i32
    %c0_i32_7 = arith.constant 0 : i32
    %8 = tpu.memref_slice %arg17[%c0_i32_5, %c0_i32_6, %c0_i32_7] : memref<2x16x16xbf16, #tpu.memory_space<vmem>> -> memref<1x16x16xbf16, #tpu.memory_space<vmem>>
    %9 = tpu.memref_slice %arg18[%c0_i32_2] : memref<2x!tpu.dma_semaphore, #tpu.memory_space<semaphore_mem>> -> memref<1x!tpu.dma_semaphore, #tpu.memory_space<semaphore_mem>>
    %10 = tpu.memref_squeeze %9 : memref<1x!tpu.dma_semaphore, #tpu.memory_space<semaphore_mem>> -> memref<!tpu.dma_semaphore, #tpu.memory_space<semaphore_mem>>
    tpu.enqueue_dma source(%7 : memref<1x16x16xbf16, #tpu.memory_space<any>>) target(%8 : memref<1x16x16xbf16, #tpu.memory_space<vmem>>) target_semaphore(%10 : memref<!tpu.dma_semaphore, #tpu.memory_space<semaphore_mem>>)
    %c1_i32_8 = arith.constant 1 : i32
    %c0_i32_9 = arith.constant 0 : i32
    %c0_i32_10 = arith.constant 0 : i32
    %11 = tpu.memref_slice %arg3[%arg0, %5, %c0_i32_9, %c0_i32_10] : memref<2x16x16x16xbf16, #tpu.memory_space<any>> -> memref<1x1x16x16xbf16, #tpu.memory_space<any>>
    %12 = tpu.memref_squeeze %11 : memref<1x1x16x16xbf16, #tpu.memory_space<any>> -> memref<1x16x16xbf16, #tpu.memory_space<any>>
    %c1_i32_11 = arith.constant 1 : i32
    %c0_i32_12 = arith.constant 0 : i32
    %c0_i32_13 = arith.constant 0 : i32
    %13 = tpu.memref_slice %arg17[%c1_i32_11, %c0_i32_12, %c0_i32_13] : memref<2x16x16xbf16, #tpu.memory_space<vmem>> -> memref<1x16x16xbf16, #tpu.memory_space<vmem>>
    %14 = tpu.memref_slice %arg18[%c1_i32_8] : memref<2x!tpu.dma_semaphore, #tpu.memory_space<semaphore_mem>> -> memref<1x!tpu.dma_semaphore, #tpu.memory_space<semaphore_mem>>
    %15 = tpu.memref_squeeze %14 : memref<1x!tpu.dma_semaphore, #tpu.memory_space<semaphore_mem>> -> memref<!tpu.dma_semaphore, #tpu.memory_space<semaphore_mem>>
    tpu.enqueue_dma source(%12 : memref<1x16x16xbf16, #tpu.memory_space<any>>) target(%13 : memref<1x16x16xbf16, #tpu.memory_space<vmem>>) target_semaphore(%15 : memref<!tpu.dma_semaphore, #tpu.memory_space<semaphore_mem>>)
    %c0 = arith.constant 0 : index
    %c0_14 = arith.constant 0 : index
    %c0_15 = arith.constant 0 : index
    %c0_16 = arith.constant 0 : index
    %16 = vector.load %arg2[%c0, %c0_14, %c0_15, %c0_16] : memref<1x8x16x16xbf16, #tpu.memory_space<vmem>>, vector<1x8x16x16xbf16>
    %17 = vector.shape_cast %16 : vector<1x8x16x16xbf16> to vector<8x16x16xbf16>
    %18 = arith.extf %17 : vector<8x16x16xbf16> to vector<8x16x16xf32>
    %19 = vector.shape_cast %18 : vector<8x16x16xf32> to vector<128x16xf32>
    %c0_17 = arith.constant 0 : index
    %c0_18 = arith.constant 0 : index
    %20 = vector.load %arg4[%c0_17, %c0_18] : memref<1x16xf32, #tpu.memory_space<vmem>>, vector<1x16xf32>
    %21 = vector.broadcast %20 : vector<1x16xf32> to vector<128x16xf32>
    %22 = arith.mulf %19, %21 : vector<128x16xf32>
    %c0_19 = arith.constant 0 : index
    %c0_20 = arith.constant 0 : index
    %23 = vector.load %arg5[%c0_19, %c0_20] : memref<1x16xf32, #tpu.memory_space<vmem>>, vector<1x16xf32>
    %24 = vector.broadcast %23 : vector<1x16xf32> to vector<128x16xf32>
    %25 = arith.addf %22, %24 : vector<128x16xf32>
    %cst = arith.constant 0.000000e+00 : f32
    %26 = vector.broadcast %cst : f32 to vector<128x16xf32>
    %27 = arith.maximumf %25, %26 : vector<128x16xf32>
    %28 = arith.truncf %27 : vector<128x16xf32> to vector<128x16xbf16>
    %c0_21 = arith.constant 0 : index
    %c0_22 = arith.constant 0 : index
    %29 = vector.load %arg6[%c0_21, %c0_22] : memref<16x8xbf16, #tpu.memory_space<vmem>>, vector<16x8xbf16>
    %cst_23 = arith.constant dense<0.000000e+00> : vector<128x8xf32>
    %30 = tpu.matmul %28, %29, %cst_23 {dimension_numbers = #tpu.dot_dimension_numbers<[1], [0], [0], [1], [0, 0, 1, 1], [], []>} : vector<128x16xbf16>, vector<16x8xbf16>, vector<128x8xf32> -> vector<128x8xf32>
    %c0_24 = arith.constant 0 : index
    %c0_25 = arith.constant 0 : index
    %31 = vector.load %arg7[%c0_24, %c0_25] : memref<1x8xf32, #tpu.memory_space<vmem>>, vector<1x8xf32>
    %32 = vector.broadcast %31 : vector<1x8xf32> to vector<128x8xf32>
    %33 = arith.mulf %30, %32 : vector<128x8xf32>
    %c0_26 = arith.constant 0 : index
    %c0_27 = arith.constant 0 : index
    %34 = vector.load %arg8[%c0_26, %c0_27] : memref<1x8xf32, #tpu.memory_space<vmem>>, vector<1x8xf32>
    %35 = vector.broadcast %34 : vector<1x8xf32> to vector<128x8xf32>
    %36 = arith.addf %33, %35 : vector<128x8xf32>
    %cst_28 = arith.constant 0.000000e+00 : f32
    %37 = vector.broadcast %cst_28 : f32 to vector<128x8xf32>
    %38 = arith.maximumf %36, %37 : vector<128x8xf32>
    %39 = vector.shape_cast %38 : vector<128x8xf32> to vector<8x16x8xf32>
    %c0_i32_29 = arith.constant 0 : i32
    %c0_i32_30 = arith.constant 0 : i32
    %c0_i32_31 = arith.constant 0 : i32
    %40 = tpu.memref_slice %arg3[%arg0, %2, %c0_i32_30, %c0_i32_31] : memref<2x16x16x16xbf16, #tpu.memory_space<any>> -> memref<1x1x16x16xbf16, #tpu.memory_space<any>>
    %41 = tpu.memref_squeeze %40 : memref<1x1x16x16xbf16, #tpu.memory_space<any>> -> memref<1x16x16xbf16, #tpu.memory_space<any>>
    %c0_i32_32 = arith.constant 0 : i32
    %c0_i32_33 = arith.constant 0 : i32
    %c0_i32_34 = arith.constant 0 : i32
    %42 = tpu.memref_slice %arg17[%c0_i32_32, %c0_i32_33, %c0_i32_34] : memref<2x16x16xbf16, #tpu.memory_space<vmem>> -> memref<1x16x16xbf16, #tpu.memory_space<vmem>>
    %43 = tpu.memref_slice %arg18[%c0_i32_29] : memref<2x!tpu.dma_semaphore, #tpu.memory_space<semaphore_mem>> -> memref<1x!tpu.dma_semaphore, #tpu.memory_space<semaphore_mem>>
    %44 = tpu.memref_squeeze %43 : memref<1x!tpu.dma_semaphore, #tpu.memory_space<semaphore_mem>> -> memref<!tpu.dma_semaphore, #tpu.memory_space<semaphore_mem>>
    tpu.wait_dma2 semaphore(%44 : memref<!tpu.dma_semaphore, #tpu.memory_space<semaphore_mem>>) src(%41 : memref<1x16x16xbf16, #tpu.memory_space<any>>) dst(%42 : memref<1x16x16xbf16, #tpu.memory_space<vmem>>)
    %c1_i32_35 = arith.constant 1 : i32
    %c0_i32_36 = arith.constant 0 : i32
    %c0_i32_37 = arith.constant 0 : i32
    %45 = tpu.memref_slice %arg3[%arg0, %5, %c0_i32_36, %c0_i32_37] : memref<2x16x16x16xbf16, #tpu.memory_space<any>> -> memref<1x1x16x16xbf16, #tpu.memory_space<any>>
    %46 = tpu.memref_squeeze %45 : memref<1x1x16x16xbf16, #tpu.memory_space<any>> -> memref<1x16x16xbf16, #tpu.memory_space<any>>
    %c1_i32_38 = arith.constant 1 : i32
    %c0_i32_39 = arith.constant 0 : i32
    %c0_i32_40 = arith.constant 0 : i32
    %47 = tpu.memref_slice %arg17[%c1_i32_38, %c0_i32_39, %c0_i32_40] : memref<2x16x16xbf16, #tpu.memory_space<vmem>> -> memref<1x16x16xbf16, #tpu.memory_space<vmem>>
    %48 = tpu.memref_slice %arg18[%c1_i32_35] : memref<2x!tpu.dma_semaphore, #tpu.memory_space<semaphore_mem>> -> memref<1x!tpu.dma_semaphore, #tpu.memory_space<semaphore_mem>>
    %49 = tpu.memref_squeeze %48 : memref<1x!tpu.dma_semaphore, #tpu.memory_space<semaphore_mem>> -> memref<!tpu.dma_semaphore, #tpu.memory_space<semaphore_mem>>
    tpu.wait_dma2 semaphore(%49 : memref<!tpu.dma_semaphore, #tpu.memory_space<semaphore_mem>>) src(%46 : memref<1x16x16xbf16, #tpu.memory_space<any>>) dst(%47 : memref<1x16x16xbf16, #tpu.memory_space<vmem>>)
    %c0_41 = arith.constant 0 : index
    %c0_42 = arith.constant 0 : index
    %c0_43 = arith.constant 0 : index
    %50 = vector.load %arg17[%c0_41, %c0_42, %c0_43] : memref<2x16x16xbf16, #tpu.memory_space<vmem>>, vector<2x16x16xbf16>
    %51 = arith.extf %50 : vector<2x16x16xbf16> to vector<2x16x16xf32>
    %52 = vector.shape_cast %51 : vector<2x16x16xf32> to vector<32x16xf32>
    %c0_44 = arith.constant 0 : index
    %c0_45 = arith.constant 0 : index
    %53 = vector.load %arg4[%c0_44, %c0_45] : memref<1x16xf32, #tpu.memory_space<vmem>>, vector<1x16xf32>
    %54 = vector.broadcast %53 : vector<1x16xf32> to vector<32x16xf32>
    %55 = arith.mulf %52, %54 : vector<32x16xf32>
    %c0_46 = arith.constant 0 : index
    %c0_47 = arith.constant 0 : index
    %56 = vector.load %arg5[%c0_46, %c0_47] : memref<1x16xf32, #tpu.memory_space<vmem>>, vector<1x16xf32>
    %57 = vector.broadcast %56 : vector<1x16xf32> to vector<32x16xf32>
    %58 = arith.addf %55, %57 : vector<32x16xf32>
    %cst_48 = arith.constant 0.000000e+00 : f32
    %59 = vector.broadcast %cst_48 : f32 to vector<32x16xf32>
    %60 = arith.maximumf %58, %59 : vector<32x16xf32>
    %61 = arith.truncf %60 : vector<32x16xf32> to vector<32x16xbf16>
    %c0_49 = arith.constant 0 : index
    %c0_50 = arith.constant 0 : index
    %62 = vector.load %arg6[%c0_49, %c0_50] : memref<16x8xbf16, #tpu.memory_space<vmem>>, vector<16x8xbf16>
    %cst_51 = arith.constant dense<0.000000e+00> : vector<32x8xf32>
    %63 = tpu.matmul %61, %62, %cst_51 {dimension_numbers = #tpu.dot_dimension_numbers<[1], [0], [0], [1], [0, 0, 1, 1], [], []>} : vector<32x16xbf16>, vector<16x8xbf16>, vector<32x8xf32> -> vector<32x8xf32>
    %c0_52 = arith.constant 0 : index
    %c0_53 = arith.constant 0 : index
    %64 = vector.load %arg7[%c0_52, %c0_53] : memref<1x8xf32, #tpu.memory_space<vmem>>, vector<1x8xf32>
    %65 = vector.broadcast %64 : vector<1x8xf32> to vector<32x8xf32>
    %66 = arith.mulf %63, %65 : vector<32x8xf32>
    %c0_54 = arith.constant 0 : index
    %c0_55 = arith.constant 0 : index
    %67 = vector.load %arg8[%c0_54, %c0_55] : memref<1x8xf32, #tpu.memory_space<vmem>>, vector<1x8xf32>
    %68 = vector.broadcast %67 : vector<1x8xf32> to vector<32x8xf32>
    %69 = arith.addf %66, %68 : vector<32x8xf32>
    %cst_56 = arith.constant 0.000000e+00 : f32
    %70 = vector.broadcast %cst_56 : f32 to vector<32x8xf32>
    %71 = arith.maximumf %69, %70 : vector<32x8xf32>
    %72 = vector.shape_cast %71 : vector<32x8xf32> to vector<2x16x8xf32>
    %c0_i32_57 = arith.constant 0 : i32
    %73 = arith.cmpi sgt, %arg1, %c0_i32_57 : i32
    %74 = arith.extui %73 : i1 to i32
    %75 = arith.sitofp %74 : i32 to f32
    %c1_i32_58 = arith.constant 1 : i32
    %76 = arith.cmpi slt, %arg1, %c1_i32_58 : i32
    %77 = arith.extui %76 : i1 to i32
    %78 = arith.sitofp %77 : i32 to f32
    %79 = vector.extract_strided_slice %72 {offsets = [0, 0, 0], sizes = [1, 16, 8], strides = [1, 1, 1]} : vector<2x16x8xf32> to vector<1x16x8xf32>
    %80 = vector.broadcast %75 : f32 to vector<1x16x8xf32>
    %81 = arith.mulf %79, %80 : vector<1x16x8xf32>
    %82 = vector.extract_strided_slice %72 {offsets = [1, 0, 0], sizes = [1, 16, 8], strides = [1, 1, 1]} : vector<2x16x8xf32> to vector<1x16x8xf32>
    %83 = vector.broadcast %78 : f32 to vector<1x16x8xf32>
    %84 = arith.mulf %82, %83 : vector<1x16x8xf32>
    %85 = tpu.concatenate %81, %39, %84 in 0 : vector<1x16x8xf32>, vector<8x16x8xf32>, vector<1x16x8xf32> -> vector<10x16x8xf32>
    %86 = tpu.iota {dimensions = array<i32: 1>} : vector<1x16x1xi32>
    %c1_i32_59 = arith.constant 1 : i32
    %87 = vector.broadcast %c1_i32_59 : i32 to vector<1x16x1xi32>
    %88 = arith.cmpi sge, %86, %87 : vector<1x16x1xi32>
    %c1_i32_60 = arith.constant 1 : i32
    %89 = tpu.dynamic_rotate %85 by %c1_i32_60 dim 1 : vector<10x16x8xf32>, i32 -> vector<10x16x8xf32>
    %cst_61 = arith.constant 0.000000e+00 : f32
    %90 = vector.shape_cast %88 : vector<1x16x1xi1> to vector<1x16x1xi1>
    %91 = vector.broadcast %90 : vector<1x16x1xi1> to vector<10x16x8xi1>
    %92 = vector.broadcast %cst_61 : f32 to vector<10x16x8xf32>
    %93 = arith.select %91, %89, %92 : vector<10x16x8xi1>, vector<10x16x8xf32>
    %c14_i32 = arith.constant 14 : i32
    %94 = vector.broadcast %c14_i32 : i32 to vector<1x16x1xi32>
    %95 = arith.cmpi sle, %86, %94 : vector<1x16x1xi32>
    %c15_i32_62 = arith.constant 15 : i32
    %96 = tpu.dynamic_rotate %85 by %c15_i32_62 dim 1 : vector<10x16x8xf32>, i32 -> vector<10x16x8xf32>
    %cst_63 = arith.constant 0.000000e+00 : f32
    %97 = vector.shape_cast %95 : vector<1x16x1xi1> to vector<1x16x1xi1>
    %98 = vector.broadcast %97 : vector<1x16x1xi1> to vector<10x16x8xi1>
    %99 = vector.broadcast %cst_63 : f32 to vector<10x16x8xf32>
    %100 = arith.select %98, %96, %99 : vector<10x16x8xi1>, vector<10x16x8xf32>
    %101 = arith.truncf %93 : vector<10x16x8xf32> to vector<10x16x8xbf16>
    %102 = arith.truncf %85 : vector<10x16x8xf32> to vector<10x16x8xbf16>
    %103 = arith.truncf %100 : vector<10x16x8xf32> to vector<10x16x8xbf16>
    %cst_64 = arith.constant 0.000000e+00 : f32
    %104 = vector.broadcast %cst_64 : f32 to vector<64x8xf32>
    %105 = vector.shape_cast %101 : vector<10x16x8xbf16> to vector<5x2x16x8xbf16>
    %106 = vector.extract_strided_slice %105 {offsets = [0, 0, 0, 0], sizes = [5, 1, 16, 8], strides = [1, 1, 1, 1]} : vector<5x2x16x8xbf16> to vector<5x1x16x8xbf16>
    %107 = vector.shape_cast %106 : vector<5x1x16x8xbf16> to vector<5x16x8xbf16>
    %108 = vector.extract_strided_slice %107 {offsets = [0, 0, 0], sizes = [4, 16, 8], strides = [1, 1, 1]} : vector<5x16x8xbf16> to vector<4x16x8xbf16>
    %109 = vector.shape_cast %108 : vector<4x16x8xbf16> to vector<64x8xbf16>
    %c0_65 = arith.constant 0 : index
    %c0_66 = arith.constant 0 : index
    %c0_67 = arith.constant 0 : index
    %110 = vector.load %arg9[%c0_65, %c0_66, %c0_67] : memref<9x8x8xbf16, #tpu.memory_space<vmem>>, vector<1x8x8xbf16>
    %111 = vector.shape_cast %110 : vector<1x8x8xbf16> to vector<8x8xbf16>
    %cst_68 = arith.constant dense<0.000000e+00> : vector<64x8xf32>
    %112 = tpu.matmul %109, %111, %cst_68 {dimension_numbers = #tpu.dot_dimension_numbers<[1], [0], [0], [1], [0, 0, 1, 1], [], []>} : vector<64x8xbf16>, vector<8x8xbf16>, vector<64x8xf32> -> vector<64x8xf32>
    %113 = arith.addf %104, %112 : vector<64x8xf32>
    %114 = vector.shape_cast %102 : vector<10x16x8xbf16> to vector<5x2x16x8xbf16>
    %115 = vector.extract_strided_slice %114 {offsets = [0, 0, 0, 0], sizes = [5, 1, 16, 8], strides = [1, 1, 1, 1]} : vector<5x2x16x8xbf16> to vector<5x1x16x8xbf16>
    %116 = vector.shape_cast %115 : vector<5x1x16x8xbf16> to vector<5x16x8xbf16>
    %117 = vector.extract_strided_slice %116 {offsets = [0, 0, 0], sizes = [4, 16, 8], strides = [1, 1, 1]} : vector<5x16x8xbf16> to vector<4x16x8xbf16>
    %118 = vector.shape_cast %117 : vector<4x16x8xbf16> to vector<64x8xbf16>
    %c1 = arith.constant 1 : index
    %c0_69 = arith.constant 0 : index
    %c0_70 = arith.constant 0 : index
    %119 = vector.load %arg9[%c1, %c0_69, %c0_70] : memref<9x8x8xbf16, #tpu.memory_space<vmem>>, vector<1x8x8xbf16>
    %120 = vector.shape_cast %119 : vector<1x8x8xbf16> to vector<8x8xbf16>
    %cst_71 = arith.constant dense<0.000000e+00> : vector<64x8xf32>
    %121 = tpu.matmul %118, %120, %cst_71 {dimension_numbers = #tpu.dot_dimension_numbers<[1], [0], [0], [1], [0, 0, 1, 1], [], []>} : vector<64x8xbf16>, vector<8x8xbf16>, vector<64x8xf32> -> vector<64x8xf32>
    %122 = arith.addf %113, %121 : vector<64x8xf32>
    %123 = vector.shape_cast %103 : vector<10x16x8xbf16> to vector<5x2x16x8xbf16>
    %124 = vector.extract_strided_slice %123 {offsets = [0, 0, 0, 0], sizes = [5, 1, 16, 8], strides = [1, 1, 1, 1]} : vector<5x2x16x8xbf16> to vector<5x1x16x8xbf16>
    %125 = vector.shape_cast %124 : vector<5x1x16x8xbf16> to vector<5x16x8xbf16>
    %126 = vector.extract_strided_slice %125 {offsets = [0, 0, 0], sizes = [4, 16, 8], strides = [1, 1, 1]} : vector<5x16x8xbf16> to vector<4x16x8xbf16>
    %127 = vector.shape_cast %126 : vector<4x16x8xbf16> to vector<64x8xbf16>
    %c2 = arith.constant 2 : index
    %c0_72 = arith.constant 0 : index
    %c0_73 = arith.constant 0 : index
    %128 = vector.load %arg9[%c2, %c0_72, %c0_73] : memref<9x8x8xbf16, #tpu.memory_space<vmem>>, vector<1x8x8xbf16>
    %129 = vector.shape_cast %128 : vector<1x8x8xbf16> to vector<8x8xbf16>
    %cst_74 = arith.constant dense<0.000000e+00> : vector<64x8xf32>
    %130 = tpu.matmul %127, %129, %cst_74 {dimension_numbers = #tpu.dot_dimension_numbers<[1], [0], [0], [1], [0, 0, 1, 1], [], []>} : vector<64x8xbf16>, vector<8x8xbf16>, vector<64x8xf32> -> vector<64x8xf32>
    %131 = arith.addf %122, %130 : vector<64x8xf32>
    %132 = vector.shape_cast %101 : vector<10x16x8xbf16> to vector<5x2x16x8xbf16>
    %133 = vector.extract_strided_slice %132 {offsets = [0, 1, 0, 0], sizes = [5, 1, 16, 8], strides = [1, 1, 1, 1]} : vector<5x2x16x8xbf16> to vector<5x1x16x8xbf16>
    %134 = vector.shape_cast %133 : vector<5x1x16x8xbf16> to vector<5x16x8xbf16>
    %135 = vector.extract_strided_slice %134 {offsets = [0, 0, 0], sizes = [4, 16, 8], strides = [1, 1, 1]} : vector<5x16x8xbf16> to vector<4x16x8xbf16>
    %136 = vector.shape_cast %135 : vector<4x16x8xbf16> to vector<64x8xbf16>
    %c3 = arith.constant 3 : index
    %c0_75 = arith.constant 0 : index
    %c0_76 = arith.constant 0 : index
    %137 = vector.load %arg9[%c3, %c0_75, %c0_76] : memref<9x8x8xbf16, #tpu.memory_space<vmem>>, vector<1x8x8xbf16>
    %138 = vector.shape_cast %137 : vector<1x8x8xbf16> to vector<8x8xbf16>
    %cst_77 = arith.constant dense<0.000000e+00> : vector<64x8xf32>
    %139 = tpu.matmul %136, %138, %cst_77 {dimension_numbers = #tpu.dot_dimension_numbers<[1], [0], [0], [1], [0, 0, 1, 1], [], []>} : vector<64x8xbf16>, vector<8x8xbf16>, vector<64x8xf32> -> vector<64x8xf32>
    %140 = arith.addf %131, %139 : vector<64x8xf32>
    %141 = vector.shape_cast %102 : vector<10x16x8xbf16> to vector<5x2x16x8xbf16>
    %142 = vector.extract_strided_slice %141 {offsets = [0, 1, 0, 0], sizes = [5, 1, 16, 8], strides = [1, 1, 1, 1]} : vector<5x2x16x8xbf16> to vector<5x1x16x8xbf16>
    %143 = vector.shape_cast %142 : vector<5x1x16x8xbf16> to vector<5x16x8xbf16>
    %144 = vector.extract_strided_slice %143 {offsets = [0, 0, 0], sizes = [4, 16, 8], strides = [1, 1, 1]} : vector<5x16x8xbf16> to vector<4x16x8xbf16>
    %145 = vector.shape_cast %144 : vector<4x16x8xbf16> to vector<64x8xbf16>
    %c4 = arith.constant 4 : index
    %c0_78 = arith.constant 0 : index
    %c0_79 = arith.constant 0 : index
    %146 = vector.load %arg9[%c4, %c0_78, %c0_79] : memref<9x8x8xbf16, #tpu.memory_space<vmem>>, vector<1x8x8xbf16>
    %147 = vector.shape_cast %146 : vector<1x8x8xbf16> to vector<8x8xbf16>
    %cst_80 = arith.constant dense<0.000000e+00> : vector<64x8xf32>
    %148 = tpu.matmul %145, %147, %cst_80 {dimension_numbers = #tpu.dot_dimension_numbers<[1], [0], [0], [1], [0, 0, 1, 1], [], []>} : vector<64x8xbf16>, vector<8x8xbf16>, vector<64x8xf32> -> vector<64x8xf32>
    %149 = arith.addf %140, %148 : vector<64x8xf32>
    %150 = vector.shape_cast %103 : vector<10x16x8xbf16> to vector<5x2x16x8xbf16>
    %151 = vector.extract_strided_slice %150 {offsets = [0, 1, 0, 0], sizes = [5, 1, 16, 8], strides = [1, 1, 1, 1]} : vector<5x2x16x8xbf16> to vector<5x1x16x8xbf16>
    %152 = vector.shape_cast %151 : vector<5x1x16x8xbf16> to vector<5x16x8xbf16>
    %153 = vector.extract_strided_slice %152 {offsets = [0, 0, 0], sizes = [4, 16, 8], strides = [1, 1, 1]} : vector<5x16x8xbf16> to vector<4x16x8xbf16>
    %154 = vector.shape_cast %153 : vector<4x16x8xbf16> to vector<64x8xbf16>
    %c5 = arith.constant 5 : index
    %c0_81 = arith.constant 0 : index
    %c0_82 = arith.constant 0 : index
    %155 = vector.load %arg9[%c5, %c0_81, %c0_82] : memref<9x8x8xbf16, #tpu.memory_space<vmem>>, vector<1x8x8xbf16>
    %156 = vector.shape_cast %155 : vector<1x8x8xbf16> to vector<8x8xbf16>
    %cst_83 = arith.constant dense<0.000000e+00> : vector<64x8xf32>
    %157 = tpu.matmul %154, %156, %cst_83 {dimension_numbers = #tpu.dot_dimension_numbers<[1], [0], [0], [1], [0, 0, 1, 1], [], []>} : vector<64x8xbf16>, vector<8x8xbf16>, vector<64x8xf32> -> vector<64x8xf32>
    %158 = arith.addf %149, %157 : vector<64x8xf32>
    %159 = vector.shape_cast %101 : vector<10x16x8xbf16> to vector<5x2x16x8xbf16>
    %160 = vector.extract_strided_slice %159 {offsets = [0, 0, 0, 0], sizes = [5, 1, 16, 8], strides = [1, 1, 1, 1]} : vector<5x2x16x8xbf16> to vector<5x1x16x8xbf16>
    %161 = vector.shape_cast %160 : vector<5x1x16x8xbf16> to vector<5x16x8xbf16>
    %162 = vector.extract_strided_slice %161 {offsets = [1, 0, 0], sizes = [4, 16, 8], strides = [1, 1, 1]} : vector<5x16x8xbf16> to vector<4x16x8xbf16>
    %163 = vector.shape_cast %162 : vector<4x16x8xbf16> to vector<64x8xbf16>
    %c6 = arith.constant 6 : index
    %c0_84 = arith.constant 0 : index
    %c0_85 = arith.constant 0 : index
    %164 = vector.load %arg9[%c6, %c0_84, %c0_85] : memref<9x8x8xbf16, #tpu.memory_space<vmem>>, vector<1x8x8xbf16>
    %165 = vector.shape_cast %164 : vector<1x8x8xbf16> to vector<8x8xbf16>
    %cst_86 = arith.constant dense<0.000000e+00> : vector<64x8xf32>
    %166 = tpu.matmul %163, %165, %cst_86 {dimension_numbers = #tpu.dot_dimension_numbers<[1], [0], [0], [1], [0, 0, 1, 1], [], []>} : vector<64x8xbf16>, vector<8x8xbf16>, vector<64x8xf32> -> vector<64x8xf32>
    %167 = arith.addf %158, %166 : vector<64x8xf32>
    %168 = vector.shape_cast %102 : vector<10x16x8xbf16> to vector<5x2x16x8xbf16>
    %169 = vector.extract_strided_slice %168 {offsets = [0, 0, 0, 0], sizes = [5, 1, 16, 8], strides = [1, 1, 1, 1]} : vector<5x2x16x8xbf16> to vector<5x1x16x8xbf16>
    %170 = vector.shape_cast %169 : vector<5x1x16x8xbf16> to vector<5x16x8xbf16>
    %171 = vector.extract_strided_slice %170 {offsets = [1, 0, 0], sizes = [4, 16, 8], strides = [1, 1, 1]} : vector<5x16x8xbf16> to vector<4x16x8xbf16>
    %172 = vector.shape_cast %171 : vector<4x16x8xbf16> to vector<64x8xbf16>
    %c7 = arith.constant 7 : index
    %c0_87 = arith.constant 0 : index
    %c0_88 = arith.constant 0 : index
    %173 = vector.load %arg9[%c7, %c0_87, %c0_88] : memref<9x8x8xbf16, #tpu.memory_space<vmem>>, vector<1x8x8xbf16>
    %174 = vector.shape_cast %173 : vector<1x8x8xbf16> to vector<8x8xbf16>
    %cst_89 = arith.constant dense<0.000000e+00> : vector<64x8xf32>
    %175 = tpu.matmul %172, %174, %cst_89 {dimension_numbers = #tpu.dot_dimension_numbers<[1], [0], [0], [1], [0, 0, 1, 1], [], []>} : vector<64x8xbf16>, vector<8x8xbf16>, vector<64x8xf32> -> vector<64x8xf32>
    %176 = arith.addf %167, %175 : vector<64x8xf32>
    %177 = vector.shape_cast %103 : vector<10x16x8xbf16> to vector<5x2x16x8xbf16>
    %178 = vector.extract_strided_slice %177 {offsets = [0, 0, 0, 0], sizes = [5, 1, 16, 8], strides = [1, 1, 1, 1]} : vector<5x2x16x8xbf16> to vector<5x1x16x8xbf16>
    %179 = vector.shape_cast %178 : vector<5x1x16x8xbf16> to vector<5x16x8xbf16>
    %180 = vector.extract_strided_slice %179 {offsets = [1, 0, 0], sizes = [4, 16, 8], strides = [1, 1, 1]} : vector<5x16x8xbf16> to vector<4x16x8xbf16>
    %181 = vector.shape_cast %180 : vector<4x16x8xbf16> to vector<64x8xbf16>
    %c8 = arith.constant 8 : index
    %c0_90 = arith.constant 0 : index
    %c0_91 = arith.constant 0 : index
    %182 = vector.load %arg9[%c8, %c0_90, %c0_91] : memref<9x8x8xbf16, #tpu.memory_space<vmem>>, vector<1x8x8xbf16>
    %183 = vector.shape_cast %182 : vector<1x8x8xbf16> to vector<8x8xbf16>
    %cst_92 = arith.constant dense<0.000000e+00> : vector<64x8xf32>
    %184 = tpu.matmul %181, %183, %cst_92 {dimension_numbers = #tpu.dot_dimension_numbers<[1], [0], [0], [1], [0, 0, 1, 1], [], []>} : vector<64x8xbf16>, vector<8x8xbf16>, vector<64x8xf32> -> vector<64x8xf32>
    %185 = arith.addf %176, %184 : vector<64x8xf32>
    %c0_93 = arith.constant 0 : index
    %c0_94 = arith.constant 0 : index
    %186 = vector.load %arg10[%c0_93, %c0_94] : memref<1x8xf32, #tpu.memory_space<vmem>>, vector<1x8xf32>
    %187 = vector.broadcast %186 : vector<1x8xf32> to vector<64x8xf32>
    %188 = arith.mulf %185, %187 : vector<64x8xf32>
    %c0_95 = arith.constant 0 : index
    %c0_96 = arith.constant 0 : index
    %189 = vector.load %arg11[%c0_95, %c0_96] : memref<1x8xf32, #tpu.memory_space<vmem>>, vector<1x8xf32>
    %190 = vector.broadcast %189 : vector<1x8xf32> to vector<64x8xf32>
    %191 = arith.addf %188, %190 : vector<64x8xf32>
    %cst_97 = arith.constant 0.000000e+00 : f32
    %192 = vector.broadcast %cst_97 : f32 to vector<64x8xf32>
    %193 = arith.maximumf %191, %192 : vector<64x8xf32>
    %194 = vector.shape_cast %193 : vector<64x8xf32> to vector<4x16x8xf32>
    %c0_98 = arith.constant 0 : index
    %c0_99 = arith.constant 0 : index
    %c0_100 = arith.constant 0 : index
    %195 = vector.load %arg19[%c0_98, %c0_99, %c0_100] : memref<4x16x8xf32, #tpu.memory_space<vmem>>, vector<4x16x8xf32>
    tpu.vector_store %arg19[%c0_98, %c0_99, %c0_100], %194 {strides = array<i32>} : memref<4x16x8xf32, #tpu.memory_space<vmem>>, vector<4x16x8xf32>,
    %c0_101 = arith.constant 0 : index
    %c0_102 = arith.constant 0 : index
    %c0_103 = arith.constant 0 : index
    %196 = tpu.strided_load %arg19[%c0_101, %c0_102, %c0_103] {strides = array<i32: 1, 2, 1>} : memref<4x16x8xf32, #tpu.memory_space<vmem>>, vector<4x8x8xf32>
    %197 = vector.shape_cast %196 : vector<4x8x8xf32> to vector<32x8xf32>
    %198 = arith.truncf %197 : vector<32x8xf32> to vector<32x8xbf16>
    %c0_104 = arith.constant 0 : index
    %c0_105 = arith.constant 0 : index
    %199 = vector.load %arg12[%c0_104, %c0_105] : memref<8x32xbf16, #tpu.memory_space<vmem>>, vector<8x32xbf16>
    %cst_106 = arith.constant dense<0.000000e+00> : vector<32x32xf32>
    %200 = tpu.matmul %198, %199, %cst_106 {dimension_numbers = #tpu.dot_dimension_numbers<[1], [0], [0], [1], [0, 0, 1, 1], [], []>} : vector<32x8xbf16>, vector<8x32xbf16>, vector<32x32xf32> -> vector<32x32xf32>
    %201 = vector.shape_cast %18 : vector<8x16x16xf32> to vector<4x2x16x16xf32>
    %202 = vector.extract_strided_slice %201 {offsets = [0, 0, 0, 0], sizes = [4, 1, 16, 16], strides = [1, 1, 1, 1]} : vector<4x2x16x16xf32> to vector<4x1x16x16xf32>
    %203 = vector.shape_cast %202 : vector<4x1x16x16xf32> to vector<4x16x16xf32>
    %c0_107 = arith.constant 0 : index
    %c0_108 = arith.constant 0 : index
    %204 = vector.load %arg13[%c0_107, %c0_108] : memref<1x16xf32, #tpu.memory_space<vmem>>, vector<1x16xf32>
    %205 = vector.shape_cast %204 : vector<1x16xf32> to vector<1x1x16xf32>
    %206 = vector.broadcast %205 : vector<1x1x16xf32> to vector<4x16x16xf32>
    %207 = arith.mulf %203, %206 : vector<4x16x16xf32>
    %c0_109 = arith.constant 0 : index
    %c0_110 = arith.constant 0 : index
    %208 = vector.load %arg14[%c0_109, %c0_110] : memref<1x16xf32, #tpu.memory_space<vmem>>, vector<1x16xf32>
    %209 = vector.shape_cast %208 : vector<1x16xf32> to vector<1x1x16xf32>
    %210 = vector.broadcast %209 : vector<1x1x16xf32> to vector<4x16x16xf32>
    %211 = arith.addf %207, %210 : vector<4x16x16xf32>
    %cst_111 = arith.constant 0.000000e+00 : f32
    %212 = vector.broadcast %cst_111 : f32 to vector<4x16x16xf32>
    %213 = arith.maximumf %211, %212 : vector<4x16x16xf32>
    %c0_112 = arith.constant 0 : index
    %c0_113 = arith.constant 0 : index
    %c0_114 = arith.constant 0 : index
    %214 = vector.load %arg20[%c0_112, %c0_113, %c0_114] : memref<4x16x16xf32, #tpu.memory_space<vmem>>, vector<4x16x16xf32>
    tpu.vector_store %arg20[%c0_112, %c0_113, %c0_114], %213 {strides = array<i32>} : memref<4x16x16xf32, #tpu.memory_space<vmem>>, vector<4x16x16xf32>,
    %c0_115 = arith.constant 0 : index
    %c0_116 = arith.constant 0 : index
    %c0_117 = arith.constant 0 : index
    %215 = tpu.strided_load %arg20[%c0_115, %c0_116, %c0_117] {strides = array<i32: 1, 2, 1>} : memref<4x16x16xf32, #tpu.memory_space<vmem>>, vector<4x8x16xf32>
    %216 = vector.shape_cast %215 : vector<4x8x16xf32> to vector<32x16xf32>
    %217 = arith.truncf %216 : vector<32x16xf32> to vector<32x16xbf16>
    %c0_118 = arith.constant 0 : index
    %c0_119 = arith.constant 0 : index
    %218 = vector.load %arg15[%c0_118, %c0_119] : memref<16x32xbf16, #tpu.memory_space<vmem>>, vector<16x32xbf16>
    %cst_120 = arith.constant dense<0.000000e+00> : vector<32x32xf32>
    %219 = tpu.matmul %217, %218, %cst_120 {dimension_numbers = #tpu.dot_dimension_numbers<[1], [0], [0], [1], [0, 0, 1, 1], [], []>} : vector<32x16xbf16>, vector<16x32xbf16>, vector<32x32xf32> -> vector<32x32xf32>
    %220 = arith.addf %200, %219 : vector<32x32xf32>
    %221 = vector.shape_cast %220 : vector<32x32xf32> to vector<4x8x32xf32>
    %222 = arith.truncf %221 : vector<4x8x32xf32> to vector<4x8x32xbf16>
    %c0_121 = arith.constant 0 : index
    %c0_122 = arith.constant 0 : index
    %c0_123 = arith.constant 0 : index
    %c0_124 = arith.constant 0 : index
    %223 = vector.load %arg16[%c0_121, %c0_122, %c0_123, %c0_124] : memref<1x4x8x32xbf16, #tpu.memory_space<vmem>>, vector<1x4x8x32xbf16>
    %224 = vector.shape_cast %223 : vector<1x4x8x32xbf16> to vector<4x8x32xbf16>
    %225 = vector.shape_cast %222 : vector<4x8x32xbf16> to vector<1x4x8x32xbf16>
    tpu.vector_store %arg16[%c0_121, %c0_122, %c0_123, %c0_124], %225 {strides = array<i32>} : memref<1x4x8x32xbf16, #tpu.memory_space<vmem>>, vector<1x4x8x32xbf16>,
    return
  }
  func.func @transform_0(%arg0: i32, %arg1: i32) -> (i32, i32, i32, i32) {
    %c0_i32 = arith.constant 0 : i32
    %c0_i32_0 = arith.constant 0 : i32
    %c0_i32_1 = arith.constant 0 : i32
    return %arg0, %arg1, %c0_i32, %c0_i32_0 : i32, i32, i32, i32
  }
  func.func @transform_2(%arg0: i32, %arg1: i32) -> (i32, i32) {
    %c0_i32 = arith.constant 0 : i32
    %c0_i32_0 = arith.constant 0 : i32
    %c0_i32_1 = arith.constant 0 : i32
    return %c0_i32, %c0_i32_0 : i32, i32
  }
  func.func @transform_3(%arg0: i32, %arg1: i32) -> (i32, i32) {
    %c0_i32 = arith.constant 0 : i32
    %c0_i32_0 = arith.constant 0 : i32
    %c0_i32_1 = arith.constant 0 : i32
    return %c0_i32, %c0_i32_0 : i32, i32
  }
  func.func @transform_4(%arg0: i32, %arg1: i32) -> (i32, i32) {
    %c0_i32 = arith.constant 0 : i32
    %c0_i32_0 = arith.constant 0 : i32
    %c0_i32_1 = arith.constant 0 : i32
    return %c0_i32, %c0_i32_0 : i32, i32
  }
  func.func @transform_5(%arg0: i32, %arg1: i32) -> (i32, i32) {
    %c0_i32 = arith.constant 0 : i32
    %c0_i32_0 = arith.constant 0 : i32
    %c0_i32_1 = arith.constant 0 : i32
    return %c0_i32, %c0_i32_0 : i32, i32
  }
  func.func @transform_6(%arg0: i32, %arg1: i32) -> (i32, i32) {
    %c0_i32 = arith.constant 0 : i32
    %c0_i32_0 = arith.constant 0 : i32
    %c0_i32_1 = arith.constant 0 : i32
    return %c0_i32, %c0_i32_0 : i32, i32
  }
  func.func @transform_7(%arg0: i32, %arg1: i32) -> (i32, i32, i32) {
    %c0_i32 = arith.constant 0 : i32
    %c0_i32_0 = arith.constant 0 : i32
    %c0_i32_1 = arith.constant 0 : i32
    %c0_i32_2 = arith.constant 0 : i32
    return %c0_i32, %c0_i32_0, %c0_i32_1 : i32, i32, i32
  }
  func.func @transform_8(%arg0: i32, %arg1: i32) -> (i32, i32) {
    %c0_i32 = arith.constant 0 : i32
    %c0_i32_0 = arith.constant 0 : i32
    %c0_i32_1 = arith.constant 0 : i32
    return %c0_i32, %c0_i32_0 : i32, i32
  }
  func.func @transform_9(%arg0: i32, %arg1: i32) -> (i32, i32) {
    %c0_i32 = arith.constant 0 : i32
    %c0_i32_0 = arith.constant 0 : i32
    %c0_i32_1 = arith.constant 0 : i32
    return %c0_i32, %c0_i32_0 : i32, i32
  }
  func.func @transform_10(%arg0: i32, %arg1: i32) -> (i32, i32) {
    %c0_i32 = arith.constant 0 : i32
    %c0_i32_0 = arith.constant 0 : i32
    %c0_i32_1 = arith.constant 0 : i32
    return %c0_i32, %c0_i32_0 : i32, i32
  }
  func.func @transform_11(%arg0: i32, %arg1: i32) -> (i32, i32) {
    %c0_i32 = arith.constant 0 : i32
    %c0_i32_0 = arith.constant 0 : i32
    %c0_i32_1 = arith.constant 0 : i32
    return %c0_i32, %c0_i32_0 : i32, i32
  }
  func.func @transform_12(%arg0: i32, %arg1: i32) -> (i32, i32) {
    %c0_i32 = arith.constant 0 : i32
    %c0_i32_0 = arith.constant 0 : i32
    %c0_i32_1 = arith.constant 0 : i32
    return %c0_i32, %c0_i32_0 : i32, i32
  }
  func.func @transform_13(%arg0: i32, %arg1: i32) -> (i32, i32) {
    %c0_i32 = arith.constant 0 : i32
    %c0_i32_0 = arith.constant 0 : i32
    %c0_i32_1 = arith.constant 0 : i32
    return %c0_i32, %c0_i32_0 : i32, i32
  }
  func.func @transform_14(%arg0: i32, %arg1: i32) -> (i32, i32, i32, i32) {
    %c0_i32 = arith.constant 0 : i32
    %c0_i32_0 = arith.constant 0 : i32
    %c0_i32_1 = arith.constant 0 : i32
    return %arg0, %arg1, %c0_i32, %c0_i32_0 : i32, i32, i32, i32
  }
}

</mosaic_0001>

<llo_original>
// kernel: tpu_custom_call.1
$region0: #{tpu_custom_call.1}
  #allocation0 [shape = 'u32[]', space=smem, size = 0x4, offset = 0x4, fixed_abs, tag = 'smem constant byte address 0x4 - core index']
  #allocation1 [shape = 'u32[144,128]{1,0:T(1,128)}', space=vmem, size = 0x12000, scoped, tag = 'internal scratch']
  #allocation2 [shape = 'bf16[2,16,16]{2,1,0:T(16,128)(2,1)}', space=vmem, size = 0x2000, scoped, tag = 'scratch operand']
  #allocation3 [shape = 's32[2]{0}', space=sflag, size = 0x8, scoped, tag = 'scratch operand']
  #allocation4 [shape = 'f32[4,16,8]{2,1,0:T(8,128)}', space=vmem, size = 0x8000, scoped, tag = 'scratch operand']
  #allocation5 [shape = 'f32[4,16,16]{2,1,0:T(8,128)}', space=vmem, size = 0x8000, scoped, tag = 'scratch operand']
  #allocation28 [shape = 's32[]', space=sflag, size = 0x4, offset = 0, fixed_abs, tag = 'sflag constant byte address 0x0 - dummy sync flag']
  #allocation29 [shape = 's32[]', space=sflag, size = 0x4, offset = 0, fixed_abs, tag = 'sflag constant byte address 0x0 - dummy sync flag']
  #allocation30 [shape = 'u32[]', space=smem, size = 0x4, offset = 0x44, fixed_abs, tag = 'smem constant byte address 0x44 - assertion arg 0']
  #allocation31 [shape = 'u32[]', space=smem, size = 0x4, offset = 0x48, fixed_abs, tag = 'smem constant byte address 0x48 - assertion arg 1']
  #allocation32 [shape = 's32[]', space=sflag, size = 0x4, offset = 0, fixed_abs, tag = 'sflag constant byte address 0x0 - dummy sync flag']
  #allocation33 [shape = 's32[]', space=sflag, size = 0x4, offset = 0, fixed_abs, tag = 'sflag constant byte address 0x0 - dummy sync flag']
  %s0 = inlined_call_operand.hbm [shape: bf16[2,16,16,16], index: 0, kind: input, shape index: {}]
  %s1 = inlined_call_operand.hbm [shape: bf16[2,16,16,16], index: 1, kind: input, shape index: {}]
  %s2 = inlined_call_operand.hbm [shape: f32[1,16], index: 2, kind: input, shape index: {}]
  %s3 = inlined_call_operand.hbm [shape: f32[1,16], index: 3, kind: input, shape index: {}]
  %s4 = inlined_call_operand.hbm [shape: bf16[16,8], index: 4, kind: input, shape index: {}]
  %s5 = inlined_call_operand.hbm [shape: f32[1,8], index: 5, kind: input, shape index: {}]
  %s6 = inlined_call_operand.hbm [shape: f32[1,8], index: 6, kind: input, shape index: {}]
  %s7 = inlined_call_operand.hbm [shape: bf16[9,8,8], index: 7, kind: input, shape index: {}]
  %s8 = inlined_call_operand.hbm [shape: f32[1,8], index: 8, kind: input, shape index: {}]
  %s9 = inlined_call_operand.hbm [shape: f32[1,8], index: 9, kind: input, shape index: {}]
  %s10 = inlined_call_operand.hbm [shape: bf16[8,32], index: 10, kind: input, shape index: {}]
  %s11 = inlined_call_operand.hbm [shape: f32[1,16], index: 11, kind: input, shape index: {}]
  %s12 = inlined_call_operand.hbm [shape: f32[1,16], index: 12, kind: input, shape index: {}]
  %s13 = inlined_call_operand.hbm [shape: bf16[16,32], index: 13, kind: input, shape index: {}]
  %s14 = inlined_call_operand.hbm [shape: bf16[2,8,8,32], index: 14, kind: output, shape index: {}]
  %s15 = sld [smem:[#allocation0]]
  $region145: #{tpu_custom_call.1} parent=0
    _
  %s17 = ssub.s32 1, %s15
  %s18 = scalar_select 0, %s17, %s15
  $region1: #{tpu_custom_call.1} parent=0
    #allocation6 [shape = 'u8[65536]{0}', space=vmem, size = 0x10000, scoped, tag = 'input window, operand 0']
    #allocation7 [shape = 's32[2]{0}', space=sflag, size = 0x8, scoped, tag = 'scoped memory for tpu_custom_call.1']
    #allocation8 [shape = 's32[2]{0}', space=sflag, size = 0x8, scoped, tag = 'scoped memory for tpu_custom_call.1']
    #allocation9 [shape = 'u8[512]{0}', space=vmem, size = 0x400, scoped, tag = 'input window, operand 2, single buffered']
    #allocation10 [shape = 's32[1]{0}', space=sflag, size = 0x4, scoped, tag = 'scoped memory for tpu_custom_call.1']
    #allocation11 [shape = 'u8[512]{0}', space=vmem, size = 0x400, scoped, tag = 'input window, operand 3, single buffered']
    #allocation12 [shape = 'u8[4096]{0}', space=vmem, size = 0x1000, scoped, tag = 'input window, operand 4, single buffered']
    #allocation13 [shape = 's32[1]{0}', space=sflag, size = 0x4, scoped, tag = 'scoped memory for tpu_custom_call.1']
    #allocation14 [shape = 'u8[512]{0}', space=vmem, size = 0x400, scoped, tag = 'input window, operand 5, single buffered']
    #allocation15 [shape = 'u8[512]{0}', space=vmem, size = 0x400, scoped, tag = 'input window, operand 6, single buffered']
    #allocation16 [shape = 's32[1]{0}', space=sflag, size = 0x4, scoped, tag = 'scoped memory for tpu_custom_call.1']
    #allocation17 [shape = 'u8[18432]{0}', space=vmem, size = 0x4800, scoped, tag = 'input window, operand 7, single buffered']
    #allocation18 [shape = 'u8[512]{0}', space=vmem, size = 0x400, scoped, tag = 'input window, operand 8, single buffered']
    #allocation19 [shape = 's32[1]{0}', space=sflag, size = 0x4, scoped, tag = 'scoped memory for tpu_custom_call.1']
    #allocation20 [shape = 'u8[512]{0}', space=vmem, size = 0x400, scoped, tag = 'input window, operand 9, single buffered']
    #allocation21 [shape = 'u8[2048]{0}', space=vmem, size = 0x800, scoped, tag = 'input window, operand 10, single buffered']
    #allocation22 [shape = 's32[1]{0}', space=sflag, size = 0x4, scoped, tag = 'scoped memory for tpu_custom_call.1']
    #allocation23 [shape = 'u8[512]{0}', space=vmem, size = 0x400, scoped, tag = 'input window, operand 11, single buffered']
    #allocation24 [shape = 'u8[512]{0}', space=vmem, size = 0x400, scoped, tag = 'input window, operand 12, single buffered']
    #allocation25 [shape = 's32[1]{0}', space=sflag, size = 0x4, scoped, tag = 'scoped memory for tpu_custom_call.1']
    #allocation26 [shape = 'u8[4096]{0}', space=vmem, size = 0x1000, scoped, tag = 'input window, operand 13, single buffered']
    #allocation27 [shape = 'u8[16384]{0}', space=vmem, size = 0x4000, scoped, tag = 'output window, operand 0']
    %19 = vsyncpa [#allocation7], 0
    %s20 = scalar_lea.sflag [#allocation7], 1
    %21 = vsyncpa %s20, 0
    %22 = vsyncpa [#allocation10], 0
    %23 = vsyncpa [#allocation13], 0
    %24 = vsyncpa [#allocation16], 0
    %25 = vsyncpa [#allocation19], 0
    %26 = vsyncpa [#allocation22], 0
    %27 = vsyncpa [#allocation25], 0
    %28 = vsyncpa [#allocation8], 0
    %s29 = scalar_lea.sflag [#allocation8], 1
    %30 = vsyncpa %s29, 0
    loop: start=0, step=1, limit=6
    $region2: #{tpu_custom_call.1} parent=1 // loop_pre_header
      _
    $region3: #{tpu_custom_call.1} parent=1 // loop_header
      %s32 = sphi 0, %s36
      %p33 = scmp.ge.s32.totalorder %s32, 6
      %s39 = sphi 0, %s51
      %s40 = sphi 0, %s47
      %s41 = sphi 0, %s39
      %s42 = sphi 0, %s40
      %s43 = sphi 0, %s41
      %s44 = sphi 0, %s42
      %s56 = sphi 0, %s58
      %s59 = sphi 0, %s56
      %s60 = sphi 0, %s59
      %s76 = sphi 0, %s60
      %s80 = sphi 0, %s80
      %s82 = sphi 0, %s80
      %s83 = sphi 0, %s82
      %s97 = sphi 0, %s83
      %s101 = sphi 0, %s101
      %s103 = sphi 0, %s101
      %s104 = sphi 0, %s103
      %s118 = sphi 0, %s104
      %s122 = sphi 0, %s122
      %s124 = sphi 0, %s122
      %s125 = sphi 0, %s124
      %s139 = sphi 0, %s125
      %s143 = sphi 0, %s143
      %s145 = sphi 0, %s143
      %s146 = sphi 0, %s145
      %s160 = sphi 0, %s146
      %s164 = sphi 0, %s164
      %s166 = sphi 0, %s164
      %s167 = sphi 0, %s166
      %s181 = sphi 0, %s167
      %s185 = sphi 0, %s185
      %s187 = sphi 0, %s185
      %s188 = sphi 0, %s187
      %s202 = sphi 0, %s188
      %s206 = sphi 0, %s206
      %s208 = sphi 0, %s206
      %s209 = sphi 0, %s208
      %s223 = sphi 0, %s209
      %s227 = sphi 0, %s227
      %s229 = sphi 0, %s227
      %s230 = sphi 0, %s229
      %s244 = sphi 0, %s230
      %s248 = sphi 0, %s248
      %s250 = sphi 0, %s248
      %s251 = sphi 0, %s250
      %s265 = sphi 0, %s251
      %s269 = sphi 0, %s269
      %s271 = sphi 0, %s269
      %s272 = sphi 0, %s271
      %s286 = sphi 0, %s272
      %s290 = sphi 0, %s290
      %s292 = sphi 0, %s290
      %s293 = sphi 0, %s292
      %s307 = sphi 0, %s293
      %s311 = sphi 0, %s311
      %s313 = sphi 0, %s311
      %s314 = sphi 0, %s313
      %s328 = sphi 0, %s314
      %s336 = sphi 0, %s338
      %s339 = sphi 0, %s336
      %s340 = sphi 0, %s339
      %s356 = sphi 0, %s340
    $region4: #{tpu_custom_call.1} parent=1 // loop_header_branch
      %35 = sbr.rel (%p33) target = $region8
    $region5: #{tpu_custom_call.1} parent=1 // loop_body
      %s37 = ssub.s32 %s32, 1
      %s38 = ssub.s32 %s32, 2
      %s45 = sadd.s32 1, %s40
      %p46 = scmp.ge.s32.totalorder %s45, 2
      %s47 = scalar_select %p46, 0, %s45
      %s48 = sadd.s32 1, %s39
      %s49 = scalar_select %p46, %s48, %s39
      %p50 = scmp.ge.s32.totalorder %s49, 2
      %s51 = scalar_select %p50, 0, %s49
      %s52 = ssub.s32 %s39, %s51
      %s53 = ssub.s32 %s40, %s47
      %s54 = sor.u32 %s52, %s53
      %p55 = scmp.eq.s32.totalorder %s54, 0
      %s57 = sadd.s32 %s56, 1
      %s58 = scalar_select %p55, %s56, %s57
      %p61 = pneg %p55
      %p62 = scmp.eq.s32.totalorder %s32, 3
      %p63 = por %p61, %p62
      %p64 = scmp.ne.s32.totalorder %s56, %s59
      %p65 = scmp.eq.s32.totalorder %s32, 0
      %p66 = por %p64, %p65
      %p67 = scmp.ne.s32.totalorder %s56, %s59
      %p68 = scmp.eq.s32.totalorder %s37, 3
      %p69 = por %p67, %p68
      %p70 = scmp.ne.s32.totalorder %s59, %s60
      %p71 = scmp.eq.s32.totalorder %s37, 0
      %p72 = por %p70, %p71
      %p73 = scmp.ne.s32.totalorder %s59, %s60
      %p74 = scmp.eq.s32.totalorder %s38, 3
      %p75 = por %p73, %p74
      %p77 = scmp.ne.s32.totalorder %s60, %s76
      %p78 = scmp.eq.s32.totalorder %s38, 0
      %p79 = por %p77, %p78
      %s81 = sadd.s32 %s80, 1
      %p84 = scmp.eq.s32.totalorder %s32, 3
      %p85 = scmp.ne.s32.totalorder %s80, %s82
      %p86 = scmp.eq.s32.totalorder %s32, 0
      %p87 = por %p85, %p86
      %p88 = scmp.ne.s32.totalorder %s80, %s82
      %p89 = scmp.eq.s32.totalorder %s37, 3
      %p90 = por %p88, %p89
      %p91 = scmp.ne.s32.totalorder %s82, %s83
      %p92 = scmp.eq.s32.totalorder %s37, 0
      %p93 = por %p91, %p92
      %p94 = scmp.ne.s32.totalorder %s82, %s83
      %p95 = scmp.eq.s32.totalorder %s38, 3
      %p96 = por %p94, %p95
      %p98 = scmp.ne.s32.totalorder %s83, %s97
      %p99 = scmp.eq.s32.totalorder %s38, 0
      %p100 = por %p98, %p99
      %s102 = sadd.s32 %s101, 1
      %p105 = scmp.eq.s32.totalorder %s32, 3
      %p106 = scmp.ne.s32.totalorder %s101, %s103
      %p107 = scmp.eq.s32.totalorder %s32, 0
      %p108 = por %p106, %p107
      %p109 = scmp.ne.s32.totalorder %s101, %s103
      %p110 = scmp.eq.s32.totalorder %s37, 3
      %p111 = por %p109, %p110
      %p112 = scmp.ne.s32.totalorder %s103, %s104
      %p113 = scmp.eq.s32.totalorder %s37, 0
      %p114 = por %p112, %p113
      %p115 = scmp.ne.s32.totalorder %s103, %s104
      %p116 = scmp.eq.s32.totalorder %s38, 3
      %p117 = por %p115, %p116
      %p119 = scmp.ne.s32.totalorder %s104, %s118
      %p120 = scmp.eq.s32.totalorder %s38, 0
      %p121 = por %p119, %p120
      %s123 = sadd.s32 %s122, 1
      %p126 = scmp.eq.s32.totalorder %s32, 3
      %p127 = scmp.ne.s32.totalorder %s122, %s124
      %p128 = scmp.eq.s32.totalorder %s32, 0
      %p129 = por %p127, %p128
      %p130 = scmp.ne.s32.totalorder %s122, %s124
      %p131 = scmp.eq.s32.totalorder %s37, 3
      %p132 = por %p130, %p131
      %p133 = scmp.ne.s32.totalorder %s124, %s125
      %p134 = scmp.eq.s32.totalorder %s37, 0
      %p135 = por %p133, %p134
      %p136 = scmp.ne.s32.totalorder %s124, %s125
      %p137 = scmp.eq.s32.totalorder %s38, 3
      %p138 = por %p136, %p137
      %p140 = scmp.ne.s32.totalorder %s125, %s139
      %p141 = scmp.eq.s32.totalorder %s38, 0
      %p142 = por %p140, %p141
      %s144 = sadd.s32 %s143, 1
      %p147 = scmp.eq.s32.totalorder %s32, 3
      %p148 = scmp.ne.s32.totalorder %s143, %s145
      %p149 = scmp.eq.s32.totalorder %s32, 0
      %p150 = por %p148, %p149
      %p151 = scmp.ne.s32.totalorder %s143, %s145
      %p152 = scmp.eq.s32.totalorder %s37, 3
      %p153 = por %p151, %p152
      %p154 = scmp.ne.s32.totalorder %s145, %s146
      %p155 = scmp.eq.s32.totalorder %s37, 0
      %p156 = por %p154, %p155
      %p157 = scmp.ne.s32.totalorder %s145, %s146
      %p158 = scmp.eq.s32.totalorder %s38, 3
      %p159 = por %p157, %p158
      %p161 = scmp.ne.s32.totalorder %s146, %s160
      %p162 = scmp.eq.s32.totalorder %s38, 0
      %p163 = por %p161, %p162
      %s165 = sadd.s32 %s164, 1
      %p168 = scmp.eq.s32.totalorder %s32, 3
      %p169 = scmp.ne.s32.totalorder %s164, %s166
      %p170 = scmp.eq.s32.totalorder %s32, 0
      %p171 = por %p169, %p170
      %p172 = scmp.ne.s32.totalorder %s164, %s166
      %p173 = scmp.eq.s32.totalorder %s37, 3
      %p174 = por %p172, %p173
      %p175 = scmp.ne.s32.totalorder %s166, %s167
      %p176 = scmp.eq.s32.totalorder %s37, 0
      %p177 = por %p175, %p176
      %p178 = scmp.ne.s32.totalorder %s166, %s167
      %p179 = scmp.eq.s32.totalorder %s38, 3
      %p180 = por %p178, %p179
      %p182 = scmp.ne.s32.totalorder %s167, %s181
      %p183 = scmp.eq.s32.totalorder %s38, 0
      %p184 = por %p182, %p183
      %s186 = sadd.s32 %s185, 1
      %p189 = scmp.eq.s32.totalorder %s32, 3
      %p190 = scmp.ne.s32.totalorder %s185, %s187
      %p191 = scmp.eq.s32.totalorder %s32, 0
      %p192 = por %p190, %p191
      %p193 = scmp.ne.s32.totalorder %s185, %s187
      %p194 = scmp.eq.s32.totalorder %s37, 3
      %p195 = por %p193, %p194
      %p196 = scmp.ne.s32.totalorder %s187, %s188
      %p197 = scmp.eq.s32.totalorder %s37, 0
      %p198 = por %p196, %p197
      %p199 = scmp.ne.s32.totalorder %s187, %s188
      %p200 = scmp.eq.s32.totalorder %s38, 3
      %p201 = por %p199, %p200
      %p203 = scmp.ne.s32.totalorder %s188, %s202
      %p204 = scmp.eq.s32.totalorder %s38, 0
      %p205 = por %p203, %p204
      %s207 = sadd.s32 %s206, 1
      %p210 = scmp.eq.s32.totalorder %s32, 3
      %p211 = scmp.ne.s32.totalorder %s206, %s208
      %p212 = scmp.eq.s32.totalorder %s32, 0
      %p213 = por %p211, %p212
      %p214 = scmp.ne.s32.totalorder %s206, %s208
      %p215 = scmp.eq.s32.totalorder %s37, 3
      %p216 = por %p214, %p215
      %p217 = scmp.ne.s32.totalorder %s208, %s209
      %p218 = scmp.eq.s32.totalorder %s37, 0
      %p219 = por %p217, %p218
      %p220 = scmp.ne.s32.totalorder %s208, %s209
      %p221 = scmp.eq.s32.totalorder %s38, 3
      %p222 = por %p220, %p221
      %p224 = scmp.ne.s32.totalorder %s209, %s223
      %p225 = scmp.eq.s32.totalorder %s38, 0
      %p226 = por %p224, %p225
      %s228 = sadd.s32 %s227, 1
      %p231 = scmp.eq.s32.totalorder %s32, 3
      %p232 = scmp.ne.s32.totalorder %s227, %s229
      %p233 = scmp.eq.s32.totalorder %s32, 0
      %p234 = por %p232, %p233
      %p235 = scmp.ne.s32.totalorder %s227, %s229
      %p236 = scmp.eq.s32.totalorder %s37, 3
      %p237 = por %p235, %p236
      %p238 = scmp.ne.s32.totalorder %s229, %s230
      %p239 = scmp.eq.s32.totalorder %s37, 0
      %p240 = por %p238, %p239
      %p241 = scmp.ne.s32.totalorder %s229, %s230
      %p242 = scmp.eq.s32.totalorder %s38, 3
      %p243 = por %p241, %p242
      %p245 = scmp.ne.s32.totalorder %s230, %s244
      %p246 = scmp.eq.s32.totalorder %s38, 0
      %p247 = por %p245, %p246
      %s249 = sadd.s32 %s248, 1
      %p252 = scmp.eq.s32.totalorder %s32, 3
      %p253 = scmp.ne.s32.totalorder %s248, %s250
      %p254 = scmp.eq.s32.totalorder %s32, 0
      %p255 = por %p253, %p254
      %p256 = scmp.ne.s32.totalorder %s248, %s250
      %p257 = scmp.eq.s32.totalorder %s37, 3
      %p258 = por %p256, %p257
      %p259 = scmp.ne.s32.totalorder %s250, %s251
      %p260 = scmp.eq.s32.totalorder %s37, 0
      %p261 = por %p259, %p260
      %p262 = scmp.ne.s32.totalorder %s250, %s251
      %p263 = scmp.eq.s32.totalorder %s38, 3
      %p264 = por %p262, %p263
      %p266 = scmp.ne.s32.totalorder %s251, %s265
      %p267 = scmp.eq.s32.totalorder %s38, 0
      %p268 = por %p266, %p267
      %s270 = sadd.s32 %s269, 1
      %p273 = scmp.eq.s32.totalorder %s32, 3
      %p274 = scmp.ne.s32.totalorder %s269, %s271
      %p275 = scmp.eq.s32.totalorder %s32, 0
      %p276 = por %p274, %p275
      %p277 = scmp.ne.s32.totalorder %s269, %s271
      %p278 = scmp.eq.s32.totalorder %s37, 3
      %p279 = por %p277, %p278
      %p280 = scmp.ne.s32.totalorder %s271, %s272
      %p281 = scmp.eq.s32.totalorder %s37, 0
      %p282 = por %p280, %p281
      %p283 = scmp.ne.s32.totalorder %s271, %s272
      %p284 = scmp.eq.s32.totalorder %s38, 3
      %p285 = por %p283, %p284
      %p287 = scmp.ne.s32.totalorder %s272, %s286
      %p288 = scmp.eq.s32.totalorder %s38, 0
      %p289 = por %p287, %p288
      %s291 = sadd.s32 %s290, 1
      %p294 = scmp.eq.s32.totalorder %s32, 3
      %p295 = scmp.ne.s32.totalorder %s290, %s292
      %p296 = scmp.eq.s32.totalorder %s32, 0
      %p297 = por %p295, %p296
      %p298 = scmp.ne.s32.totalorder %s290, %s292
      %p299 = scmp.eq.s32.totalorder %s37, 3
      %p300 = por %p298, %p299
      %p301 = scmp.ne.s32.totalorder %s292, %s293
      %p302 = scmp.eq.s32.totalorder %s37, 0
      %p303 = por %p301, %p302
      %p304 = scmp.ne.s32.totalorder %s292, %s293
      %p305 = scmp.eq.s32.totalorder %s38, 3
      %p306 = por %p304, %p305
      %p308 = scmp.ne.s32.totalorder %s293, %s307
      %p309 = scmp.eq.s32.totalorder %s38, 0
      %p310 = por %p308, %p309
      %s312 = sadd.s32 %s311, 1
      %p315 = scmp.eq.s32.totalorder %s32, 3
      %p316 = scmp.ne.s32.totalorder %s311, %s313
      %p317 = scmp.eq.s32.totalorder %s32, 0
      %p318 = por %p316, %p317
      %p319 = scmp.ne.s32.totalorder %s311, %s313
      %p320 = scmp.eq.s32.totalorder %s37, 3
      %p321 = por %p319, %p320
      %p322 = scmp.ne.s32.totalorder %s313, %s314
      %p323 = scmp.eq.s32.totalorder %s37, 0
      %p324 = por %p322, %p323
      %p325 = scmp.ne.s32.totalorder %s313, %s314
      %p326 = scmp.eq.s32.totalorder %s38, 3
      %p327 = por %p325, %p326
      %p329 = scmp.ne.s32.totalorder %s314, %s328
      %p330 = scmp.eq.s32.totalorder %s38, 0
      %p331 = por %p329, %p330
      %s332 = ssub.s32 %s39, %s51
      %s333 = ssub.s32 %s40, %s47
      %s334 = sor.u32 %s332, %s333
      %p335 = scmp.eq.s32.totalorder %s334, 0
      %s337 = sadd.s32 %s336, 1
      %s338 = scalar_select %p335, %s336, %s337
      %p341 = pneg %p335
      %p342 = scmp.eq.s32.totalorder %s32, 3
      %p343 = por %p341, %p342
      %p344 = scmp.ne.s32.totalorder %s336, %s339
      %p345 = scmp.eq.s32.totalorder %s32, 0
      %p346 = por %p344, %p345
      %p347 = scmp.ne.s32.totalorder %s336, %s339
      %p348 = scmp.eq.s32.totalorder %s37, 3
      %p349 = por %p347, %p348
      %p350 = scmp.ne.s32.totalorder %s339, %s340
      %p351 = scmp.eq.s32.totalorder %s37, 0
      %p352 = por %p350, %p351
      %p353 = scmp.ne.s32.totalorder %s339, %s340
      %p354 = scmp.eq.s32.totalorder %s38, 3
      %p355 = por %p353, %p354
      %p357 = scmp.ne.s32.totalorder %s340, %s356
      %p358 = scmp.eq.s32.totalorder %s38, 0
      %p359 = por %p357, %p358
      %p360 = scmp.le.s32.totalorder 1, %s32
      %p361 = scmp.lt.s32.totalorder %s32, 5
      %p362 = pnand %p360, %p361
      %p363 = pneg %p362
      // Predicated region
      $region9: #{tpu_custom_call.1} parent=5 // pred_check
        _
      $region10: #{tpu_custom_call.1} parent=5 // pred_check_branch
        %365 = sbr.rel (%p362) target = $region12
      $region11: #{tpu_custom_call.1} parent=5 // pred_region
        %s366 = ssub.s32 %s32, 1
        // Predicated region
        $region13: #{tpu_custom_call.1} parent=11 // pred_check
          %p367 = pneg %p93
        $region14: #{tpu_custom_call.1} parent=11 // pred_check_branch
          %369 = sbr.rel (%p367) target = $region16
        $region15: #{tpu_custom_call.1} parent=11 // pred_region
          %s371 = ssub.s32 16, 16
          %372 = vsyncadd [#allocation10], %s371
          %s374 = sshll.u32 [#allocation9], 4
          %s375 = int_to_ptr.vmem [resolvable:$true] %s374
          %377 = dma.hbm_to_vmem [thread:$0]  %s2, 16, %s375, [#allocation10]
        $region16: #{tpu_custom_call.1} parent=11 // pred_fallthru
          _
        // Predicated region
        $region17: #{tpu_custom_call.1} parent=11 // pred_check
          %p378 = pneg %p114
        $region18: #{tpu_custom_call.1} parent=11 // pred_check_branch
          %380 = sbr.rel (%p378) target = $region20
        $region19: #{tpu_custom_call.1} parent=11 // pred_region
          %s382 = ssub.s32 16, 16
          %383 = vsyncadd [#allocation10], %s382
          %s385 = sshll.u32 [#allocation11], 4
          %s386 = int_to_ptr.vmem [resolvable:$true] %s385
          %388 = dma.hbm_to_vmem [thread:$0]  %s3, 16, %s386, [#allocation10]
        $region20: #{tpu_custom_call.1} parent=11 // pred_fallthru
          _
        // Predicated region
        $region21: #{tpu_custom_call.1} parent=11 // pred_check
          %p389 = pneg %p135
        $region22: #{tpu_custom_call.1} parent=11 // pred_check_branch
          %391 = sbr.rel (%p389) target = $region24
        $region23: #{tpu_custom_call.1} parent=11 // pred_region
          %s393 = ssub.s32 128, 128
          %394 = vsyncadd [#allocation13], %s393
          %s395 = sshll.u32 [#allocation12], 4
          %s396 = int_to_ptr.vmem [resolvable:$true] %s395
          %401 = dma.hbm_to_vmem [thread:$0]  %s4, 128, %s396, [#allocation13], 64, 64, 4
        $region24: #{tpu_custom_call.1} parent=11 // pred_fallthru
          _
        // Predicated region
        $region25: #{tpu_custom_call.1} parent=11 // pred_check
          %p402 = pneg %p156
        $region26: #{tpu_custom_call.1} parent=11 // pred_check_branch
          %404 = sbr.rel (%p402) target = $region28
        $region27: #{tpu_custom_call.1} parent=11 // pred_region
          %s406 = ssub.s32 16, 16
          %407 = vsyncadd [#allocation13], %s406
          %s409 = sshll.u32 [#allocation14], 4
          %s410 = int_to_ptr.vmem [resolvable:$true] %s409
          %412 = dma.hbm_to_vmem [thread:$0]  %s5, 16, %s410, [#allocation13]
        $region28: #{tpu_custom_call.1} parent=11 // pred_fallthru
          _
        // Predicated region
        $region29: #{tpu_custom_call.1} parent=11 // pred_check
          %p413 = pneg %p177
        $region30: #{tpu_custom_call.1} parent=11 // pred_check_branch
          %415 = sbr.rel (%p413) target = $region32
        $region31: #{tpu_custom_call.1} parent=11 // pred_region
          %s417 = ssub.s32 16, 16
          %418 = vsyncadd [#allocation16], %s417
          %s420 = sshll.u32 [#allocation15], 4
          %s421 = int_to_ptr.vmem [resolvable:$true] %s420
          %423 = dma.hbm_to_vmem [thread:$0]  %s6, 16, %s421, [#allocation16]
        $region32: #{tpu_custom_call.1} parent=11 // pred_fallthru
          _
        // Predicated region
        $region33: #{tpu_custom_call.1} parent=11 // pred_check
          %p424 = pneg %p198
        $region34: #{tpu_custom_call.1} parent=11 // pred_check_branch
          %426 = sbr.rel (%p424) target = $region36
        $region35: #{tpu_custom_call.1} parent=11 // pred_region
          %s428 = ssub.s32 576, 576
          %429 = vsyncadd [#allocation16], %s428
          %s430 = sshll.u32 [#allocation17], 4
          %s431 = int_to_ptr.vmem [resolvable:$true] %s430
          %436 = dma.hbm_to_vmem [thread:$0]  %s7, 576, %s431, [#allocation16], 64, 64, 4
        $region36: #{tpu_custom_call.1} parent=11 // pred_fallthru
          _
        // Predicated region
        $region37: #{tpu_custom_call.1} parent=11 // pred_check
          %p437 = pneg %p219
        $region38: #{tpu_custom_call.1} parent=11 // pred_check_branch
          %439 = sbr.rel (%p437) target = $region40
        $region39: #{tpu_custom_call.1} parent=11 // pred_region
          %s441 = ssub.s32 16, 16
          %442 = vsyncadd [#allocation19], %s441
          %s444 = sshll.u32 [#allocation18], 4
          %s445 = int_to_ptr.vmem [resolvable:$true] %s444
          %447 = dma.hbm_to_vmem [thread:$0]  %s8, 16, %s445, [#allocation19]
        $region40: #{tpu_custom_call.1} parent=11 // pred_fallthru
          _
        // Predicated region
        $region41: #{tpu_custom_call.1} parent=11 // pred_check
          %p448 = pneg %p240
        $region42: #{tpu_custom_call.1} parent=11 // pred_check_branch
          %450 = sbr.rel (%p448) target = $region44
        $region43: #{tpu_custom_call.1} parent=11 // pred_region
          %s452 = ssub.s32 16, 16
          %453 = vsyncadd [#allocation19], %s452
          %s455 = sshll.u32 [#allocation20], 4
          %s456 = int_to_ptr.vmem [resolvable:$true] %s455
          %458 = dma.hbm_to_vmem [thread:$0]  %s9, 16, %s456, [#allocation19]
        $region44: #{tpu_custom_call.1} parent=11 // pred_fallthru
          _
        // Predicated region
        $region45: #{tpu_custom_call.1} parent=11 // pred_check
          %p459 = pneg %p261
        $region46: #{tpu_custom_call.1} parent=11 // pred_check_branch
          %461 = sbr.rel (%p459) target = $region48
        $region47: #{tpu_custom_call.1} parent=11 // pred_region
          %s463 = ssub.s32 64, 64
          %464 = vsyncadd [#allocation22], %s463
          %s466 = sshll.u32 [#allocation21], 4
          %s467 = int_to_ptr.vmem [resolvable:$true] %s466
          %469 = dma.hbm_to_vmem [thread:$0]  %s10, 64, %s467, [#allocation22]
        $region48: #{tpu_custom_call.1} parent=11 // pred_fallthru
          _
        // Predicated region
        $region49: #{tpu_custom_call.1} parent=11 // pred_check
          %p470 = pneg %p282
        $region50: #{tpu_custom_call.1} parent=11 // pred_check_branch
          %472 = sbr.rel (%p470) target = $region52
        $region51: #{tpu_custom_call.1} parent=11 // pred_region
          %s474 = ssub.s32 16, 16
          %475 = vsyncadd [#allocation22], %s474
          %s477 = sshll.u32 [#allocation23], 4
          %s478 = int_to_ptr.vmem [resolvable:$true] %s477
          %480 = dma.hbm_to_vmem [thread:$0]  %s11, 16, %s478, [#allocation22]
        $region52: #{tpu_custom_call.1} parent=11 // pred_fallthru
          _
        // Predicated region
        $region53: #{tpu_custom_call.1} parent=11 // pred_check
          %p481 = pneg %p303
        $region54: #{tpu_custom_call.1} parent=11 // pred_check_branch
          %483 = sbr.rel (%p481) target = $region56
        $region55: #{tpu_custom_call.1} parent=11 // pred_region
          %s485 = ssub.s32 16, 16
          %486 = vsyncadd [#allocation25], %s485
          %s488 = sshll.u32 [#allocation24], 4
          %s489 = int_to_ptr.vmem [resolvable:$true] %s488
          %491 = dma.hbm_to_vmem [thread:$0]  %s12, 16, %s489, [#allocation25]
        $region56: #{tpu_custom_call.1} parent=11 // pred_fallthru
          _
        // Predicated region
        $region57: #{tpu_custom_call.1} parent=11 // pred_check
          %p492 = pneg %p324
        $region58: #{tpu_custom_call.1} parent=11 // pred_check_branch
          %494 = sbr.rel (%p492) target = $region60
        $region59: #{tpu_custom_call.1} parent=11 // pred_region
          %s496 = ssub.s32 128, 128
          %497 = vsyncadd [#allocation25], %s496
          %s498 = sshll.u32 [#allocation26], 4
          %s499 = int_to_ptr.vmem [resolvable:$true] %s498
          %504 = dma.hbm_to_vmem [thread:$0]  %s13, 128, %s499, [#allocation25], 64, 64, 4
        $region60: #{tpu_custom_call.1} parent=11 // pred_fallthru
          _
      $region12: #{tpu_custom_call.1} parent=5 // pred_fallthru
        _
      %p505 = scmp.lt.s32.totalorder %s32, 4
      // Predicated region
      $region61: #{tpu_custom_call.1} parent=5 // pred_check
        %p506 = pneg %p505
      $region62: #{tpu_custom_call.1} parent=5 // pred_check_branch
        %508 = sbr.rel (%p506) target = $region64
      $region63: #{tpu_custom_call.1} parent=5 // pred_region
        // Predicated region
        $region65: #{tpu_custom_call.1} parent=63 // pred_check
          %p509 = pneg %p66
        $region66: #{tpu_custom_call.1} parent=63 // pred_check_branch
          %511 = sbr.rel (%p509) target = $region68
        $region67: #{tpu_custom_call.1} parent=63 // pred_region
          %s512 = sand.u32 %s56, 1
          %s513 = scalar_lea.sflag [#allocation7], %s512
          %s514 = sand.u32 %s56, 1
          %s515 = smul.addr %s514, 64
          %s516 = scalar_lea.vmem [#allocation6], %s515
          %s517 = smul.u32 8, %s40
          %s519 = ssub.s32 1024, 1024
          %520 = vsyncadd %s513, %s519
          %s521 = smul.addr %s517, 2
          %s522 = smul.addr %s39, 32
          %s523 = sadd.s32 %s521, %s522
          %s524 = smul.addr %s523, 64
          %s525 = scalar_lea.hbm %s0, %s524
          %s526 = sshll.u32 %s516, 4
          %s527 = int_to_ptr.vmem [resolvable:$true] %s526
          %532 = dma.hbm_to_vmem [thread:$0]  %s525, 1024, %s527, %s513, 64, 64, 4
        $region68: #{tpu_custom_call.1} parent=63 // pred_fallthru
          _
      $region64: #{tpu_custom_call.1} parent=5 // pred_fallthru
        _
      %p533 = scmp.le.s32.totalorder 1, %s32
      %p534 = scmp.lt.s32.totalorder %s32, 5
      %p535 = pnand %p533, %p534
      %p536 = pneg %p535
      // Predicated region
      $region69: #{tpu_custom_call.1} parent=5 // pred_check
        _
      $region70: #{tpu_custom_call.1} parent=5 // pred_check_branch
        %538 = sbr.rel (%p535) target = $region72
      $region71: #{tpu_custom_call.1} parent=5 // pred_region
        %s539 = ssub.s32 %s32, 1
        %s540 = sand.u32 %s59, 1
        %s541 = scalar_lea.sflag [#allocation7], %s540
        %s542 = sand.u32 %s59, 1
        %s543 = smul.addr %s542, 64
        %s544 = scalar_lea.vmem [#allocation6], %s543
        // Predicated region
        $region73: #{tpu_custom_call.1} parent=71 // pred_check
          %p545 = pneg %p72
        $region74: #{tpu_custom_call.1} parent=71 // pred_check_branch
          %547 = sbr.rel (%p545) target = $region76
        $region75: #{tpu_custom_call.1} parent=71 // pred_region
          %548 = dma.done %s541, 1024
        $region76: #{tpu_custom_call.1} parent=71 // pred_fallthru
          _
        // Predicated region
        $region77: #{tpu_custom_call.1} parent=71 // pred_check
          %p549 = pneg %p93
        $region78: #{tpu_custom_call.1} parent=71 // pred_check_branch
          %551 = sbr.rel (%p549) target = $region80
        $region79: #{tpu_custom_call.1} parent=71 // pred_region
          %552 = dma.done [#allocation10], 16
        $region80: #{tpu_custom_call.1} parent=71 // pred_fallthru
          _
        // Predicated region
        $region81: #{tpu_custom_call.1} parent=71 // pred_check
          %p553 = pneg %p114
        $region82: #{tpu_custom_call.1} parent=71 // pred_check_branch
          %555 = sbr.rel (%p553) target = $region84
        $region83: #{tpu_custom_call.1} parent=71 // pred_region
          %556 = dma.done [#allocation10], 16
        $region84: #{tpu_custom_call.1} parent=71 // pred_fallthru
          _
        // Predicated region
        $region85: #{tpu_custom_call.1} parent=71 // pred_check
          %p557 = pneg %p135
        $region86: #{tpu_custom_call.1} parent=71 // pred_check_branch
          %559 = sbr.rel (%p557) target = $region88
        $region87: #{tpu_custom_call.1} parent=71 // pred_region
          %560 = dma.done [#allocation13], 128
        $region88: #{tpu_custom_call.1} parent=71 // pred_fallthru
          _
        // Predicated region
        $region89: #{tpu_custom_call.1} parent=71 // pred_check
          %p561 = pneg %p156
        $region90: #{tpu_custom_call.1} parent=71 // pred_check_branch
          %563 = sbr.rel (%p561) target = $region92
        $region91: #{tpu_custom_call.1} parent=71 // pred_region
          %564 = dma.done [#allocation13], 16
        $region92: #{tpu_custom_call.1} parent=71 // pred_fallthru
          _
        // Predicated region
        $region93: #{tpu_custom_call.1} parent=71 // pred_check
          %p565 = pneg %p177
        $region94: #{tpu_custom_call.1} parent=71 // pred_check_branch
          %567 = sbr.rel (%p565) target = $region96
        $region95: #{tpu_custom_call.1} parent=71 // pred_region
          %568 = dma.done [#allocation16], 16
        $region96: #{tpu_custom_call.1} parent=71 // pred_fallthru
          _
        // Predicated region
        $region97: #{tpu_custom_call.1} parent=71 // pred_check
          %p569 = pneg %p198
        $region98: #{tpu_custom_call.1} parent=71 // pred_check_branch
          %571 = sbr.rel (%p569) target = $region100
        $region99: #{tpu_custom_call.1} parent=71 // pred_region
          %572 = dma.done [#allocation16], 576
        $region100: #{tpu_custom_call.1} parent=71 // pred_fallthru
          _
        // Predicated region
        $region101: #{tpu_custom_call.1} parent=71 // pred_check
          %p573 = pneg %p219
        $region102: #{tpu_custom_call.1} parent=71 // pred_check_branch
          %575 = sbr.rel (%p573) target = $region104
        $region103: #{tpu_custom_call.1} parent=71 // pred_region
          %576 = dma.done [#allocation19], 16
        $region104: #{tpu_custom_call.1} parent=71 // pred_fallthru
          _
        // Predicated region
        $region105: #{tpu_custom_call.1} parent=71 // pred_check
          %p577 = pneg %p240
        $region106: #{tpu_custom_call.1} parent=71 // pred_check_branch
          %579 = sbr.rel (%p577) target = $region108
        $region107: #{tpu_custom_call.1} parent=71 // pred_region
          %580 = dma.done [#allocation19], 16
        $region108: #{tpu_custom_call.1} parent=71 // pred_fallthru
          _
        // Predicated region
        $region109: #{tpu_custom_call.1} parent=71 // pred_check
          %p581 = pneg %p261
        $region110: #{tpu_custom_call.1} parent=71 // pred_check_branch
          %583 = sbr.rel (%p581) target = $region112
        $region111: #{tpu_custom_call.1} parent=71 // pred_region
          %584 = dma.done [#allocation22], 64
        $region112: #{tpu_custom_call.1} parent=71 // pred_fallthru
          _
        // Predicated region
        $region113: #{tpu_custom_call.1} parent=71 // pred_check
          %p585 = pneg %p282
        $region114: #{tpu_custom_call.1} parent=71 // pred_check_branch
          %587 = sbr.rel (%p585) target = $region116
        $region115: #{tpu_custom_call.1} parent=71 // pred_region
          %588 = dma.done [#allocation22], 16
        $region116: #{tpu_custom_call.1} parent=71 // pred_fallthru
          _
        // Predicated region
        $region117: #{tpu_custom_call.1} parent=71 // pred_check
          %p589 = pneg %p303
        $region118: #{tpu_custom_call.1} parent=71 // pred_check_branch
          %591 = sbr.rel (%p589) target = $region120
        $region119: #{tpu_custom_call.1} parent=71 // pred_region
          %592 = dma.done [#allocation25], 16
        $region120: #{tpu_custom_call.1} parent=71 // pred_fallthru
          _
        // Predicated region
        $region121: #{tpu_custom_call.1} parent=71 // pred_check
          %p593 = pneg %p324
        $region122: #{tpu_custom_call.1} parent=71 // pred_check_branch
          %595 = sbr.rel (%p593) target = $region124
        $region123: #{tpu_custom_call.1} parent=71 // pred_region
          %596 = dma.done [#allocation25], 128
        $region124: #{tpu_custom_call.1} parent=71 // pred_fallthru
          _
        %s597 = sand.u32 %s59, 1
        %s598 = scalar_lea.sflag [#allocation7], %s597
        %s599 = sand.u32 %s59, 1
        %s600 = smul.addr %s599, 64
        %s601 = scalar_lea.vmem [#allocation6], %s600
        %p602 = pneg %p72
        %p603 = pneg %p69
        %p604 = pneg %p93
        %p605 = pneg %p90
        %p606 = pneg %p114
        %p607 = pneg %p111
        %p608 = pneg %p135
        %p609 = pneg %p132
        %p610 = pneg %p156
        %p611 = pneg %p153
        %p612 = pneg %p177
        %p613 = pneg %p174
        %p614 = pneg %p198
        %p615 = pneg %p195
        %p616 = pneg %p219
        %p617 = pneg %p216
        %p618 = pneg %p240
        %p619 = pneg %p237
        %p620 = pneg %p261
        %p621 = pneg %p258
        %p622 = pneg %p282
        %p623 = pneg %p279
        %p624 = pneg %p303
        %p625 = pneg %p300
        %p626 = pneg %p324
        %p627 = pneg %p321
        %p628 = pneg %p352
        %p629 = pneg %p349
        %s630 = sand.u32 %s339, 1
        %s631 = scalar_lea.sflag [#allocation8], %s630
        %s632 = sand.u32 %s339, 1
        %s633 = smul.addr %s632, 16
        %s634 = scalar_lea.vmem [#allocation27], %s633
        %s635 = smul.u32 8, %s42
        %s636 = smul.u32 4, %s42
        %s638 = smul.u32 %s42, 8
        %s639 = ssub.s32 %s638, 1
        %p640 = scmp.gt.s32.totalorder %s639, 0
        %s641 = scalar_select %p640, %s639, 0
        %s642 = sadd.s32 %s638, 8
        %p643 = scmp.lt.s32.totalorder %s642, 15
        %s644 = scalar_select %p643, %s642, 15
        %s645 = smul.u32 %s641, 2
        %s646 = smul.u32 %s41, 32
        %s647 = sadd.s32 %s645, %s646
        %s648 = smul.addr %s647, 64
        %s649 = scalar_lea.hbm %s1, %s648
        // Predicated region
        $region125: #{tpu_custom_call.1} parent=71 // pred_check
          _
        $region126: #{tpu_custom_call.1} parent=71 // pred_check_branch
          %651 = sbr.rel target = $region128
        $region127: #{tpu_custom_call.1} parent=71 // pred_region
          %652 = sst [smem:[#allocation30]] [#allocation29]
          %653 = sst [smem:[#allocation31]] [#allocation28]
        $region128: #{tpu_custom_call.1} parent=71 // pred_fallthru
          _
        %655 = shalt.err (0)
        %s657 = sshll.u32 [#allocation2], 4
        %s658 = int_to_ptr.vmem [resolvable:$true] %s657
        %660 = dma.hbm_to_vmem [thread:$0]  %s649, 128, %s658, [#allocation3]
        %s661 = smul.u32 %s644, 2
        %s662 = sadd.s32 %s661, %s646
        %s663 = smul.addr %s662, 64
        %s664 = scalar_lea.hbm %s1, %s663
        %s665 = scalar_lea.vmem [#allocation2], 8
        %s666 = scalar_lea.sflag [#allocation3], 1
        // Predicated region
        $region129: #{tpu_custom_call.1} parent=71 // pred_check
          _
        $region130: #{tpu_custom_call.1} parent=71 // pred_check_branch
          %668 = sbr.rel target = $region132
        $region131: #{tpu_custom_call.1} parent=71 // pred_region
          %669 = sst [smem:[#allocation30]] [#allocation33]
          %670 = sst [smem:[#allocation31]] [#allocation32]
        $region132: #{tpu_custom_call.1} parent=71 // pred_fallthru
          _
        %672 = shalt.err (0)
        %s674 = sshll.u32 %s665, 4
        %s675 = int_to_ptr.vmem [resolvable:$true] %s674
        %677 = dma.hbm_to_vmem [thread:$0]  %s664, 128, %s675, %s666
        %v678 = vld [vmem:[%s544] sm:$0xf]
        %v679 = vld [vmem:[%s544 + $0x4] sm:$0xf]
        %v680 = vld [vmem:[%s544 + $0x8] sm:$0xf]
        %v681 = vld [vmem:[%s544 + $0xc] sm:$0xf]
        %v682 = vld [vmem:[%s544 + $0x10] sm:$0xf]
        %v683 = vld [vmem:[%s544 + $0x14] sm:$0xf]
        %v684 = vld [vmem:[%s544 + $0x18] sm:$0xf]
        %v685 = vld [vmem:[%s544 + $0x1c] sm:$0xf]
        %v686 = vld [vmem:[%s544 + $0x20] sm:$0xf]
        %v687 = vld [vmem:[%s544 + $0x24] sm:$0xf]
        %v688 = vld [vmem:[%s544 + $0x28] sm:$0xf]
        %v689 = vld [vmem:[%s544 + $0x2c] sm:$0xf]
        %v690 = vld [vmem:[%s544 + $0x30] sm:$0xf]
        %v691 = vld [vmem:[%s544 + $0x34] sm:$0xf]
        %v692 = vld [vmem:[%s544 + $0x38] sm:$0xf]
        %v693 = vld [vmem:[%s544 + $0x3c] sm:$0xf]
        %v694 = vunpack.c.l.bf16 %v678
        %v695 = vunpack.c.l.bf16 %v679
        %v696 = vunpack.c.l.bf16 %v680
        %v697 = vunpack.c.l.bf16 %v681
        %v698 = vunpack.c.l.bf16 %v682
        %v699 = vunpack.c.l.bf16 %v683
        %v700 = vunpack.c.l.bf16 %v684
        %v701 = vunpack.c.l.bf16 %v685
        %v702 = vunpack.c.l.bf16 %v686
        %v703 = vunpack.c.l.bf16 %v687
        %v704 = vunpack.c.l.bf16 %v688
        %v705 = vunpack.c.l.bf16 %v689
        %v706 = vunpack.c.l.bf16 %v690
        %v707 = vunpack.c.l.bf16 %v691
        %v708 = vunpack.c.l.bf16 %v692
        %v709 = vunpack.c.l.bf16 %v693
        %v710 = vld [vmem:[#allocation9] sm:$0x1]
        %v712 = vlaneseq
        %v713 = vshrl.u32 %v712, 7
        %v714 = vsub.s32 0, %v713
        %v715 = vrot.slane %v710, %v714
        %v717 = vmul.f32 %v694, %v715
        %v718 = vmul.f32 %v695, %v715
        %v719 = vmul.f32 %v696, %v715
        %v720 = vmul.f32 %v697, %v715
        %v721 = vmul.f32 %v698, %v715
        %v722 = vmul.f32 %v699, %v715
        %v723 = vmul.f32 %v700, %v715
        %v724 = vmul.f32 %v701, %v715
        %v725 = vmul.f32 %v702, %v715
        %v726 = vmul.f32 %v703, %v715
        %v727 = vmul.f32 %v704, %v715
        %v728 = vmul.f32 %v705, %v715
        %v729 = vmul.f32 %v706, %v715
        %v730 = vmul.f32 %v707, %v715
        %v731 = vmul.f32 %v708, %v715
        %v732 = vmul.f32 %v709, %v715
        %v733 = vld [vmem:[#allocation11] sm:$0x1]
        %v735 = vlaneseq
        %v736 = vshrl.u32 %v735, 7
        %v737 = vsub.s32 0, %v736
        %v738 = vrot.slane %v733, %v737
        %v740 = vadd.f32 %v717, %v738
        %v741 = vadd.f32 %v718, %v738
        %v742 = vadd.f32 %v719, %v738
        %v743 = vadd.f32 %v720, %v738
        %v744 = vadd.f32 %v721, %v738
        %v745 = vadd.f32 %v722, %v738
        %v746 = vadd.f32 %v723, %v738
        %v747 = vadd.f32 %v724, %v738
        %v748 = vadd.f32 %v725, %v738
        %v749 = vadd.f32 %v726, %v738
        %v750 = vadd.f32 %v727, %v738
        %v751 = vadd.f32 %v728, %v738
        %v752 = vadd.f32 %v729, %v738
        %v753 = vadd.f32 %v730, %v738
        %v754 = vadd.f32 %v731, %v738
        %v755 = vadd.f32 %v732, %v738
        %v756 = vmax.f32 %v740, 0.0
        %v757 = vmax.f32 %v741, 0.0
        %v758 = vmax.f32 %v742, 0.0
        %v759 = vmax.f32 %v743, 0.0
        %v760 = vmax.f32 %v744, 0.0
        %v761 = vmax.f32 %v745, 0.0
        %v762 = vmax.f32 %v746, 0.0
        %v763 = vmax.f32 %v747, 0.0
        %v764 = vmax.f32 %v748, 0.0
        %v765 = vmax.f32 %v749, 0.0
        %v766 = vmax.f32 %v750, 0.0
        %v767 = vmax.f32 %v751, 0.0
        %v768 = vmax.f32 %v752, 0.0
        %v769 = vmax.f32 %v753, 0.0
        %v770 = vmax.f32 %v754, 0.0
        %v771 = vmax.f32 %v755, 0.0
        %v772 = vpack.c.bf16 %v757, %v756
        %v773 = vpack.c.bf16 %v759, %v758
        %v774 = vpack.c.bf16 %v761, %v760
        %v775 = vpack.c.bf16 %v763, %v762
        %v776 = vpack.c.bf16 %v765, %v764
        %v777 = vpack.c.bf16 %v767, %v766
        %v778 = vpack.c.bf16 %v769, %v768
        %v779 = vpack.c.bf16 %v771, %v770
        %v780 = vld [vmem:[#allocation12] sm:$0xf]
        %v781 = vld [vmem:[#allocation12 + $0x4] sm:$0xf]
        %v784 = vunpack.c.l.b16 %v780
        %v785 = vunpack.c.l.b16 %v781
        %v786 = vpack.c.b16 %v785, %v784
        %vm788 = vcmask 130048
        %v790 = vsel %vm788, %v772, 0
        %v793 = vsel %vm788, %v773, 0
        %v796 = vsel %vm788, %v774, 0
        %v799 = vsel %vm788, %v775, 0
        %v802 = vsel %vm788, %v776, 0
        %v805 = vsel %vm788, %v777, 0
        %v808 = vsel %vm788, %v778, 0
        %v811 = vsel %vm788, %v779, 0
        %813 = vmatprep.subr.bf16.mxu0 0
        %814 = vmatpush1.bf16.msra.mxu0 %v786
        %815 = vmatprep.subr.bf16.mxu0 0
        %816 = vmatpush1.bf16.msra.mxu0 0
        %817 = vmatprep.subr.bf16.mxu0 0
        %818 = vmatpush1.bf16.msra.mxu0 0
        %819 = vmatprep.subr.bf16.mxu0 0
        %820 = vmatpush1.bf16.msra.mxu0 0
        %821 = vmatprep.subr.bf16.mxu0 0
        %822 = vmatpush1.bf16.msra.mxu0 0
        %823 = vmatprep.subr.bf16.mxu0 0
        %824 = vmatpush1.bf16.msra.mxu0 0
        %825 = vmatprep.subr.bf16.mxu0 0
        %826 = vmatpush1.bf16.msra.mxu0 0
        %827 = vmatprep.subr.bf16.mxu0 0
        %828 = vmatpush1.bf16.msra.mxu0 0
        %829 = vmatprep.subr.bf16.mxu0 0
        %830 = vmatpush1.bf16.msra.mxu0 0
        %831 = vmatprep.subr.bf16.mxu0 0
        %832 = vmatpush1.bf16.msra.mxu0 0
        %833 = vmatprep.subr.bf16.mxu0 0
        %834 = vmatpush1.bf16.msra.mxu0 0
        %835 = vmatprep.subr.bf16.mxu0 0
        %836 = vmatpush1.bf16.msra.mxu0 0
        %837 = vmatprep.subr.bf16.mxu0 0
        %838 = vmatpush1.bf16.msra.mxu0 0
        %839 = vmatprep.subr.bf16.mxu0 0
        %840 = vmatpush1.bf16.msra.mxu0 0
        %841 = vmatprep.subr.bf16.mxu0 0
        %842 = vmatpush1.bf16.msra.mxu0 0
        %843 = vmatprep.subr.bf16.mxu0 0
        %844 = vmatpush1.bf16.msra.mxu0 0
        %845 = vmatprep.mubr.bf16.mxu0 0
        %846 = vmatmul.mubr.bf16.gmra.mrb[0].mxu0 %v790
        %v847 = vpop.f32.mrb[0].mxu0
        %v848 = vadd.f32 0.0, %v847
        %v849 = vpop.f32.mrb[0].mxu0
        %v850 = vpop.f32.mrb[0].mxu0
        %v851 = vadd.f32 0.0, %v850
        %v852 = vpop.f32.mrb[0].mxu0
        %853 = vmatprep.mubr.bf16.mxu0 0
        %854 = vmatmul.mubr.bf16.gmra.mrb[0].mxu0 %v793
        %v855 = vpop.f32.mrb[0].mxu0
        %v856 = vadd.f32 0.0, %v855
        %v857 = vpop.f32.mrb[0].mxu0
        %v858 = vpop.f32.mrb[0].mxu0
        %v859 = vadd.f32 0.0, %v858
        %v860 = vpop.f32.mrb[0].mxu0
        %861 = vmatprep.mubr.bf16.mxu0 0
        %862 = vmatmul.mubr.bf16.gmra.mrb[0].mxu0 %v796
        %v863 = vpop.f32.mrb[0].mxu0
        %v864 = vadd.f32 0.0, %v863
        %v865 = vpop.f32.mrb[0].mxu0
        %v866 = vpop.f32.mrb[0].mxu0
        %v867 = vadd.f32 0.0, %v866
        %v868 = vpop.f32.mrb[0].mxu0
        %869 = vmatprep.mubr.bf16.mxu0 0
        %870 = vmatmul.mubr.bf16.gmra.mrb[0].mxu0 %v799
        %v871 = vpop.f32.mrb[0].mxu0
        %v872 = vadd.f32 0.0, %v871
        %v873 = vpop.f32.mrb[0].mxu0
        %v874 = vpop.f32.mrb[0].mxu0
        %v875 = vadd.f32 0.0, %v874
        %v876 = vpop.f32.mrb[0].mxu0
        %877 = vmatprep.mubr.bf16.mxu0 0
        %878 = vmatmul.mubr.bf16.gmra.mrb[0].mxu0 %v802
        %v879 = vpop.f32.mrb[0].mxu0
        %v880 = vadd.f32 0.0, %v879
        %v881 = vpop.f32.mrb[0].mxu0
        %v882 = vpop.f32.mrb[0].mxu0
        %v883 = vadd.f32 0.0, %v882
        %v884 = vpop.f32.mrb[0].mxu0
        %885 = vmatprep.mubr.bf16.mxu0 0
        %886 = vmatmul.mubr.bf16.gmra.mrb[0].mxu0 %v805
        %v887 = vpop.f32.mrb[0].mxu0
        %v888 = vadd.f32 0.0, %v887
        %v889 = vpop.f32.mrb[0].mxu0
        %v890 = vpop.f32.mrb[0].mxu0
        %v891 = vadd.f32 0.0, %v890
        %v892 = vpop.f32.mrb[0].mxu0
        %893 = vmatprep.mubr.bf16.mxu0 0
        %894 = vmatmul.mubr.bf16.gmra.mrb[0].mxu0 %v808
        %v895 = vpop.f32.mrb[0].mxu0
        %v896 = vadd.f32 0.0, %v895
        %v897 = vpop.f32.mrb[0].mxu0
        %v898 = vpop.f32.mrb[0].mxu0
        %v899 = vadd.f32 0.0, %v898
        %v900 = vpop.f32.mrb[0].mxu0
        %901 = vmatprep.mubr.bf16.mxu0 0
        %902 = vmatmul.mubr.bf16.gmra.mrb[0].mxu0 %v811
        %v903 = vpop.f32.mrb[0].mxu0
        %v904 = vadd.f32 0.0, %v903
        %v905 = vpop.f32.mrb[0].mxu0
        %v906 = vpop.f32.mrb[0].mxu0
        %v907 = vadd.f32 0.0, %v906
        %v908 = vpop.f32.mrb[0].mxu0
        %909 = vdwg.mxu0
        %v910 = vld [vmem:[#allocation14] sm:$0x1]
        %v912 = vlaneseq
        %v913 = vshrl.u32 %v912, 7
        %v914 = vsub.s32 0, %v913
        %v915 = vrot.slane %v910, %v914
        %v917 = vmul.f32 %v848, %v915
        %v918 = vmul.f32 %v851, %v915
        %v919 = vmul.f32 %v856, %v915
        %v920 = vmul.f32 %v859, %v915
        %v921 = vmul.f32 %v864, %v915
        %v922 = vmul.f32 %v867, %v915
        %v923 = vmul.f32 %v872, %v915
        %v924 = vmul.f32 %v875, %v915
        %v925 = vmul.f32 %v880, %v915
        %v926 = vmul.f32 %v883, %v915
        %v927 = vmul.f32 %v888, %v915
        %v928 = vmul.f32 %v891, %v915
        %v929 = vmul.f32 %v896, %v915
        %v930 = vmul.f32 %v899, %v915
        %v931 = vmul.f32 %v904, %v915
        %v932 = vmul.f32 %v907, %v915
        %v933 = vld [vmem:[#allocation15] sm:$0x1]
        %v935 = vlaneseq
        %v936 = vshrl.u32 %v935, 7
        %v937 = vsub.s32 0, %v936
        %v938 = vrot.slane %v933, %v937
        %v940 = vadd.f32 %v917, %v938
        %v941 = vadd.f32 %v918, %v938
        %v942 = vadd.f32 %v919, %v938
        %v943 = vadd.f32 %v920, %v938
        %v944 = vadd.f32 %v921, %v938
        %v945 = vadd.f32 %v922, %v938
        %v946 = vadd.f32 %v923, %v938
        %v947 = vadd.f32 %v924, %v938
        %v948 = vadd.f32 %v925, %v938
        %v949 = vadd.f32 %v926, %v938
        %v950 = vadd.f32 %v927, %v938
        %v951 = vadd.f32 %v928, %v938
        %v952 = vadd.f32 %v929, %v938
        %v953 = vadd.f32 %v930, %v938
        %v954 = vadd.f32 %v931, %v938
        %v955 = vadd.f32 %v932, %v938
        %v956 = vmax.f32 %v940, 0.0
        %v957 = vmax.f32 %v941, 0.0
        %v958 = vmax.f32 %v942, 0.0
        %v959 = vmax.f32 %v943, 0.0
        %v960 = vmax.f32 %v944, 0.0
        %v961 = vmax.f32 %v945, 0.0
        %v962 = vmax.f32 %v946, 0.0
        %v963 = vmax.f32 %v947, 0.0
        %v964 = vmax.f32 %v948, 0.0
        %v965 = vmax.f32 %v949, 0.0
        %v966 = vmax.f32 %v950, 0.0
        %v967 = vmax.f32 %v951, 0.0
        %v968 = vmax.f32 %v952, 0.0
        %v969 = vmax.f32 %v953, 0.0
        %v970 = vmax.f32 %v954, 0.0
        %v971 = vmax.f32 %v955, 0.0
        %s972 = smul.u32 4, 1
        %s973 = smul.u32 %s972, 2
        %s974 = smul.u32 %s973, 1
        %s975 = sshll.u32 %s974, 4
        %976 = dma.done [#allocation3], %s975
        %s977 = sshll.u32 %s974, 4
        %978 = dma.done %s666, %s977
        %v979 = vld [vmem:[#allocation2] sm:$0xff]
        %v980 = vld [vmem:[#allocation2 + $0x8] sm:$0xff]
        %v981 = vunpack.c.l.bf16 %v979
        %v982 = vunpack.c.h.bf16 %v979
        %v983 = vunpack.c.l.bf16 %v980
        %v984 = vunpack.c.h.bf16 %v980
        %v985 = vld [vmem:[#allocation9] sm:$0x1]
        %v987 = vlaneseq
        %v988 = vshrl.u32 %v987, 7
        %v989 = vsub.s32 0, %v988
        %v990 = vrot.slane %v985, %v989
        %v992 = vmul.f32 %v981, %v990
        %v993 = vmul.f32 %v982, %v990
        %v994 = vmul.f32 %v983, %v990
        %v995 = vmul.f32 %v984, %v990
        %v996 = vld [vmem:[#allocation11] sm:$0x1]
        %v998 = vlaneseq
        %v999 = vshrl.u32 %v998, 7
        %v1000 = vsub.s32 0, %v999
        %v1001 = vrot.slane %v996, %v1000
        %v1003 = vadd.f32 %v992, %v1001
        %v1004 = vadd.f32 %v993, %v1001
        %v1005 = vadd.f32 %v994, %v1001
        %v1006 = vadd.f32 %v995, %v1001
        %v1007 = vmax.f32 %v1003, 0.0
        %v1008 = vmax.f32 %v1004, 0.0
        %v1009 = vmax.f32 %v1005, 0.0
        %v1010 = vmax.f32 %v1006, 0.0
        %v1011 = vpack.c.bf16 %v1008, %v1007
        %v1012 = vpack.c.bf16 %v1010, %v1009
        %v1013 = vld [vmem:[#allocation12] sm:$0xf]
        %v1014 = vld [vmem:[#allocation12 + $0x4] sm:$0xf]
        %v1017 = vunpack.c.l.b16 %v1013
        %v1018 = vunpack.c.l.b16 %v1014
        %v1019 = vpack.c.b16 %v1018, %v1017
        %v1022 = vsel %vm788, %v1011, 0
        %v1025 = vsel %vm788, %v1012, 0
        %1027 = vmatprep.subr.bf16.mxu0 0
        %1028 = vmatpush1.bf16.msra.mxu0 %v1019
        %1029 = vmatprep.subr.bf16.mxu0 0
        %1030 = vmatpush1.bf16.msra.mxu0 0
        %1031 = vmatprep.subr.bf16.mxu0 0
        %1032 = vmatpush1.bf16.msra.mxu0 0
        %1033 = vmatprep.subr.bf16.mxu0 0
        %1034 = vmatpush1.bf16.msra.mxu0 0
        %1035 = vmatprep.subr.bf16.mxu0 0
        %1036 = vmatpush1.bf16.msra.mxu0 0
        %1037 = vmatprep.subr.bf16.mxu0 0
        %1038 = vmatpush1.bf16.msra.mxu0 0
        %1039 = vmatprep.subr.bf16.mxu0 0
        %1040 = vmatpush1.bf16.msra.mxu0 0
        %1041 = vmatprep.subr.bf16.mxu0 0
        %1042 = vmatpush1.bf16.msra.mxu0 0
        %1043 = vmatprep.subr.bf16.mxu0 0
        %1044 = vmatpush1.bf16.msra.mxu0 0
        %1045 = vmatprep.subr.bf16.mxu0 0
        %1046 = vmatpush1.bf16.msra.mxu0 0
        %1047 = vmatprep.subr.bf16.mxu0 0
        %1048 = vmatpush1.bf16.msra.mxu0 0
        %1049 = vmatprep.subr.bf16.mxu0 0
        %1050 = vmatpush1.bf16.msra.mxu0 0
        %1051 = vmatprep.subr.bf16.mxu0 0
        %1052 = vmatpush1.bf16.msra.mxu0 0
        %1053 = vmatprep.subr.bf16.mxu0 0
        %1054 = vmatpush1.bf16.msra.mxu0 0
        %1055 = vmatprep.subr.bf16.mxu0 0
        %1056 = vmatpush1.bf16.msra.mxu0 0
        %1057 = vmatprep.subr.bf16.mxu0 0
        %1058 = vmatpush1.bf16.msra.mxu0 0
        %1059 = vmatprep.mubr.bf16.mxu0 0
        %1060 = vmatmul.mubr.bf16.gmra.mrb[0].mxu0 %v1022
        %v1061 = vpop.f32.mrb[0].mxu0
        %v1062 = vadd.f32 0.0, %v1061
        %v1063 = vpop.f32.mrb[0].mxu0
        %v1064 = vpop.f32.mrb[0].mxu0
        %v1065 = vadd.f32 0.0, %v1064
        %v1066 = vpop.f32.mrb[0].mxu0
        %1067 = vmatprep.mubr.bf16.mxu0 0
        %1068 = vmatmul.mubr.bf16.gmra.mrb[0].mxu0 %v1025
        %v1069 = vpop.f32.mrb[0].mxu0
        %v1070 = vpop.f32.mrb[0].mxu0
        %v1071 = vpop.f32.mrb[0].mxu0
        %v1072 = vpop.f32.mrb[0].mxu0
        %1073 = vdwg.mxu0
        %v1074 = vld [vmem:[#allocation14] sm:$0x1]
        %v1076 = vlaneseq
        %v1077 = vshrl.u32 %v1076, 7
        %v1078 = vsub.s32 0, %v1077
        %v1079 = vrot.slane %v1074, %v1078
        %v1081 = vmul.f32 %v1062, %v1079
        %v1082 = vmul.f32 %v1065, %v1079
        %v1083 = vld [vmem:[#allocation15] sm:$0x1]
        %v1085 = vlaneseq
        %v1086 = vshrl.u32 %v1085, 7
        %v1087 = vsub.s32 0, %v1086
        %v1088 = vrot.slane %v1083, %v1087
        %v1090 = vadd.f32 %v1081, %v1088
        %v1091 = vadd.f32 %v1082, %v1088
        %v1092 = vmax.f32 %v1090, 0.0
        %v1093 = vmax.f32 %v1091, 0.0
        %p1094 = scmp.gt.s32.totalorder %s42, 0
        %s1095 = scalar_select %p1094, 1, 0
        %s1096 = scvt.s32.f32 %s1095
        %v1097 = vstv %s1096
        %v1098 = vmul.f32 %v1092, %v1097
        %v1099 = vmul.f32 %v1093, %v1097
        %v1100 = vlaneseq
        %v1101 = vshrl.u32 %v1100, 7
        %v1102 = vadd.s32 %v1101, 8
        %vm1103 = vcmp.ge.s32.totalorder %v1101, 1
        %vm1104 = vcmp.ge.s32.totalorder %v1102, 1
        %v1105 = vrot.slane %v1098, 7
        %v1106 = vrot.slane %v956, 7
        %v1107 = vrot.slane %v958, 7
        %v1108 = vrot.slane %v960, 7
        %v1109 = vrot.slane %v962, 7
        %v1110 = vrot.slane %v964, 7
        %v1111 = vrot.slane %v966, 7
        %v1112 = vrot.slane %v968, 7
        %v1113 = vrot.slane %v970, 7
        %v1114 = vrot.slane %v1099, 7
        %v1115 = vrot.slane %v957, 7
        %v1116 = vrot.slane %v959, 7
        %v1117 = vrot.slane %v961, 7
        %v1118 = vrot.slane %v963, 7
        %v1119 = vrot.slane %v965, 7
        %v1120 = vrot.slane %v967, 7
        %v1121 = vrot.slane %v969, 7
        %v1122 = vrot.slane %v971, 7
        %vm1123 = vcmp.lt.s32.totalorder %v1101, 1
        %v1124 = vsel %vm1123, %v1105, %v1114
        %v1125 = vsel %vm1123, %v1106, %v1115
        %v1126 = vsel %vm1123, %v1107, %v1116
        %v1127 = vsel %vm1123, %v1108, %v1117
        %v1128 = vsel %vm1123, %v1109, %v1118
        %v1129 = vsel %vm1123, %v1110, %v1119
        %v1130 = vsel %vm1123, %v1111, %v1120
        %v1131 = vsel %vm1123, %v1112, %v1121
        %v1132 = vsel %vm1123, %v1113, %v1122
        %v1133 = vsel %vm1123, %v1114, %v1105
        %v1134 = vsel %vm1123, %v1115, %v1106
        %v1135 = vsel %vm1123, %v1116, %v1107
        %v1136 = vsel %vm1123, %v1117, %v1108
        %v1137 = vsel %vm1123, %v1118, %v1109
        %v1138 = vsel %vm1123, %v1119, %v1110
        %v1139 = vsel %vm1123, %v1120, %v1111
        %v1140 = vsel %vm1123, %v1121, %v1112
        %v1141 = vsel %vm1123, %v1122, %v1113
        %v1142 = vsel %vm1103, 1, 0
        %v1143 = vsel %vm1104, 1, 0
        %vm1144 = vcmp.eq.s32.totalorder %v1142, 1
        %vm1145 = vcmp.eq.s32.totalorder %v1143, 1
        %v1146 = vsel %vm1144, %v1133, 0.0
        %v1147 = vsel %vm1145, %v1124, 0.0
        %v1148 = vsel %vm1144, %v1134, 0.0
        %v1149 = vsel %vm1145, %v1125, 0.0
        %v1150 = vsel %vm1144, %v1135, 0.0
        %v1151 = vsel %vm1145, %v1126, 0.0
        %v1152 = vsel %vm1144, %v1136, 0.0
        %v1153 = vsel %vm1145, %v1127, 0.0
        %v1154 = vsel %vm1144, %v1137, 0.0
        %v1155 = vsel %vm1145, %v1128, 0.0
        %v1156 = vsel %vm1144, %v1138, 0.0
        %v1157 = vsel %vm1145, %v1129, 0.0
        %v1158 = vsel %vm1144, %v1139, 0.0
        %v1159 = vsel %vm1145, %v1130, 0.0
        %v1160 = vsel %vm1144, %v1140, 0.0
        %v1161 = vsel %vm1145, %v1131, 0.0
        %v1162 = vsel %vm1144, %v1141, 0.0
        %v1163 = vsel %vm1145, %v1132, 0.0
        %vm1164 = vcmp.le.s32.totalorder %v1101, 14
        %vm1165 = vcmp.le.s32.totalorder %v1102, 14
        %v1166 = vrot.slane %v1098, 1
        %v1167 = vrot.slane %v956, 1
        %v1168 = vrot.slane %v958, 1
        %v1169 = vrot.slane %v960, 1
        %v1170 = vrot.slane %v962, 1
        %v1171 = vrot.slane %v964, 1
        %v1172 = vrot.slane %v966, 1
        %v1173 = vrot.slane %v968, 1
        %v1174 = vrot.slane %v970, 1
        %v1175 = vrot.slane %v1099, 1
        %v1176 = vrot.slane %v957, 1
        %v1177 = vrot.slane %v959, 1
        %v1178 = vrot.slane %v961, 1
        %v1179 = vrot.slane %v963, 1
        %v1180 = vrot.slane %v965, 1
        %v1181 = vrot.slane %v967, 1
        %v1182 = vrot.slane %v969, 1
        %v1183 = vrot.slane %v971, 1
        %vm1184 = vcmp.lt.s32.totalorder %v1101, 7
        %v1185 = vsel %vm1184, %v1166, %v1175
        %v1186 = vsel %vm1184, %v1167, %v1176
        %v1187 = vsel %vm1184, %v1168, %v1177
        %v1188 = vsel %vm1184, %v1169, %v1178
        %v1189 = vsel %vm1184, %v1170, %v1179
        %v1190 = vsel %vm1184, %v1171, %v1180
        %v1191 = vsel %vm1184, %v1172, %v1181
        %v1192 = vsel %vm1184, %v1173, %v1182
        %v1193 = vsel %vm1184, %v1174, %v1183
        %v1194 = vsel %vm1184, %v1175, %v1166
        %v1195 = vsel %vm1184, %v1176, %v1167
        %v1196 = vsel %vm1184, %v1177, %v1168
        %v1197 = vsel %vm1184, %v1178, %v1169
        %v1198 = vsel %vm1184, %v1179, %v1170
        %v1199 = vsel %vm1184, %v1180, %v1171
        %v1200 = vsel %vm1184, %v1181, %v1172
        %v1201 = vsel %vm1184, %v1182, %v1173
        %v1202 = vsel %vm1184, %v1183, %v1174
        %v1203 = vsel %vm1164, 1, 0
        %v1204 = vsel %vm1165, 1, 0
        %vm1205 = vcmp.eq.s32.totalorder %v1203, 1
        %vm1206 = vcmp.eq.s32.totalorder %v1204, 1
        %v1207 = vsel %vm1205, %v1185, 0.0
        %v1208 = vsel %vm1206, %v1194, 0.0
        %v1209 = vsel %vm1205, %v1186, 0.0
        %v1210 = vsel %vm1206, %v1195, 0.0
        %v1211 = vsel %vm1205, %v1187, 0.0
        %v1212 = vsel %vm1206, %v1196, 0.0
        %v1213 = vsel %vm1205, %v1188, 0.0
        %v1214 = vsel %vm1206, %v1197, 0.0
        %v1215 = vsel %vm1205, %v1189, 0.0
        %v1216 = vsel %vm1206, %v1198, 0.0
        %v1217 = vsel %vm1205, %v1190, 0.0
        %v1218 = vsel %vm1206, %v1199, 0.0
        %v1219 = vsel %vm1205, %v1191, 0.0
        %v1220 = vsel %vm1206, %v1200, 0.0
        %v1221 = vsel %vm1205, %v1192, 0.0
        %v1222 = vsel %vm1206, %v1201, 0.0
        %v1223 = vsel %vm1205, %v1193, 0.0
        %v1224 = vsel %vm1206, %v1202, 0.0
        %v1225 = vpack.c.bf16 %v1147, %v1146
        %v1226 = vpack.c.bf16 %v1149, %v1148
        %v1227 = vpack.c.bf16 %v1151, %v1150
        %v1228 = vpack.c.bf16 %v1153, %v1152
        %v1229 = vpack.c.bf16 %v1155, %v1154
        %v1230 = vpack.c.bf16 %v1157, %v1156
        %v1231 = vpack.c.bf16 %v1159, %v1158
        %v1232 = vpack.c.bf16 %v1161, %v1160
        %v1233 = vpack.c.bf16 %v1163, %v1162
        %v1234 = vpack.c.bf16 %v1099, %v1098
        %v1235 = vpack.c.bf16 %v957, %v956
        %v1236 = vpack.c.bf16 %v959, %v958
        %v1237 = vpack.c.bf16 %v961, %v960
        %v1238 = vpack.c.bf16 %v963, %v962
        %v1239 = vpack.c.bf16 %v965, %v964
        %v1240 = vpack.c.bf16 %v967, %v966
        %v1241 = vpack.c.bf16 %v969, %v968
        %v1242 = vpack.c.bf16 %v971, %v970
        %v1243 = vpack.c.bf16 %v1208, %v1207
        %v1244 = vpack.c.bf16 %v1210, %v1209
        %v1245 = vpack.c.bf16 %v1212, %v1211
        %v1246 = vpack.c.bf16 %v1214, %v1213
        %v1247 = vpack.c.bf16 %v1216, %v1215
        %v1248 = vpack.c.bf16 %v1218, %v1217
        %v1249 = vpack.c.bf16 %v1220, %v1219
        %v1250 = vpack.c.bf16 %v1222, %v1221
        %v1251 = vpack.c.bf16 %v1224, %v1223
        %v1252 = vld [vmem:[#allocation17] sm:$0xf]
        %s1253 = scalar_lea.vmem [#allocation17], 4
        %v1254 = vld [vmem:[%s1253] sm:$0xf]
        %vm1255 = vcmask 64512
        %v1257 = vsel %vm1255, %v1234, 0
        %v1260 = vsel %vm1255, %v1236, 0
        %v1263 = vsel %vm1255, %v1238, 0
        %v1266 = vsel %vm1255, %v1240, 0
        %vm1268 = vcmask 1043456
        %v1270 = vsel %vm1268, %v1254, 0
        %1272 = vmatprep.subr.bf16.mxu0 0
        %1273 = vmatpush1.bf16.msra.mxu0 %v1270
        %1274 = vmatprep.subr.bf16.mxu0 0
        %1275 = vmatpush1.bf16.msra.mxu0 0
        %1276 = vmatprep.subr.bf16.mxu0 0
        %1277 = vmatpush1.bf16.msra.mxu0 0
        %1278 = vmatprep.subr.bf16.mxu0 0
        %1279 = vmatpush1.bf16.msra.mxu0 0
        %1280 = vmatprep.subr.bf16.mxu0 0
        %1281 = vmatpush1.bf16.msra.mxu0 0
        %1282 = vmatprep.subr.bf16.mxu0 0
        %1283 = vmatpush1.bf16.msra.mxu0 0
        %1284 = vmatprep.subr.bf16.mxu0 0
        %1285 = vmatpush1.bf16.msra.mxu0 0
        %1286 = vmatprep.subr.bf16.mxu0 0
        %1287 = vmatpush1.bf16.msra.mxu0 0
        %1288 = vmatprep.subr.bf16.mxu0 0
        %1289 = vmatpush1.bf16.msra.mxu0 0
        %1290 = vmatprep.subr.bf16.mxu0 0
        %1291 = vmatpush1.bf16.msra.mxu0 0
        %1292 = vmatprep.subr.bf16.mxu0 0
        %1293 = vmatpush1.bf16.msra.mxu0 0
        %1294 = vmatprep.subr.bf16.mxu0 0
        %1295 = vmatpush1.bf16.msra.mxu0 0
        %1296 = vmatprep.subr.bf16.mxu0 0
        %1297 = vmatpush1.bf16.msra.mxu0 0
        %1298 = vmatprep.subr.bf16.mxu0 0
        %1299 = vmatpush1.bf16.msra.mxu0 0
        %1300 = vmatprep.subr.bf16.mxu0 0
        %1301 = vmatpush1.bf16.msra.mxu0 0
        %1302 = vmatprep.subr.bf16.mxu0 0
        %1303 = vmatpush1.bf16.msra.mxu0 0
        %1304 = vmatprep.mubr.bf16.mxu0 0
        %1305 = vmatmul.mubr.bf16.gmra.mrb[0].mxu0 %v1257
        %v1306 = vpop.f32.mrb[0].mxu0
        %v1307 = vadd.f32 0.0, %v1306
        %v1308 = vpop.f32.mrb[0].mxu0
        %v1309 = vpop.f32.mrb[0].mxu0
        %v1310 = vadd.f32 0.0, %v1309
        %v1311 = vpop.f32.mrb[0].mxu0
        %1312 = vmatprep.mubr.bf16.mxu0 0
        %1313 = vmatmul.mubr.bf16.gmra.mrb[0].mxu0 %v1260
        %v1314 = vpop.f32.mrb[0].mxu0
        %v1315 = vadd.f32 0.0, %v1314
        %v1316 = vpop.f32.mrb[0].mxu0
        %v1317 = vpop.f32.mrb[0].mxu0
        %v1318 = vadd.f32 0.0, %v1317
        %v1319 = vpop.f32.mrb[0].mxu0
        %1320 = vmatprep.mubr.bf16.mxu0 0
        %1321 = vmatmul.mubr.bf16.gmra.mrb[0].mxu0 %v1263
        %v1322 = vpop.f32.mrb[0].mxu0
        %v1323 = vadd.f32 0.0, %v1322
        %v1324 = vpop.f32.mrb[0].mxu0
        %v1325 = vpop.f32.mrb[0].mxu0
        %v1326 = vadd.f32 0.0, %v1325
        %v1327 = vpop.f32.mrb[0].mxu0
        %1328 = vmatprep.mubr.bf16.mxu0 0
        %1329 = vmatmul.mubr.bf16.gmra.mrb[0].mxu0 %v1266
        %v1330 = vpop.f32.mrb[0].mxu0
        %v1331 = vadd.f32 0.0, %v1330
        %v1332 = vpop.f32.mrb[0].mxu0
        %v1333 = vpop.f32.mrb[0].mxu0
        %v1334 = vadd.f32 0.0, %v1333
        %v1335 = vpop.f32.mrb[0].mxu0
        %1336 = vdwg.mxu0
        %v1338 = vsel %vm1255, %v1225, 0
        %v1341 = vsel %vm1255, %v1227, 0
        %v1344 = vsel %vm1255, %v1229, 0
        %v1347 = vsel %vm1255, %v1231, 0
        %v1350 = vsel %vm1268, %v1252, 0
        %1352 = vmatprep.subr.bf16.mxu0 0
        %1353 = vmatpush1.bf16.msra.mxu0 %v1350
        %1354 = vmatprep.subr.bf16.mxu0 0
        %1355 = vmatpush1.bf16.msra.mxu0 0
        %1356 = vmatprep.subr.bf16.mxu0 0
        %1357 = vmatpush1.bf16.msra.mxu0 0
        %1358 = vmatprep.subr.bf16.mxu0 0
        %1359 = vmatpush1.bf16.msra.mxu0 0
        %1360 = vmatprep.subr.bf16.mxu0 0
        %1361 = vmatpush1.bf16.msra.mxu0 0
        %1362 = vmatprep.subr.bf16.mxu0 0
        %1363 = vmatpush1.bf16.msra.mxu0 0
        %1364 = vmatprep.subr.bf16.mxu0 0
        %1365 = vmatpush1.bf16.msra.mxu0 0
        %1366 = vmatprep.subr.bf16.mxu0 0
        %1367 = vmatpush1.bf16.msra.mxu0 0
        %1368 = vmatprep.subr.bf16.mxu0 0
        %1369 = vmatpush1.bf16.msra.mxu0 0
        %1370 = vmatprep.subr.bf16.mxu0 0
        %1371 = vmatpush1.bf16.msra.mxu0 0
        %1372 = vmatprep.subr.bf16.mxu0 0
        %1373 = vmatpush1.bf16.msra.mxu0 0
        %1374 = vmatprep.subr.bf16.mxu0 0
        %1375 = vmatpush1.bf16.msra.mxu0 0
        %1376 = vmatprep.subr.bf16.mxu0 0
        %1377 = vmatpush1.bf16.msra.mxu0 0
        %1378 = vmatprep.subr.bf16.mxu0 0
        %1379 = vmatpush1.bf16.msra.mxu0 0
        %1380 = vmatprep.subr.bf16.mxu0 0
        %1381 = vmatpush1.bf16.msra.mxu0 0
        %1382 = vmatprep.subr.bf16.mxu0 0
        %1383 = vmatpush1.bf16.msra.mxu0 0
        %1384 = vmatprep.mubr.bf16.mxu0 0
        %1385 = vmatmul.mubr.bf16.gmra.mrb[0].mxu0 %v1338
        %v1386 = vpop.f32.mrb[0].mxu0
        %v1387 = vadd.f32 %v1307, %v1386
        %v1388 = vpop.f32.mrb[0].mxu0
        %v1389 = vpop.f32.mrb[0].mxu0
        %v1390 = vadd.f32 %v1310, %v1389
        %v1391 = vpop.f32.mrb[0].mxu0
        %1392 = vmatprep.mubr.bf16.mxu0 0
        %1393 = vmatmul.mubr.bf16.gmra.mrb[0].mxu0 %v1341
        %v1394 = vpop.f32.mrb[0].mxu0
        %v1395 = vadd.f32 %v1315, %v1394
        %v1396 = vpop.f32.mrb[0].mxu0
        %v1397 = vpop.f32.mrb[0].mxu0
        %v1398 = vadd.f32 %v1318, %v1397
        %v1399 = vpop.f32.mrb[0].mxu0
        %1400 = vmatprep.mubr.bf16.mxu0 0
        %1401 = vmatmul.mubr.bf16.gmra.mrb[0].mxu0 %v1344
        %v1402 = vpop.f32.mrb[0].mxu0
        %v1403 = vadd.f32 %v1323, %v1402
        %v1404 = vpop.f32.mrb[0].mxu0
        %v1405 = vpop.f32.mrb[0].mxu0
        %v1406 = vadd.f32 %v1326, %v1405
        %v1407 = vpop.f32.mrb[0].mxu0
        %1408 = vmatprep.mubr.bf16.mxu0 0
        %1409 = vmatmul.mubr.bf16.gmra.mrb[0].mxu0 %v1347
        %v1410 = vpop.f32.mrb[0].mxu0
        %v1411 = vadd.f32 %v1331, %v1410
        %v1412 = vpop.f32.mrb[0].mxu0
        %v1413 = vpop.f32.mrb[0].mxu0
        %v1414 = vadd.f32 %v1334, %v1413
        %v1415 = vpop.f32.mrb[0].mxu0
        %1416 = vdwg.mxu0
        %s1417 = scalar_lea.vmem [#allocation17], 8
        %v1418 = vld [vmem:[%s1417] sm:$0xf]
        %v1420 = vsel %vm1255, %v1243, 0
        %v1423 = vsel %vm1255, %v1245, 0
        %v1426 = vsel %vm1255, %v1247, 0
        %v1429 = vsel %vm1255, %v1249, 0
        %v1432 = vsel %vm1268, %v1418, 0
        %1434 = vmatprep.subr.bf16.mxu0 0
        %1435 = vmatpush1.bf16.msra.mxu0 %v1432
        %1436 = vmatprep.subr.bf16.mxu0 0
        %1437 = vmatpush1.bf16.msra.mxu0 0
        %1438 = vmatprep.subr.bf16.mxu0 0
        %1439 = vmatpush1.bf16.msra.mxu0 0
        %1440 = vmatprep.subr.bf16.mxu0 0
        %1441 = vmatpush1.bf16.msra.mxu0 0
        %1442 = vmatprep.subr.bf16.mxu0 0
        %1443 = vmatpush1.bf16.msra.mxu0 0
        %1444 = vmatprep.subr.bf16.mxu0 0
        %1445 = vmatpush1.bf16.msra.mxu0 0
        %1446 = vmatprep.subr.bf16.mxu0 0
        %1447 = vmatpush1.bf16.msra.mxu0 0
        %1448 = vmatprep.subr.bf16.mxu0 0
        %1449 = vmatpush1.bf16.msra.mxu0 0
        %1450 = vmatprep.subr.bf16.mxu0 0
        %1451 = vmatpush1.bf16.msra.mxu0 0
        %1452 = vmatprep.subr.bf16.mxu0 0
        %1453 = vmatpush1.bf16.msra.mxu0 0
        %1454 = vmatprep.subr.bf16.mxu0 0
        %1455 = vmatpush1.bf16.msra.mxu0 0
        %1456 = vmatprep.subr.bf16.mxu0 0
        %1457 = vmatpush1.bf16.msra.mxu0 0
        %1458 = vmatprep.subr.bf16.mxu0 0
        %1459 = vmatpush1.bf16.msra.mxu0 0
        %1460 = vmatprep.subr.bf16.mxu0 0
        %1461 = vmatpush1.bf16.msra.mxu0 0
        %1462 = vmatprep.subr.bf16.mxu0 0
        %1463 = vmatpush1.bf16.msra.mxu0 0
        %1464 = vmatprep.subr.bf16.mxu0 0
        %1465 = vmatpush1.bf16.msra.mxu0 0
        %1466 = vmatprep.mubr.bf16.mxu0 0
        %1467 = vmatmul.mubr.bf16.gmra.mrb[0].mxu0 %v1420
        %v1468 = vpop.f32.mrb[0].mxu0
        %v1469 = vadd.f32 0.0, %v1468
        %v1470 = vpop.f32.mrb[0].mxu0
        %v1471 = vpop.f32.mrb[0].mxu0
        %v1472 = vadd.f32 0.0, %v1471
        %v1473 = vpop.f32.mrb[0].mxu0
        %1474 = vmatprep.mubr.bf16.mxu0 0
        %1475 = vmatmul.mubr.bf16.gmra.mrb[0].mxu0 %v1423
        %v1476 = vpop.f32.mrb[0].mxu0
        %v1477 = vadd.f32 0.0, %v1476
        %v1478 = vpop.f32.mrb[0].mxu0
        %v1479 = vpop.f32.mrb[0].mxu0
        %v1480 = vadd.f32 0.0, %v1479
        %v1481 = vpop.f32.mrb[0].mxu0
        %1482 = vmatprep.mubr.bf16.mxu0 0
        %1483 = vmatmul.mubr.bf16.gmra.mrb[0].mxu0 %v1426
        %v1484 = vpop.f32.mrb[0].mxu0
        %v1485 = vadd.f32 0.0, %v1484
        %v1486 = vpop.f32.mrb[0].mxu0
        %v1487 = vpop.f32.mrb[0].mxu0
        %v1488 = vadd.f32 0.0, %v1487
        %v1489 = vpop.f32.mrb[0].mxu0
        %1490 = vmatprep.mubr.bf16.mxu0 0
        %1491 = vmatmul.mubr.bf16.gmra.mrb[0].mxu0 %v1429
        %v1492 = vpop.f32.mrb[0].mxu0
        %v1493 = vadd.f32 0.0, %v1492
        %v1494 = vpop.f32.mrb[0].mxu0
        %v1495 = vpop.f32.mrb[0].mxu0
        %v1496 = vadd.f32 0.0, %v1495
        %v1497 = vpop.f32.mrb[0].mxu0
        %1498 = vdwg.mxu0
        %v1499 = vadd.f32 %v1387, %v1469
        %v1500 = vadd.f32 %v1390, %v1472
        %v1501 = vadd.f32 %v1395, %v1477
        %v1502 = vadd.f32 %v1398, %v1480
        %v1503 = vadd.f32 %v1403, %v1485
        %v1504 = vadd.f32 %v1406, %v1488
        %v1505 = vadd.f32 %v1411, %v1493
        %v1506 = vadd.f32 %v1414, %v1496
        %s1507 = scalar_lea.vmem [#allocation17], 12
        %v1508 = vld [vmem:[%s1507] sm:$0xf]
        %v1510 = vsel %vm1255, %v1226, 0
        %v1513 = vsel %vm1255, %v1228, 0
        %v1516 = vsel %vm1255, %v1230, 0
        %v1519 = vsel %vm1255, %v1232, 0
        %v1522 = vsel %vm1268, %v1508, 0
        %1524 = vmatprep.subr.bf16.mxu0 0
        %1525 = vmatpush1.bf16.msra.mxu0 %v1522
        %1526 = vmatprep.subr.bf16.mxu0 0
        %1527 = vmatpush1.bf16.msra.mxu0 0
        %1528 = vmatprep.subr.bf16.mxu0 0
        %1529 = vmatpush1.bf16.msra.mxu0 0
        %1530 = vmatprep.subr.bf16.mxu0 0
        %1531 = vmatpush1.bf16.msra.mxu0 0
        %1532 = vmatprep.subr.bf16.mxu0 0
        %1533 = vmatpush1.bf16.msra.mxu0 0
        %1534 = vmatprep.subr.bf16.mxu0 0
        %1535 = vmatpush1.bf16.msra.mxu0 0
        %1536 = vmatprep.subr.bf16.mxu0 0
        %1537 = vmatpush1.bf16.msra.mxu0 0
        %1538 = vmatprep.subr.bf16.mxu0 0
        %1539 = vmatpush1.bf16.msra.mxu0 0
        %1540 = vmatprep.subr.bf16.mxu0 0
        %1541 = vmatpush1.bf16.msra.mxu0 0
        %1542 = vmatprep.subr.bf16.mxu0 0
        %1543 = vmatpush1.bf16.msra.mxu0 0
        %1544 = vmatprep.subr.bf16.mxu0 0
        %1545 = vmatpush1.bf16.msra.mxu0 0
        %1546 = vmatprep.subr.bf16.mxu0 0
        %1547 = vmatpush1.bf16.msra.mxu0 0
        %1548 = vmatprep.subr.bf16.mxu0 0
        %1549 = vmatpush1.bf16.msra.mxu0 0
        %1550 = vmatprep.subr.bf16.mxu0 0
        %1551 = vmatpush1.bf16.msra.mxu0 0
        %1552 = vmatprep.subr.bf16.mxu0 0
        %1553 = vmatpush1.bf16.msra.mxu0 0
        %1554 = vmatprep.subr.bf16.mxu0 0
        %1555 = vmatpush1.bf16.msra.mxu0 0
        %1556 = vmatprep.mubr.bf16.mxu0 0
        %1557 = vmatmul.mubr.bf16.gmra.mrb[0].mxu0 %v1510
        %v1558 = vpop.f32.mrb[0].mxu0
        %v1559 = vadd.f32 0.0, %v1558
        %v1560 = vpop.f32.mrb[0].mxu0
        %v1561 = vpop.f32.mrb[0].mxu0
        %v1562 = vadd.f32 0.0, %v1561
        %v1563 = vpop.f32.mrb[0].mxu0
        %1564 = vmatprep.mubr.bf16.mxu0 0
        %1565 = vmatmul.mubr.bf16.gmra.mrb[0].mxu0 %v1513
        %v1566 = vpop.f32.mrb[0].mxu0
        %v1567 = vadd.f32 0.0, %v1566
        %v1568 = vpop.f32.mrb[0].mxu0
        %v1569 = vpop.f32.mrb[0].mxu0
        %v1570 = vadd.f32 0.0, %v1569
        %v1571 = vpop.f32.mrb[0].mxu0
        %1572 = vmatprep.mubr.bf16.mxu0 0
        %1573 = vmatmul.mubr.bf16.gmra.mrb[0].mxu0 %v1516
        %v1574 = vpop.f32.mrb[0].mxu0
        %v1575 = vadd.f32 0.0, %v1574
        %v1576 = vpop.f32.mrb[0].mxu0
        %v1577 = vpop.f32.mrb[0].mxu0
        %v1578 = vadd.f32 0.0, %v1577
        %v1579 = vpop.f32.mrb[0].mxu0
        %1580 = vmatprep.mubr.bf16.mxu0 0
        %1581 = vmatmul.mubr.bf16.gmra.mrb[0].mxu0 %v1519
        %v1582 = vpop.f32.mrb[0].mxu0
        %v1583 = vadd.f32 0.0, %v1582
        %v1584 = vpop.f32.mrb[0].mxu0
        %v1585 = vpop.f32.mrb[0].mxu0
        %v1586 = vadd.f32 0.0, %v1585
        %v1587 = vpop.f32.mrb[0].mxu0
        %1588 = vdwg.mxu0
        %v1589 = vadd.f32 %v1499, %v1559
        %v1590 = vadd.f32 %v1500, %v1562
        %v1591 = vadd.f32 %v1501, %v1567
        %v1592 = vadd.f32 %v1502, %v1570
        %v1593 = vadd.f32 %v1503, %v1575
        %v1594 = vadd.f32 %v1504, %v1578
        %v1595 = vadd.f32 %v1505, %v1583
        %v1596 = vadd.f32 %v1506, %v1586
        %s1597 = scalar_lea.vmem [#allocation17], 16
        %v1598 = vld [vmem:[%s1597] sm:$0xf]
        %v1600 = vsel %vm1255, %v1235, 0
        %v1603 = vsel %vm1255, %v1237, 0
        %v1606 = vsel %vm1255, %v1239, 0
        %v1609 = vsel %vm1255, %v1241, 0
        %v1612 = vsel %vm1268, %v1598, 0
        %1614 = vmatprep.subr.bf16.mxu0 0
        %1615 = vmatpush1.bf16.msra.mxu0 %v1612
        %1616 = vmatprep.subr.bf16.mxu0 0
        %1617 = vmatpush1.bf16.msra.mxu0 0
        %1618 = vmatprep.subr.bf16.mxu0 0
        %1619 = vmatpush1.bf16.msra.mxu0 0
        %1620 = vmatprep.subr.bf16.mxu0 0
        %1621 = vmatpush1.bf16.msra.mxu0 0
        %1622 = vmatprep.subr.bf16.mxu0 0
        %1623 = vmatpush1.bf16.msra.mxu0 0
        %1624 = vmatprep.subr.bf16.mxu0 0
        %1625 = vmatpush1.bf16.msra.mxu0 0
        %1626 = vmatprep.subr.bf16.mxu0 0
        %1627 = vmatpush1.bf16.msra.mxu0 0
        %1628 = vmatprep.subr.bf16.mxu0 0
        %1629 = vmatpush1.bf16.msra.mxu0 0
        %1630 = vmatprep.subr.bf16.mxu0 0
        %1631 = vmatpush1.bf16.msra.mxu0 0
        %1632 = vmatprep.subr.bf16.mxu0 0
        %1633 = vmatpush1.bf16.msra.mxu0 0
        %1634 = vmatprep.subr.bf16.mxu0 0
        %1635 = vmatpush1.bf16.msra.mxu0 0
        %1636 = vmatprep.subr.bf16.mxu0 0
        %1637 = vmatpush1.bf16.msra.mxu0 0
        %1638 = vmatprep.subr.bf16.mxu0 0
        %1639 = vmatpush1.bf16.msra.mxu0 0
        %1640 = vmatprep.subr.bf16.mxu0 0
        %1641 = vmatpush1.bf16.msra.mxu0 0
        %1642 = vmatprep.subr.bf16.mxu0 0
        %1643 = vmatpush1.bf16.msra.mxu0 0
        %1644 = vmatprep.subr.bf16.mxu0 0
        %1645 = vmatpush1.bf16.msra.mxu0 0
        %1646 = vmatprep.mubr.bf16.mxu0 0
        %1647 = vmatmul.mubr.bf16.gmra.mrb[0].mxu0 %v1600
        %v1648 = vpop.f32.mrb[0].mxu0
        %v1649 = vadd.f32 0.0, %v1648
        %v1650 = vpop.f32.mrb[0].mxu0
        %v1651 = vpop.f32.mrb[0].mxu0
        %v1652 = vadd.f32 0.0, %v1651
        %v1653 = vpop.f32.mrb[0].mxu0
        %1654 = vmatprep.mubr.bf16.mxu0 0
        %1655 = vmatmul.mubr.bf16.gmra.mrb[0].mxu0 %v1603
        %v1656 = vpop.f32.mrb[0].mxu0
        %v1657 = vadd.f32 0.0, %v1656
        %v1658 = vpop.f32.mrb[0].mxu0
        %v1659 = vpop.f32.mrb[0].mxu0
        %v1660 = vadd.f32 0.0, %v1659
        %v1661 = vpop.f32.mrb[0].mxu0
        %1662 = vmatprep.mubr.bf16.mxu0 0
        %1663 = vmatmul.mubr.bf16.gmra.mrb[0].mxu0 %v1606
        %v1664 = vpop.f32.mrb[0].mxu0
        %v1665 = vadd.f32 0.0, %v1664
        %v1666 = vpop.f32.mrb[0].mxu0
        %v1667 = vpop.f32.mrb[0].mxu0
        %v1668 = vadd.f32 0.0, %v1667
        %v1669 = vpop.f32.mrb[0].mxu0
        %1670 = vmatprep.mubr.bf16.mxu0 0
        %1671 = vmatmul.mubr.bf16.gmra.mrb[0].mxu0 %v1609
        %v1672 = vpop.f32.mrb[0].mxu0
        %v1673 = vadd.f32 0.0, %v1672
        %v1674 = vpop.f32.mrb[0].mxu0
        %v1675 = vpop.f32.mrb[0].mxu0
        %v1676 = vadd.f32 0.0, %v1675
        %v1677 = vpop.f32.mrb[0].mxu0
        %1678 = vdwg.mxu0
        %v1679 = vadd.f32 %v1589, %v1649
        %v1680 = vadd.f32 %v1590, %v1652
        %v1681 = vadd.f32 %v1591, %v1657
        %v1682 = vadd.f32 %v1592, %v1660
        %v1683 = vadd.f32 %v1593, %v1665
        %v1684 = vadd.f32 %v1594, %v1668
        %v1685 = vadd.f32 %v1595, %v1673
        %v1686 = vadd.f32 %v1596, %v1676
        %s1687 = scalar_lea.vmem [#allocation17], 20
        %v1688 = vld [vmem:[%s1687] sm:$0xf]
        %v1690 = vsel %vm1255, %v1244, 0
        %v1693 = vsel %vm1255, %v1246, 0
        %v1696 = vsel %vm1255, %v1248, 0
        %v1699 = vsel %vm1255, %v1250, 0
        %v1702 = vsel %vm1268, %v1688, 0
        %1704 = vmatprep.subr.bf16.mxu0 0
        %1705 = vmatpush1.bf16.msra.mxu0 %v1702
        %1706 = vmatprep.subr.bf16.mxu0 0
        %1707 = vmatpush1.bf16.msra.mxu0 0
        %1708 = vmatprep.subr.bf16.mxu0 0
        %1709 = vmatpush1.bf16.msra.mxu0 0
        %1710 = vmatprep.subr.bf16.mxu0 0
        %1711 = vmatpush1.bf16.msra.mxu0 0
        %1712 = vmatprep.subr.bf16.mxu0 0
        %1713 = vmatpush1.bf16.msra.mxu0 0
        %1714 = vmatprep.subr.bf16.mxu0 0
        %1715 = vmatpush1.bf16.msra.mxu0 0
        %1716 = vmatprep.subr.bf16.mxu0 0
        %1717 = vmatpush1.bf16.msra.mxu0 0
        %1718 = vmatprep.subr.bf16.mxu0 0
        %1719 = vmatpush1.bf16.msra.mxu0 0
        %1720 = vmatprep.subr.bf16.mxu0 0
        %1721 = vmatpush1.bf16.msra.mxu0 0
        %1722 = vmatprep.subr.bf16.mxu0 0
        %1723 = vmatpush1.bf16.msra.mxu0 0
        %1724 = vmatprep.subr.bf16.mxu0 0
        %1725 = vmatpush1.bf16.msra.mxu0 0
        %1726 = vmatprep.subr.bf16.mxu0 0
        %1727 = vmatpush1.bf16.msra.mxu0 0
        %1728 = vmatprep.subr.bf16.mxu0 0
        %1729 = vmatpush1.bf16.msra.mxu0 0
        %1730 = vmatprep.subr.bf16.mxu0 0
        %1731 = vmatpush1.bf16.msra.mxu0 0
        %1732 = vmatprep.subr.bf16.mxu0 0
        %1733 = vmatpush1.bf16.msra.mxu0 0
        %1734 = vmatprep.subr.bf16.mxu0 0
        %1735 = vmatpush1.bf16.msra.mxu0 0
        %1736 = vmatprep.mubr.bf16.mxu0 0
        %1737 = vmatmul.mubr.bf16.gmra.mrb[0].mxu0 %v1690
        %v1738 = vpop.f32.mrb[0].mxu0
        %v1739 = vadd.f32 0.0, %v1738
        %v1740 = vpop.f32.mrb[0].mxu0
        %v1741 = vpop.f32.mrb[0].mxu0
        %v1742 = vadd.f32 0.0, %v1741
        %v1743 = vpop.f32.mrb[0].mxu0
        %1744 = vmatprep.mubr.bf16.mxu0 0
        %1745 = vmatmul.mubr.bf16.gmra.mrb[0].mxu0 %v1693
        %v1746 = vpop.f32.mrb[0].mxu0
        %v1747 = vadd.f32 0.0, %v1746
        %v1748 = vpop.f32.mrb[0].mxu0
        %v1749 = vpop.f32.mrb[0].mxu0
        %v1750 = vadd.f32 0.0, %v1749
        %v1751 = vpop.f32.mrb[0].mxu0
        %1752 = vmatprep.mubr.bf16.mxu0 0
        %1753 = vmatmul.mubr.bf16.gmra.mrb[0].mxu0 %v1696
        %v1754 = vpop.f32.mrb[0].mxu0
        %v1755 = vadd.f32 0.0, %v1754
        %v1756 = vpop.f32.mrb[0].mxu0
        %v1757 = vpop.f32.mrb[0].mxu0
        %v1758 = vadd.f32 0.0, %v1757
        %v1759 = vpop.f32.mrb[0].mxu0
        %1760 = vmatprep.mubr.bf16.mxu0 0
        %1761 = vmatmul.mubr.bf16.gmra.mrb[0].mxu0 %v1699
        %v1762 = vpop.f32.mrb[0].mxu0
        %v1763 = vadd.f32 0.0, %v1762
        %v1764 = vpop.f32.mrb[0].mxu0
        %v1765 = vpop.f32.mrb[0].mxu0
        %v1766 = vadd.f32 0.0, %v1765
        %v1767 = vpop.f32.mrb[0].mxu0
        %1768 = vdwg.mxu0
        %v1769 = vadd.f32 %v1679, %v1739
        %v1770 = vadd.f32 %v1680, %v1742
        %v1771 = vadd.f32 %v1681, %v1747
        %v1772 = vadd.f32 %v1682, %v1750
        %v1773 = vadd.f32 %v1683, %v1755
        %v1774 = vadd.f32 %v1684, %v1758
        %v1775 = vadd.f32 %v1685, %v1763
        %v1776 = vadd.f32 %v1686, %v1766
        %s1777 = scalar_lea.vmem [#allocation17], 24
        %v1778 = vld [vmem:[%s1777] sm:$0xf]
        %v1780 = vsel %vm1255, %v1233, 0
        %v1783 = vsel %vm1268, %v1778, 0
        %1785 = vmatprep.subr.bf16.mxu0 0
        %1786 = vmatpush1.bf16.msra.mxu0 %v1783
        %1787 = vmatprep.subr.bf16.mxu0 0
        %1788 = vmatpush1.bf16.msra.mxu0 0
        %1789 = vmatprep.subr.bf16.mxu0 0
        %1790 = vmatpush1.bf16.msra.mxu0 0
        %1791 = vmatprep.subr.bf16.mxu0 0
        %1792 = vmatpush1.bf16.msra.mxu0 0
        %1793 = vmatprep.subr.bf16.mxu0 0
        %1794 = vmatpush1.bf16.msra.mxu0 0
        %1795 = vmatprep.subr.bf16.mxu0 0
        %1796 = vmatpush1.bf16.msra.mxu0 0
        %1797 = vmatprep.subr.bf16.mxu0 0
        %1798 = vmatpush1.bf16.msra.mxu0 0
        %1799 = vmatprep.subr.bf16.mxu0 0
        %1800 = vmatpush1.bf16.msra.mxu0 0
        %1801 = vmatprep.subr.bf16.mxu0 0
        %1802 = vmatpush1.bf16.msra.mxu0 0
        %1803 = vmatprep.subr.bf16.mxu0 0
        %1804 = vmatpush1.bf16.msra.mxu0 0
        %1805 = vmatprep.subr.bf16.mxu0 0
        %1806 = vmatpush1.bf16.msra.mxu0 0
        %1807 = vmatprep.subr.bf16.mxu0 0
        %1808 = vmatpush1.bf16.msra.mxu0 0
        %1809 = vmatprep.subr.bf16.mxu0 0
        %1810 = vmatpush1.bf16.msra.mxu0 0
        %1811 = vmatprep.subr.bf16.mxu0 0
        %1812 = vmatpush1.bf16.msra.mxu0 0
        %1813 = vmatprep.subr.bf16.mxu0 0
        %1814 = vmatpush1.bf16.msra.mxu0 0
        %1815 = vmatprep.subr.bf16.mxu0 0
        %1816 = vmatpush1.bf16.msra.mxu0 0
        %1817 = vmatprep.mubr.bf16.mxu0 0
        %1818 = vmatmul.mubr.bf16.gmra.mrb[0].mxu0 %v1341
        %v1819 = vpop.f32.mrb[0].mxu0
        %v1820 = vadd.f32 0.0, %v1819
        %v1821 = vpop.f32.mrb[0].mxu0
        %v1822 = vpop.f32.mrb[0].mxu0
        %v1823 = vadd.f32 0.0, %v1822
        %v1824 = vpop.f32.mrb[0].mxu0
        %1825 = vmatprep.mubr.bf16.mxu0 0
        %1826 = vmatmul.mubr.bf16.gmra.mrb[0].mxu0 %v1344
        %v1827 = vpop.f32.mrb[0].mxu0
        %v1828 = vadd.f32 0.0, %v1827
        %v1829 = vpop.f32.mrb[0].mxu0
        %v1830 = vpop.f32.mrb[0].mxu0
        %v1831 = vadd.f32 0.0, %v1830
        %v1832 = vpop.f32.mrb[0].mxu0
        %1833 = vmatprep.mubr.bf16.mxu0 0
        %1834 = vmatmul.mubr.bf16.gmra.mrb[0].mxu0 %v1347
        %v1835 = vpop.f32.mrb[0].mxu0
        %v1836 = vadd.f32 0.0, %v1835
        %v1837 = vpop.f32.mrb[0].mxu0
        %v1838 = vpop.f32.mrb[0].mxu0
        %v1839 = vadd.f32 0.0, %v1838
        %v1840 = vpop.f32.mrb[0].mxu0
        %1841 = vmatprep.mubr.bf16.mxu0 0
        %1842 = vmatmul.mubr.bf16.gmra.mrb[0].mxu0 %v1780
        %v1843 = vpop.f32.mrb[0].mxu0
        %v1844 = vadd.f32 0.0, %v1843
        %v1845 = vpop.f32.mrb[0].mxu0
        %v1846 = vpop.f32.mrb[0].mxu0
        %v1847 = vadd.f32 0.0, %v1846
        %v1848 = vpop.f32.mrb[0].mxu0
        %1849 = vdwg.mxu0
        %v1850 = vadd.f32 %v1769, %v1820
        %v1851 = vadd.f32 %v1770, %v1823
        %v1852 = vadd.f32 %v1771, %v1828
        %v1853 = vadd.f32 %v1772, %v1831
        %v1854 = vadd.f32 %v1773, %v1836
        %v1855 = vadd.f32 %v1774, %v1839
        %v1856 = vadd.f32 %v1775, %v1844
        %v1857 = vadd.f32 %v1776, %v1847
        %s1858 = scalar_lea.vmem [#allocation17], 28
        %v1859 = vld [vmem:[%s1858] sm:$0xf]
        %v1861 = vsel %vm1255, %v1242, 0
        %v1864 = vsel %vm1268, %v1859, 0
        %1866 = vmatprep.subr.bf16.mxu0 0
        %1867 = vmatpush1.bf16.msra.mxu0 %v1864
        %1868 = vmatprep.subr.bf16.mxu0 0
        %1869 = vmatpush1.bf16.msra.mxu0 0
        %1870 = vmatprep.subr.bf16.mxu0 0
        %1871 = vmatpush1.bf16.msra.mxu0 0
        %1872 = vmatprep.subr.bf16.mxu0 0
        %1873 = vmatpush1.bf16.msra.mxu0 0
        %1874 = vmatprep.subr.bf16.mxu0 0
        %1875 = vmatpush1.bf16.msra.mxu0 0
        %1876 = vmatprep.subr.bf16.mxu0 0
        %1877 = vmatpush1.bf16.msra.mxu0 0
        %1878 = vmatprep.subr.bf16.mxu0 0
        %1879 = vmatpush1.bf16.msra.mxu0 0
        %1880 = vmatprep.subr.bf16.mxu0 0
        %1881 = vmatpush1.bf16.msra.mxu0 0
        %1882 = vmatprep.subr.bf16.mxu0 0
        %1883 = vmatpush1.bf16.msra.mxu0 0
        %1884 = vmatprep.subr.bf16.mxu0 0
        %1885 = vmatpush1.bf16.msra.mxu0 0
        %1886 = vmatprep.subr.bf16.mxu0 0
        %1887 = vmatpush1.bf16.msra.mxu0 0
        %1888 = vmatprep.subr.bf16.mxu0 0
        %1889 = vmatpush1.bf16.msra.mxu0 0
        %1890 = vmatprep.subr.bf16.mxu0 0
        %1891 = vmatpush1.bf16.msra.mxu0 0
        %1892 = vmatprep.subr.bf16.mxu0 0
        %1893 = vmatpush1.bf16.msra.mxu0 0
        %1894 = vmatprep.subr.bf16.mxu0 0
        %1895 = vmatpush1.bf16.msra.mxu0 0
        %1896 = vmatprep.subr.bf16.mxu0 0
        %1897 = vmatpush1.bf16.msra.mxu0 0
        %1898 = vmatprep.mubr.bf16.mxu0 0
        %1899 = vmatmul.mubr.bf16.gmra.mrb[0].mxu0 %v1260
        %v1900 = vpop.f32.mrb[0].mxu0
        %v1901 = vadd.f32 0.0, %v1900
        %v1902 = vpop.f32.mrb[0].mxu0
        %v1903 = vpop.f32.mrb[0].mxu0
        %v1904 = vadd.f32 0.0, %v1903
        %v1905 = vpop.f32.mrb[0].mxu0
        %1906 = vmatprep.mubr.bf16.mxu0 0
        %1907 = vmatmul.mubr.bf16.gmra.mrb[0].mxu0 %v1263
        %v1908 = vpop.f32.mrb[0].mxu0
        %v1909 = vadd.f32 0.0, %v1908
        %v1910 = vpop.f32.mrb[0].mxu0
        %v1911 = vpop.f32.mrb[0].mxu0
        %v1912 = vadd.f32 0.0, %v1911
        %v1913 = vpop.f32.mrb[0].mxu0
        %1914 = vmatprep.mubr.bf16.mxu0 0
        %1915 = vmatmul.mubr.bf16.gmra.mrb[0].mxu0 %v1266
        %v1916 = vpop.f32.mrb[0].mxu0
        %v1917 = vadd.f32 0.0, %v1916
        %v1918 = vpop.f32.mrb[0].mxu0
        %v1919 = vpop.f32.mrb[0].mxu0
        %v1920 = vadd.f32 0.0, %v1919
        %v1921 = vpop.f32.mrb[0].mxu0
        %1922 = vmatprep.mubr.bf16.mxu0 0
        %1923 = vmatmul.mubr.bf16.gmra.mrb[0].mxu0 %v1861
        %v1924 = vpop.f32.mrb[0].mxu0
        %v1925 = vadd.f32 0.0, %v1924
        %v1926 = vpop.f32.mrb[0].mxu0
        %v1927 = vpop.f32.mrb[0].mxu0
        %v1928 = vadd.f32 0.0, %v1927
        %v1929 = vpop.f32.mrb[0].mxu0
        %1930 = vdwg.mxu0
        %v1931 = vadd.f32 %v1850, %v1901
        %v1932 = vadd.f32 %v1851, %v1904
        %v1933 = vadd.f32 %v1852, %v1909
        %v1934 = vadd.f32 %v1853, %v1912
        %v1935 = vadd.f32 %v1854, %v1917
        %v1936 = vadd.f32 %v1855, %v1920
        %v1937 = vadd.f32 %v1856, %v1925
        %v1938 = vadd.f32 %v1857, %v1928
        %s1939 = scalar_lea.vmem [#allocation17], 32
        %v1940 = vld [vmem:[%s1939] sm:$0xf]
        %v1942 = vsel %vm1255, %v1251, 0
        %v1945 = vsel %vm1268, %v1940, 0
        %1947 = vmatprep.subr.bf16.mxu0 0
        %1948 = vmatpush1.bf16.msra.mxu0 %v1945
        %1949 = vmatprep.subr.bf16.mxu0 0
        %1950 = vmatpush1.bf16.msra.mxu0 0
        %1951 = vmatprep.subr.bf16.mxu0 0
        %1952 = vmatpush1.bf16.msra.mxu0 0
        %1953 = vmatprep.subr.bf16.mxu0 0
        %1954 = vmatpush1.bf16.msra.mxu0 0
        %1955 = vmatprep.subr.bf16.mxu0 0
        %1956 = vmatpush1.bf16.msra.mxu0 0
        %1957 = vmatprep.subr.bf16.mxu0 0
        %1958 = vmatpush1.bf16.msra.mxu0 0
        %1959 = vmatprep.subr.bf16.mxu0 0
        %1960 = vmatpush1.bf16.msra.mxu0 0
        %1961 = vmatprep.subr.bf16.mxu0 0
        %1962 = vmatpush1.bf16.msra.mxu0 0
        %1963 = vmatprep.subr.bf16.mxu0 0
        %1964 = vmatpush1.bf16.msra.mxu0 0
        %1965 = vmatprep.subr.bf16.mxu0 0
        %1966 = vmatpush1.bf16.msra.mxu0 0
        %1967 = vmatprep.subr.bf16.mxu0 0
        %1968 = vmatpush1.bf16.msra.mxu0 0
        %1969 = vmatprep.subr.bf16.mxu0 0
        %1970 = vmatpush1.bf16.msra.mxu0 0
        %1971 = vmatprep.subr.bf16.mxu0 0
        %1972 = vmatpush1.bf16.msra.mxu0 0
        %1973 = vmatprep.subr.bf16.mxu0 0
        %1974 = vmatpush1.bf16.msra.mxu0 0
        %1975 = vmatprep.subr.bf16.mxu0 0
        %1976 = vmatpush1.bf16.msra.mxu0 0
        %1977 = vmatprep.subr.bf16.mxu0 0
        %1978 = vmatpush1.bf16.msra.mxu0 0
        %1979 = vmatprep.mubr.bf16.mxu0 0
        %1980 = vmatmul.mubr.bf16.gmra.mrb[0].mxu0 %v1423
        %v1981 = vpop.f32.mrb[0].mxu0
        %v1982 = vadd.f32 0.0, %v1981
        %v1983 = vpop.f32.mrb[0].mxu0
        %v1984 = vpop.f32.mrb[0].mxu0
        %v1985 = vadd.f32 0.0, %v1984
        %v1986 = vpop.f32.mrb[0].mxu0
        %1987 = vmatprep.mubr.bf16.mxu0 0
        %1988 = vmatmul.mubr.bf16.gmra.mrb[0].mxu0 %v1426
        %v1989 = vpop.f32.mrb[0].mxu0
        %v1990 = vadd.f32 0.0, %v1989
        %v1991 = vpop.f32.mrb[0].mxu0
        %v1992 = vpop.f32.mrb[0].mxu0
        %v1993 = vadd.f32 0.0, %v1992
        %v1994 = vpop.f32.mrb[0].mxu0
        %1995 = vmatprep.mubr.bf16.mxu0 0
        %1996 = vmatmul.mubr.bf16.gmra.mrb[0].mxu0 %v1429
        %v1997 = vpop.f32.mrb[0].mxu0
        %v1998 = vadd.f32 0.0, %v1997
        %v1999 = vpop.f32.mrb[0].mxu0
        %v2000 = vpop.f32.mrb[0].mxu0
        %v2001 = vadd.f32 0.0, %v2000
        %v2002 = vpop.f32.mrb[0].mxu0
        %2003 = vmatprep.mubr.bf16.mxu0 0
        %2004 = vmatmul.mubr.bf16.gmra.mrb[0].mxu0 %v1942
        %v2005 = vpop.f32.mrb[0].mxu0
        %v2006 = vadd.f32 0.0, %v2005
        %v2007 = vpop.f32.mrb[0].mxu0
        %v2008 = vpop.f32.mrb[0].mxu0
        %v2009 = vadd.f32 0.0, %v2008
        %v2010 = vpop.f32.mrb[0].mxu0
        %2011 = vdwg.mxu0
        %v2012 = vadd.f32 %v1931, %v1982
        %v2013 = vadd.f32 %v1932, %v1985
        %v2014 = vadd.f32 %v1933, %v1990
        %v2015 = vadd.f32 %v1934, %v1993
        %v2016 = vadd.f32 %v1935, %v1998
        %v2017 = vadd.f32 %v1936, %v2001
        %v2018 = vadd.f32 %v1937, %v2006
        %v2019 = vadd.f32 %v1938, %v2009
        %v2020 = vld [vmem:[#allocation18] sm:$0x1]
        %v2022 = vlaneseq
        %v2023 = vshrl.u32 %v2022, 7
        %v2024 = vsub.s32 0, %v2023
        %v2025 = vrot.slane %v2020, %v2024
        %v2027 = vmul.f32 %v2012, %v2025
        %v2028 = vmul.f32 %v2013, %v2025
        %v2029 = vmul.f32 %v2014, %v2025
        %v2030 = vmul.f32 %v2015, %v2025
        %v2031 = vmul.f32 %v2016, %v2025
        %v2032 = vmul.f32 %v2017, %v2025
        %v2033 = vmul.f32 %v2018, %v2025
        %v2034 = vmul.f32 %v2019, %v2025
        %v2035 = vld [vmem:[#allocation20] sm:$0x1]
        %v2037 = vlaneseq
        %v2038 = vshrl.u32 %v2037, 7
        %v2039 = vsub.s32 0, %v2038
        %v2040 = vrot.slane %v2035, %v2039
        %v2042 = vadd.f32 %v2027, %v2040
        %v2043 = vadd.f32 %v2028, %v2040
        %v2044 = vadd.f32 %v2029, %v2040
        %v2045 = vadd.f32 %v2030, %v2040
        %v2046 = vadd.f32 %v2031, %v2040
        %v2047 = vadd.f32 %v2032, %v2040
        %v2048 = vadd.f32 %v2033, %v2040
        %v2049 = vadd.f32 %v2034, %v2040
        %v2050 = vmax.f32 %v2042, 0.0
        %v2051 = vmax.f32 %v2043, 0.0
        %v2052 = vmax.f32 %v2044, 0.0
        %v2053 = vmax.f32 %v2045, 0.0
        %v2054 = vmax.f32 %v2046, 0.0
        %v2055 = vmax.f32 %v2047, 0.0
        %v2056 = vmax.f32 %v2048, 0.0
        %v2057 = vmax.f32 %v2049, 0.0
        %2058 = vst.msk [vmem:[#allocation4] sm:$0xff] %vm1255, %v2050
        %2059 = vst.msk [vmem:[#allocation4 + $0x8] sm:$0xff] %vm1255, %v2051
        %2060 = vst.msk [vmem:[#allocation4 + $0x10] sm:$0xff] %vm1255, %v2052
        %2061 = vst.msk [vmem:[#allocation4 + $0x18] sm:$0xff] %vm1255, %v2053
        %2062 = vst.msk [vmem:[#allocation4 + $0x20] sm:$0xff] %vm1255, %v2054
        %2063 = vst.msk [vmem:[#allocation4 + $0x28] sm:$0xff] %vm1255, %v2055
        %2064 = vst.msk [vmem:[#allocation4 + $0x30] sm:$0xff] %vm1255, %v2056
        %2065 = vst.msk [vmem:[#allocation4 + $0x38] sm:$0xff] %vm1255, %v2057
        %v2066 = vld [vmem:[#allocation4] ss:$2 sm:$0xff]
        %s2067 = scalar_lea.vmem [#allocation4], 16
        %v2068 = vld [vmem:[%s2067] ss:$2 sm:$0xff]
        %s2069 = scalar_lea.vmem [#allocation4], 32
        %v2070 = vld [vmem:[%s2069] ss:$2 sm:$0xff]
        %s2071 = scalar_lea.vmem [#allocation4], 48
        %v2072 = vld [vmem:[%s2071] ss:$2 sm:$0xff]
        %v2073 = vpack.c.bf16 %v2068, %v2066
        %v2074 = vpack.c.bf16 %v2072, %v2070
        %v2075 = vld [vmem:[#allocation21] sm:$0xf]
        %v2076 = vld [vmem:[#allocation23] sm:$0x1]
        %v2078 = vlaneseq
        %v2079 = vshrl.u32 %v2078, 7
        %v2080 = vsub.s32 0, %v2079
        %v2081 = vrot.slane %v2076, %v2080
        %v2083 = vmul.f32 %v694, %v2081
        %v2084 = vmul.f32 %v695, %v2081
        %v2085 = vmul.f32 %v698, %v2081
        %v2086 = vmul.f32 %v699, %v2081
        %v2087 = vmul.f32 %v702, %v2081
        %v2088 = vmul.f32 %v703, %v2081
        %v2089 = vmul.f32 %v706, %v2081
        %v2090 = vmul.f32 %v707, %v2081
        %v2091 = vld [vmem:[#allocation24] sm:$0x1]
        %v2093 = vlaneseq
        %v2094 = vshrl.u32 %v2093, 7
        %v2095 = vsub.s32 0, %v2094
        %v2096 = vrot.slane %v2091, %v2095
        %v2098 = vadd.f32 %v2083, %v2096
        %v2099 = vadd.f32 %v2084, %v2096
        %v2100 = vadd.f32 %v2085, %v2096
        %v2101 = vadd.f32 %v2086, %v2096
        %v2102 = vadd.f32 %v2087, %v2096
        %v2103 = vadd.f32 %v2088, %v2096
        %v2104 = vadd.f32 %v2089, %v2096
        %v2105 = vadd.f32 %v2090, %v2096
        %v2106 = vmax.f32 %v2098, 0.0
        %v2107 = vmax.f32 %v2099, 0.0
        %v2108 = vmax.f32 %v2100, 0.0
        %v2109 = vmax.f32 %v2101, 0.0
        %v2110 = vmax.f32 %v2102, 0.0
        %v2111 = vmax.f32 %v2103, 0.0
        %v2112 = vmax.f32 %v2104, 0.0
        %v2113 = vmax.f32 %v2105, 0.0
        %2114 = vst.msk [vmem:[#allocation5] sm:$0xff] %vm788, %v2106
        %2115 = vst.msk [vmem:[#allocation5 + $0x8] sm:$0xff] %vm788, %v2107
        %2116 = vst.msk [vmem:[#allocation5 + $0x10] sm:$0xff] %vm788, %v2108
        %2117 = vst.msk [vmem:[#allocation5 + $0x18] sm:$0xff] %vm788, %v2109
        %2118 = vst.msk [vmem:[#allocation5 + $0x20] sm:$0xff] %vm788, %v2110
        %2119 = vst.msk [vmem:[#allocation5 + $0x28] sm:$0xff] %vm788, %v2111
        %2120 = vst.msk [vmem:[#allocation5 + $0x30] sm:$0xff] %vm788, %v2112
        %2121 = vst.msk [vmem:[#allocation5 + $0x38] sm:$0xff] %vm788, %v2113
        %v2122 = vld [vmem:[#allocation5] ss:$2 sm:$0xff]
        %s2123 = scalar_lea.vmem [#allocation5], 16
        %v2124 = vld [vmem:[%s2123] ss:$2 sm:$0xff]
        %s2125 = scalar_lea.vmem [#allocation5], 32
        %v2126 = vld [vmem:[%s2125] ss:$2 sm:$0xff]
        %s2127 = scalar_lea.vmem [#allocation5], 48
        %v2128 = vld [vmem:[%s2127] ss:$2 sm:$0xff]
        %v2129 = vpack.c.bf16 %v2124, %v2122
        %v2130 = vpack.c.bf16 %v2128, %v2126
        %v2131 = vld [vmem:[#allocation26] sm:$0xf]
        %v2132 = vld [vmem:[#allocation26 + $0x4] sm:$0xf]
        %v2135 = vunpack.c.l.b16 %v2131
        %v2136 = vunpack.c.l.b16 %v2132
        %v2137 = vpack.c.b16 %v2136, %v2135
        %v2140 = vsel %vm788, %v2129, 0
        %v2143 = vsel %vm788, %v2130, 0
        %2145 = vmatprep.subr.bf16.mxu0 0
        %2146 = vmatpush1.bf16.msra.mxu0 %v2137
        %2147 = vmatprep.subr.bf16.mxu0 0
        %2148 = vmatpush1.bf16.msra.mxu0 0
        %2149 = vmatprep.subr.bf16.mxu0 0
        %2150 = vmatpush1.bf16.msra.mxu0 0
        %2151 = vmatprep.subr.bf16.mxu0 0
        %2152 = vmatpush1.bf16.msra.mxu0 0
        %2153 = vmatprep.subr.bf16.mxu0 0
        %2154 = vmatpush1.bf16.msra.mxu0 0
        %2155 = vmatprep.subr.bf16.mxu0 0
        %2156 = vmatpush1.bf16.msra.mxu0 0
        %2157 = vmatprep.subr.bf16.mxu0 0
        %2158 = vmatpush1.bf16.msra.mxu0 0
        %2159 = vmatprep.subr.bf16.mxu0 0
        %2160 = vmatpush1.bf16.msra.mxu0 0
        %2161 = vmatprep.subr.bf16.mxu0 0
        %2162 = vmatpush1.bf16.msra.mxu0 0
        %2163 = vmatprep.subr.bf16.mxu0 0
        %2164 = vmatpush1.bf16.msra.mxu0 0
        %2165 = vmatprep.subr.bf16.mxu0 0
        %2166 = vmatpush1.bf16.msra.mxu0 0
        %2167 = vmatprep.subr.bf16.mxu0 0
        %2168 = vmatpush1.bf16.msra.mxu0 0
        %2169 = vmatprep.subr.bf16.mxu0 0
        %2170 = vmatpush1.bf16.msra.mxu0 0
        %2171 = vmatprep.subr.bf16.mxu0 0
        %2172 = vmatpush1.bf16.msra.mxu0 0
        %2173 = vmatprep.subr.bf16.mxu0 0
        %2174 = vmatpush1.bf16.msra.mxu0 0
        %2175 = vmatprep.subr.bf16.mxu0 0
        %2176 = vmatpush1.bf16.msra.mxu0 0
        %2177 = vmatprep.mubr.bf16.mxu0 0
        %2178 = vmatmul.mubr.bf16.gmra.mrb[0].mxu0 %v2140
        %v2179 = vpop.f32.mrb[0].mxu0
        %v2180 = vadd.f32 0.0, %v2179
        %v2181 = vpop.f32.mrb[0].mxu0
        %v2182 = vpop.f32.mrb[0].mxu0
        %v2183 = vadd.f32 0.0, %v2182
        %v2184 = vpop.f32.mrb[0].mxu0
        %2185 = vmatprep.mubr.bf16.mxu0 0
        %2186 = vmatmul.mubr.bf16.gmra.mrb[0].mxu0 %v2143
        %v2187 = vpop.f32.mrb[0].mxu0
        %v2188 = vadd.f32 0.0, %v2187
        %v2189 = vpop.f32.mrb[0].mxu0
        %v2190 = vpop.f32.mrb[0].mxu0
        %v2191 = vadd.f32 0.0, %v2190
        %v2192 = vpop.f32.mrb[0].mxu0
        %2193 = vdwg.mxu0
        %v2195 = vsel %vm1255, %v2073, 0
        %v2198 = vsel %vm1255, %v2074, 0
        %v2201 = vsel %vm1268, %v2075, 0
        %2203 = vmatprep.subr.bf16.mxu0 0
        %2204 = vmatpush1.bf16.msra.mxu0 %v2201
        %2205 = vmatprep.subr.bf16.mxu0 0
        %2206 = vmatpush1.bf16.msra.mxu0 0
        %2207 = vmatprep.subr.bf16.mxu0 0
        %2208 = vmatpush1.bf16.msra.mxu0 0
        %2209 = vmatprep.subr.bf16.mxu0 0
        %2210 = vmatpush1.bf16.msra.mxu0 0
        %2211 = vmatprep.subr.bf16.mxu0 0
        %2212 = vmatpush1.bf16.msra.mxu0 0
        %2213 = vmatprep.subr.bf16.mxu0 0
        %2214 = vmatpush1.bf16.msra.mxu0 0
        %2215 = vmatprep.subr.bf16.mxu0 0
        %2216 = vmatpush1.bf16.msra.mxu0 0
        %2217 = vmatprep.subr.bf16.mxu0 0
        %2218 = vmatpush1.bf16.msra.mxu0 0
        %2219 = vmatprep.subr.bf16.mxu0 0
        %2220 = vmatpush1.bf16.msra.mxu0 0
        %2221 = vmatprep.subr.bf16.mxu0 0
        %2222 = vmatpush1.bf16.msra.mxu0 0
        %2223 = vmatprep.subr.bf16.mxu0 0
        %2224 = vmatpush1.bf16.msra.mxu0 0
        %2225 = vmatprep.subr.bf16.mxu0 0
        %2226 = vmatpush1.bf16.msra.mxu0 0
        %2227 = vmatprep.subr.bf16.mxu0 0
        %2228 = vmatpush1.bf16.msra.mxu0 0
        %2229 = vmatprep.subr.bf16.mxu0 0
        %2230 = vmatpush1.bf16.msra.mxu0 0
        %2231 = vmatprep.subr.bf16.mxu0 0
        %2232 = vmatpush1.bf16.msra.mxu0 0
        %2233 = vmatprep.subr.bf16.mxu0 0
        %2234 = vmatpush1.bf16.msra.mxu0 0
        %2235 = vmatprep.mubr.bf16.mxu0 0
        %2236 = vmatmul.mubr.bf16.gmra.mrb[0].mxu0 %v2195
        %v2237 = vpop.f32.mrb[0].mxu0
        %v2238 = vadd.f32 %v2180, %v2237
        %v2239 = vpop.f32.mrb[0].mxu0
        %v2240 = vpop.f32.mrb[0].mxu0
        %v2241 = vadd.f32 %v2183, %v2240
        %v2242 = vpop.f32.mrb[0].mxu0
        %2243 = vmatprep.mubr.bf16.mxu0 0
        %2244 = vmatmul.mubr.bf16.gmra.mrb[0].mxu0 %v2198
        %v2245 = vpop.f32.mrb[0].mxu0
        %v2246 = vadd.f32 %v2188, %v2245
        %v2247 = vpop.f32.mrb[0].mxu0
        %v2248 = vpop.f32.mrb[0].mxu0
        %v2249 = vadd.f32 %v2191, %v2248
        %v2250 = vpop.f32.mrb[0].mxu0
        %2251 = vdwg.mxu0
        %v2252 = vpack.c.bf16 %v2238, %v2238
        %v2253 = vpack.c.bf16 %v2241, %v2241
        %v2254 = vpack.c.bf16 %v2246, %v2246
        %v2255 = vpack.c.bf16 %v2249, %v2249
        %vm2256 = vcmask 257024
        %2257 = vst.msk [vmem:[%s634] sm:$0xf] %vm2256, %v2252
        %2258 = vst.msk [vmem:[%s634 + $0x4] sm:$0xf] %vm2256, %v2253
        %2259 = vst.msk [vmem:[%s634 + $0x8] sm:$0xf] %vm2256, %v2254
        %2260 = vst.msk [vmem:[%s634 + $0xc] sm:$0xf] %vm2256, %v2255
        %s2261 = sand.u32 %s339, 1
        %s2262 = scalar_lea.sflag [#allocation8], %s2261
        %s2263 = sand.u32 %s339, 1
        %s2264 = smul.addr %s2263, 16
        %s2265 = scalar_lea.vmem [#allocation27], %s2264
        // Predicated region
        $region133: #{tpu_custom_call.1} parent=71 // pred_check
          %p2266 = pneg %p349
        $region134: #{tpu_custom_call.1} parent=71 // pred_check_branch
          %2268 = sbr.rel (%p2266) target = $region136
        $region135: #{tpu_custom_call.1} parent=71 // pred_region
          %s2269 = smul.u32 4, %s42
          %s2271 = ssub.s32 256, 256
          %2272 = vsyncadd %s2262, %s2271
          %s2273 = smul.addr %s41, 8
          %s2274 = sadd.s32 %s2269, %s2273
          %s2275 = smul.addr %s2274, 64
          %s2276 = scalar_lea.hbm %s14, %s2275
          %s2277 = sshll.u32 %s2265, 4
          %s2278 = int_to_ptr.vmem [resolvable:$true] %s2277
          %2283 = dma.vmem_to_hbm [thread:$0]  %s2278, 256, %s2276, %s2262, 64, 64, 4
        $region136: #{tpu_custom_call.1} parent=71 // pred_fallthru
          _
      $region72: #{tpu_custom_call.1} parent=5 // pred_fallthru
        _
      %p2284 = scmp.le.s32.totalorder 2, %s32
      // Predicated region
      $region137: #{tpu_custom_call.1} parent=5 // pred_check
        %p2285 = pneg %p2284
      $region138: #{tpu_custom_call.1} parent=5 // pred_check_branch
        %2287 = sbr.rel (%p2285) target = $region140
      $region139: #{tpu_custom_call.1} parent=5 // pred_region
        %s2288 = ssub.s32 %s32, 2
        // Predicated region
        $region141: #{tpu_custom_call.1} parent=139 // pred_check
          %p2289 = pneg %p355
        $region142: #{tpu_custom_call.1} parent=139 // pred_check_branch
          %2291 = sbr.rel (%p2289) target = $region144
        $region143: #{tpu_custom_call.1} parent=139 // pred_region
          %s2292 = sand.u32 %s340, 1
          %s2293 = scalar_lea.sflag [#allocation8], %s2292
          %s2294 = sand.u32 %s340, 1
          %s2295 = smul.addr %s2294, 16
          %s2296 = scalar_lea.vmem [#allocation27], %s2295
          %2297 = dma.done %s2293, 256
        $region144: #{tpu_custom_call.1} parent=139 // pred_fallthru
          _
      $region140: #{tpu_custom_call.1} parent=5 // pred_fallthru
        _
    $region6: #{tpu_custom_call.1} parent=1 // loop_footer
      %s36 = sadd.s32 1, %s32
    $region7: #{tpu_custom_call.1} parent=1 // loop_footer_branch
      %31 = sbr.rel target = $region3
    $region8: #{tpu_custom_call.1} parent=1 // loop_exit
      _
    %2298 = vsyncpa [#allocation7], 1
    %s2299 = scalar_lea.sflag [#allocation7], 1
    %2300 = vsyncpa %s2299, 1
    %2301 = vsyncpa [#allocation10], 1
    %2302 = vsyncpa [#allocation13], 1
    %2303 = vsyncpa [#allocation16], 1
    %2304 = vsyncpa [#allocation19], 1
    %2305 = vsyncpa [#allocation22], 1
    %2306 = vsyncpa [#allocation25], 1
    %2307 = vsyncpa [#allocation8], 1
    %s2308 = scalar_lea.sflag [#allocation8], 1
    %2309 = vsyncpa %s2308, 1
  %2310 = vsyncmov [#allocation3]
  %s2311 = vpop.sfrf %2310
  %p2312 = scmp.eq.s32.totalorder %s2311, 0
  %p2313 = pneg %p2312
  %2315 = shalt.err (%p2313)
  %s2316 = scalar_lea.sflag [#allocation3], 1
  %2317 = vsyncmov %s2316
  %s2318 = vpop.sfrf %2317
  %p2319 = scmp.eq.s32.totalorder %s2318, 0
  %p2320 = pneg %p2319
  %2322 = shalt.err (%p2320)

</llo_original>
